<compile_context>
chip_gen: v5e
topology: v5e:2x2
jax: 0.10.0
libtpu: 0.0.40
codegen_flags: <defaults>
</compile_context>

<pallas_src>
import functools

import jax
import jax.numpy as jnp
import numpy as np
from jax.experimental import pallas as pl
from jax.experimental.pallas import tpu as pltpu


def _round_up(x, m):
    return ((x + m - 1) // m) * m


def _stacked_block_kernel(mask_ref, x_ref, *rest, W, K, cout, num_layers,
                          b_tile, xp_len, compute_dtype):
    """One grid step = `b_tile` images; all separable convs + BN + PReLU."""
    w_refs = rest[:num_layers]
    p_ref = rest[num_layers]
    out_ref = rest[num_layers + 1]
    xp_ref = rest[num_layers + 2]

    PW = W + 2                     # padded row width
    BW = b_tile * xp_len           # matmul lane width (all images in the step)
    taps = tuple(kh * PW + kw for kh in range(K) for kw in range(K))

    # Zero the staging slab once per step.  The head [0, PW+1) and the tail
    # slack are never written afterwards, so they provide the top/left zero
    # halo for every layer; every other padding lane is re-zeroed each layer
    # by the masked slab store below.
    xp_ref[...] = jnp.zeros_like(xp_ref)

    # Lane-validity mask: 1.0 on real output pixels, 0.0 on the junk lanes
    # (2 per row + per-image tail) that double as next-layer zero padding.
    valid = mask_ref[...] > 0.5                                  # (1, BW)

    def sep_conv(tap_fn, w_ref):
        # Fused depthwise+pointwise 3x3 conv: 9 tap matmuls accumulated in f32
        # registers.  Each tap is ONE contiguous lane-slice of the padded slab
        # (no im2col staging buffer, no col VMEM round trip).
        acc = jnp.zeros((cout, BW), jnp.float32)
        for t, off in enumerate(taps):
            acc = acc + jnp.dot(
                w_ref[t].astype(compute_dtype),
                tap_fn(off).astype(compute_dtype),
                preferred_element_type=jnp.float32)
        return acc

    # Layer 0 reads its taps straight from the pre-padded input block.
    act = sep_conv(lambda off: x_ref[0, :, off:off + BW], w_refs[0])

    for l in range(1, num_layers):
        # ONE masked, lane-dense slab store: junk lanes -> 0 become exactly the
        # horizontal padding / inter-image halo of the next layer's input, so
        # no per-row scatter is needed.
        xp_ref[:, PW + 1:PW + 1 + BW] = (
            jnp.where(valid, act, 0.0).astype(compute_dtype))
        act = sep_conv(lambda off: xp_ref[:, off:off + BW], w_refs[l])

    # Folded inference BatchNorm + per-channel PReLU (f32), then one lane-dense
    # store of the padded slab; the wrapper slices away the junk lanes.
    # TODO(synk): training-mode BatchNorm (batch statistics + running-stat
    # update) is a training-time behavior and is not computed in this kernel.
    scale = p_ref[:, 0:1]
    shift = p_ref[:, 1:2]
    alpha = p_ref[:, 2:3]
    y = act * scale + shift
    y = jnp.where(y >= 0.0, y, alpha * y)
    out_ref[0] = y.astype(out_ref.dtype)


def stacked_conv_block(x_nchw, dw_weights, pw_weights,
                       bn_gamma, bn_beta, bn_mean, bn_var, prelu_alpha,
                       *, eps=1e-5, compute_dtype=jnp.float32,
                       images_per_step=None):
    """StackedConvBlock.forward (use_bn=True -> conv bias=False, act=PReLU).

    x_nchw:      (N, Cin, H, W)
    dw_weights:  list of (Ci, 1, K, K) depthwise weights (Ci = Cin then Cout)
    pw_weights:  list of (Cout, Ci, 1, 1) pointwise weights
    bn_*:        (Cout,) BatchNorm2d inference parameters / running stats
    prelu_alpha: (Cout,) PReLU per-channel slopes
    returns:     (N, Cout, H, W)
    """
    N, Cin, H, W = x_nchw.shape
    num_layers = len(dw_weights)
    K = dw_weights[0].shape[-1]
    Cout = pw_weights[0].shape[0]

    PW = W + 2
    XP_LEN = (H + 3) * PW                 # per-image slab stride (multiple of PW)

    if images_per_step is None:
        # Keep >=2 grid steps when possible (v7x: two TensorCores); for larger
        # batches, lane-stack several images per step (v5e/v6e: amortize the
        # fixed per-step cost, widen the matmul lane dim).
        images_per_step = 1 if N < 4 else min(8, max(1, N // 2))
    b_tile = max(1, min(images_per_step, N))
    num_steps = -(-N // b_tile)
    N_pad = num_steps * b_tile

    BW = b_tile * XP_LEN                          # matmul / output lane width
    LANE_IN = _round_up(BW + 2 * PW + 2, 128)     # input / staging lane extent

    # --- tiny one-time parameter repacking (glue, not the hot path) ---
    # Per-tap fused weights: Wf[t, co, c] = pw[co, c] * dw[c, kh, kw], t=kh*K+kw
    # (exact: the separable conv is linear).
    fused = []
    for dw, pw in zip(dw_weights, pw_weights):
        ci = dw.shape[0]
        dwt = jnp.transpose(dw[:, 0], (1, 2, 0)).reshape(K * K, 1, ci)
        pww = pw[:, :, 0, 0][None, :, :]                     # (1, Cout, ci)
        fused.append((pww * dwt).astype(compute_dtype))      # (K*K, Cout, ci)

    # Inference BatchNorm folded to scale/shift, packed with the PReLU slope.
    scale = bn_gamma / jnp.sqrt(bn_var + eps)
    shift = bn_beta - bn_mean * scale
    params = jnp.stack([scale, shift, prelu_alpha], axis=1).astype(jnp.float32)

    # Pre-padded, lane-stacked input: image n = step*b_tile + b has padded
    # pixel (ph, pw) at lane b*XP_LEN + ph*PW + pw of step `step`; all halo and
    # slack lanes are zero.  (Tiny wrapper-side pad/transpose, endorsed by the
    # review so layer 0 needs no in-kernel scatter.)
    xpad = jnp.pad(x_nchw, ((0, N_pad - N), (0, 0), (1, 1), (1, 1)))
    xpad = xpad.reshape(N_pad, Cin, (H + 2) * PW)
    xpad = jnp.pad(xpad, ((0, 0), (0, 0), (0, XP_LEN - (H + 2) * PW)))
    xpad = xpad.reshape(num_steps, b_tile, Cin, XP_LEN)
    xpad = jnp.transpose(xpad, (0, 2, 1, 3)).reshape(num_steps, Cin, BW)
    xpad = jnp.pad(xpad, ((0, 0), (0, 0), (0, LANE_IN - BW)))
    xpad = xpad.astype(compute_dtype)

    # Host-precomputed lane-validity mask: lane j is a real output pixel iff
    # (j % XP_LEN) < H*PW and (j % PW) < W.
    lane = np.arange(BW)
    mask_np = (((lane % XP_LEN) < H * PW) & ((lane % PW) < W))
    mask = jnp.asarray(mask_np.astype(np.float32)).reshape(1, BW)

    kernel = functools.partial(
        _stacked_block_kernel, W=W, K=K, cout=Cout, num_layers=num_layers,
        b_tile=b_tile, xp_len=XP_LEN, compute_dtype=compute_dtype)

    in_specs = [pl.BlockSpec((1, BW), lambda n: (0, 0)),
                pl.BlockSpec((1, Cin, LANE_IN), lambda n: (n, 0, 0))]
    for wf in fused:
        in_specs.append(pl.BlockSpec(wf.shape, lambda n: (0, 0, 0)))
    in_specs.append(pl.BlockSpec((Cout, 3), lambda n: (0, 0)))

    out = pl.pallas_call(
        kernel,
        out_shape=jax.ShapeDtypeStruct((num_steps, Cout, BW), x_nchw.dtype),
        grid_spec=pltpu.PrefetchScalarGridSpec(
            num_scalar_prefetch=0,
            grid=(num_steps,),
            in_specs=in_specs,
            out_specs=pl.BlockSpec((1, Cout, BW), lambda n: (n, 0, 0)),
            scratch_shapes=[
                # Zero-padded activation staging slab (bf16-capable).  For
                # large images tile H into row strips (1-row halo) and set
                # vmem_limit_bytes explicitly -- v7x has only 64 MiB VMEM.
                pltpu.VMEM((Cout, LANE_IN), compute_dtype),
            ],
        ),
        # "parallel" lets v7x shard the batch-of-steps across its two
        # TensorCores; harmless no-op on single-core v5e/v6e.
        compiler_params=pltpu.CompilerParams(dimension_semantics=("parallel",)),
    )(mask, xpad, *fused, params)

    # Drop the junk lanes and un-stack images (tiny wrapper-side slice).
    out = out.reshape(num_steps, Cout, b_tile, H + 3, PW)[:, :, :, :H, :W]
    out = jnp.transpose(out, (0, 2, 1, 3, 4)).reshape(N_pad, Cout, H, W)
    return out[:N]


def _reference(x, dw_weights, pw_weights, gamma, beta, mean, var, alpha, eps=1e-5):
    """Pure-JAX reference: 5x (grouped conv + 1x1 conv) -> BN (eval) -> PReLU."""
    y = x
    for dw, pw in zip(dw_weights, pw_weights):
        ci = dw.shape[0]
        y = jax.lax.conv_general_dilated(
            y, dw, window_strides=(1, 1), padding=[(1, 1), (1, 1)],
            dimension_numbers=("NCHW", "OIHW", "NCHW"),
            feature_group_count=ci, precision=jax.lax.Precision.HIGHEST)
        y = jax.lax.conv_general_dilated(
            y, pw, window_strides=(1, 1), padding=[(0, 0), (0, 0)],
            dimension_numbers=("NCHW", "OIHW", "NCHW"),
            precision=jax.lax.Precision.HIGHEST)
    y = (y - mean[None, :, None, None]) * (
        gamma[None, :, None, None] / jnp.sqrt(var[None, :, None, None] + eps))
    y = y + beta[None, :, None, None]
    return jnp.where(y >= 0.0, y, alpha[None, :, None, None] * y)


if __name__ == "__main__":
    # Small shapes consistent with the module: batch=2, in_ch=4, out_ch=8, 16x16.
    N, Cin, H, W = 2, 4, 16, 16
    Cout, K, num_layers = 8, 3, 5

    key = jax.random.PRNGKey(0)
    keys = jax.random.split(key, 1 + 2 * num_layers + 5)

    x = jax.random.normal(keys[0], (N, Cin, H, W), jnp.float32)

    dw_weights, pw_weights = [], []
    for i in range(num_layers):
        ci = Cin if i == 0 else Cout
        dw_weights.append(
            jax.random.normal(keys[1 + 2 * i], (ci, 1, K, K), jnp.float32)
            / float(K * K) ** 0.5)
        pw_weights.append(
            jax.random.normal(keys[2 + 2 * i], (Cout, ci, 1, 1), jnp.float32)
            / float(ci) ** 0.5)

    kg, kb, km, kv, ka = keys[-5:]
    bn_gamma = 1.0 + 0.1 * jax.random.normal(kg, (Cout,), jnp.float32)
    bn_beta = 0.1 * jax.random.normal(kb, (Cout,), jnp.float32)
    bn_mean = 0.1 * jax.random.normal(km, (Cout,), jnp.float32)
    bn_var = jax.random.uniform(kv, (Cout,), jnp.float32, minval=0.5, maxval=1.5)
    prelu_alpha = jax.random.uniform(ka, (Cout,), jnp.float32,
                                     minval=0.1, maxval=0.3)

    ref = np.asarray(jax.block_until_ready(
        _reference(x, dw_weights, pw_weights, bn_gamma, bn_beta, bn_mean,
                   bn_var, prelu_alpha)))

    # f32 path, one image per grid step (>= 2 grid steps keeps both v7x
    # TensorCores busy).
    out1 = jax.block_until_ready(stacked_conv_block(
        x, dw_weights, pw_weights, bn_gamma, bn_beta, bn_mean, bn_var,
        prelu_alpha, images_per_step=1))
    np.testing.assert_allclose(np.asarray(out1), ref, rtol=1e-3, atol=1e-3)

    # f32 path, both images lane-stacked into a single grid step (amortizes
    # per-step overhead / widens the matmul lanes -- v5e/v6e preference).
    out2 = jax.block_until_ready(stacked_conv_block(
        x, dw_weights, pw_weights, bn_gamma, bn_beta, bn_mean, bn_var,
        prelu_alpha, images_per_step=2))
    np.testing.assert_allclose(np.asarray(out2), ref, rtol=1e-3, atol=1e-3)

    # bf16 staging buffers / MXU operands (recommended on v6e/v7x): halves the
    # copy/load/store volume; accumulation, BN and PReLU stay f32.  Rounds
    # differently from the f32 HIGHEST-precision reference, so only a loose
    # sanity bound here.
    out3 = jax.block_until_ready(stacked_conv_block(
        x, dw_weights, pw_weights, bn_gamma, bn_beta, bn_mean, bn_var,
        prelu_alpha, images_per_step=2, compute_dtype=jnp.bfloat16))
    max_err = float(np.max(np.abs(np.asarray(out3) - ref)))
    assert np.isfinite(max_err) and max_err < 0.5, f"bf16 max err {max_err}"

    print("KERNEL_OK")
</pallas_src>

<mosaic_0001>
module attributes {stable_mosaic.version = 11 : i64} {
  func.func @_stacked_block_kernel(%arg0: i32, %arg1: memref<1x342xf32, #tpu.memory_space<vmem>>, %arg2: memref<1x4x384xf32, #tpu.memory_space<vmem>>, %arg3: memref<9x8x4xf32, #tpu.memory_space<vmem>>, %arg4: memref<9x8x8xf32, #tpu.memory_space<vmem>>, %arg5: memref<9x8x8xf32, #tpu.memory_space<vmem>>, %arg6: memref<9x8x8xf32, #tpu.memory_space<vmem>>, %arg7: memref<9x8x8xf32, #tpu.memory_space<vmem>>, %arg8: memref<8x3xf32, #tpu.memory_space<vmem>>, %arg9: memref<1x8x342xf32, #tpu.memory_space<vmem>>, %arg10: memref<8x384xf32, #tpu.memory_space<vmem>>) attributes {dimension_semantics = [#tpu.dimension_semantics<parallel>], iteration_bounds = array<i64: 2>, scalar_prefetch = 0 : i64, scratch_operands = 1 : i64, tpu.core_type = #tpu.core_type<tc>, window_params = [{pipeline_mode = #tpu.pipeline_mode<synchronous>, transform_indices = @transform_0, window_bounds = array<i64: 1, 342>}, {transform_indices = @transform_1, window_bounds = array<i64: 1, 4, 384>}, {pipeline_mode = #tpu.pipeline_mode<synchronous>, transform_indices = @transform_2, window_bounds = array<i64: 9, 8, 4>}, {pipeline_mode = #tpu.pipeline_mode<synchronous>, transform_indices = @transform_3, window_bounds = array<i64: 9, 8, 8>}, {pipeline_mode = #tpu.pipeline_mode<synchronous>, transform_indices = @transform_4, window_bounds = array<i64: 9, 8, 8>}, {pipeline_mode = #tpu.pipeline_mode<synchronous>, transform_indices = @transform_5, window_bounds = array<i64: 9, 8, 8>}, {pipeline_mode = #tpu.pipeline_mode<synchronous>, transform_indices = @transform_6, window_bounds = array<i64: 9, 8, 8>}, {pipeline_mode = #tpu.pipeline_mode<synchronous>, transform_indices = @transform_7, window_bounds = array<i64: 8, 3>}, {transform_indices = @transform_8, window_bounds = array<i64: 1, 8, 342>}]} {
    %cst = arith.constant 0.000000e+00 : f32
    %0 = vector.broadcast %cst : f32 to vector<8x384xf32>
    %c0 = arith.constant 0 : index
    %c0_0 = arith.constant 0 : index
    %1 = vector.load %arg10[%c0, %c0_0] : memref<8x384xf32, #tpu.memory_space<vmem>>, vector<8x384xf32>
    tpu.vector_store %arg10[%c0, %c0_0], %0 {strides = array<i32>} : memref<8x384xf32, #tpu.memory_space<vmem>>, vector<8x384xf32>,
    %c0_1 = arith.constant 0 : index
    %c0_2 = arith.constant 0 : index
    %2 = vector.load %arg1[%c0_1, %c0_2] : memref<1x342xf32, #tpu.memory_space<vmem>>, vector<1x342xf32>
    %cst_3 = arith.constant 5.000000e-01 : f32
    %3 = vector.broadcast %cst_3 : f32 to vector<1x342xf32>
    %4 = arith.cmpf ogt, %2, %3 : vector<1x342xf32>
    %cst_4 = arith.constant 0.000000e+00 : f32
    %5 = vector.broadcast %cst_4 : f32 to vector<8x342xf32>
    %c0_5 = arith.constant 0 : index
    %c0_6 = arith.constant 0 : index
    %c0_7 = arith.constant 0 : index
    %6 = vector.load %arg3[%c0_5, %c0_6, %c0_7] : memref<9x8x4xf32, #tpu.memory_space<vmem>>, vector<1x8x4xf32>
    %7 = vector.shape_cast %6 : vector<1x8x4xf32> to vector<8x4xf32>
    %c0_8 = arith.constant 0 : index
    %c0_9 = arith.constant 0 : index
    %c0_10 = arith.constant 0 : index
    %8 = vector.load %arg2[%c0_8, %c0_9, %c0_10] : memref<1x4x384xf32, #tpu.memory_space<vmem>>, vector<1x4x342xf32>
    %9 = vector.shape_cast %8 : vector<1x4x342xf32> to vector<4x342xf32>
    %cst_11 = arith.constant dense<0.000000e+00> : vector<8x342xf32>
    %10 = tpu.matmul %7, %9, %cst_11 {dimension_numbers = #tpu.dot_dimension_numbers<[1], [0], [0], [1], [0, 0, 1, 1], [], []>} : vector<8x4xf32>, vector<4x342xf32>, vector<8x342xf32> -> vector<8x342xf32>
    %11 = arith.addf %5, %10 : vector<8x342xf32>
    %c1 = arith.constant 1 : index
    %c0_12 = arith.constant 0 : index
    %c0_13 = arith.constant 0 : index
    %12 = vector.load %arg3[%c1, %c0_12, %c0_13] : memref<9x8x4xf32, #tpu.memory_space<vmem>>, vector<1x8x4xf32>
    %13 = vector.shape_cast %12 : vector<1x8x4xf32> to vector<8x4xf32>
    %c0_14 = arith.constant 0 : index
    %c0_15 = arith.constant 0 : index
    %c1_16 = arith.constant 1 : index
    %14 = vector.load %arg2[%c0_14, %c0_15, %c1_16] : memref<1x4x384xf32, #tpu.memory_space<vmem>>, vector<1x4x342xf32>
    %15 = vector.shape_cast %14 : vector<1x4x342xf32> to vector<4x342xf32>
    %cst_17 = arith.constant dense<0.000000e+00> : vector<8x342xf32>
    %16 = tpu.matmul %13, %15, %cst_17 {dimension_numbers = #tpu.dot_dimension_numbers<[1], [0], [0], [1], [0, 0, 1, 1], [], []>} : vector<8x4xf32>, vector<4x342xf32>, vector<8x342xf32> -> vector<8x342xf32>
    %17 = arith.addf %11, %16 : vector<8x342xf32>
    %c2 = arith.constant 2 : index
    %c0_18 = arith.constant 0 : index
    %c0_19 = arith.constant 0 : index
    %18 = vector.load %arg3[%c2, %c0_18, %c0_19] : memref<9x8x4xf32, #tpu.memory_space<vmem>>, vector<1x8x4xf32>
    %19 = vector.shape_cast %18 : vector<1x8x4xf32> to vector<8x4xf32>
    %c0_20 = arith.constant 0 : index
    %c0_21 = arith.constant 0 : index
    %c2_22 = arith.constant 2 : index
    %20 = vector.load %arg2[%c0_20, %c0_21, %c2_22] : memref<1x4x384xf32, #tpu.memory_space<vmem>>, vector<1x4x342xf32>
    %21 = vector.shape_cast %20 : vector<1x4x342xf32> to vector<4x342xf32>
    %cst_23 = arith.constant dense<0.000000e+00> : vector<8x342xf32>
    %22 = tpu.matmul %19, %21, %cst_23 {dimension_numbers = #tpu.dot_dimension_numbers<[1], [0], [0], [1], [0, 0, 1, 1], [], []>} : vector<8x4xf32>, vector<4x342xf32>, vector<8x342xf32> -> vector<8x342xf32>
    %23 = arith.addf %17, %22 : vector<8x342xf32>
    %c3 = arith.constant 3 : index
    %c0_24 = arith.constant 0 : index
    %c0_25 = arith.constant 0 : index
    %24 = vector.load %arg3[%c3, %c0_24, %c0_25] : memref<9x8x4xf32, #tpu.memory_space<vmem>>, vector<1x8x4xf32>
    %25 = vector.shape_cast %24 : vector<1x8x4xf32> to vector<8x4xf32>
    %c0_26 = arith.constant 0 : index
    %c0_27 = arith.constant 0 : index
    %c18 = arith.constant 18 : index
    %26 = vector.load %arg2[%c0_26, %c0_27, %c18] : memref<1x4x384xf32, #tpu.memory_space<vmem>>, vector<1x4x342xf32>
    %27 = vector.shape_cast %26 : vector<1x4x342xf32> to vector<4x342xf32>
    %cst_28 = arith.constant dense<0.000000e+00> : vector<8x342xf32>
    %28 = tpu.matmul %25, %27, %cst_28 {dimension_numbers = #tpu.dot_dimension_numbers<[1], [0], [0], [1], [0, 0, 1, 1], [], []>} : vector<8x4xf32>, vector<4x342xf32>, vector<8x342xf32> -> vector<8x342xf32>
    %29 = arith.addf %23, %28 : vector<8x342xf32>
    %c4 = arith.constant 4 : index
    %c0_29 = arith.constant 0 : index
    %c0_30 = arith.constant 0 : index
    %30 = vector.load %arg3[%c4, %c0_29, %c0_30] : memref<9x8x4xf32, #tpu.memory_space<vmem>>, vector<1x8x4xf32>
    %31 = vector.shape_cast %30 : vector<1x8x4xf32> to vector<8x4xf32>
    %c0_31 = arith.constant 0 : index
    %c0_32 = arith.constant 0 : index
    %c19 = arith.constant 19 : index
    %32 = vector.load %arg2[%c0_31, %c0_32, %c19] : memref<1x4x384xf32, #tpu.memory_space<vmem>>, vector<1x4x342xf32>
    %33 = vector.shape_cast %32 : vector<1x4x342xf32> to vector<4x342xf32>
    %cst_33 = arith.constant dense<0.000000e+00> : vector<8x342xf32>
    %34 = tpu.matmul %31, %33, %cst_33 {dimension_numbers = #tpu.dot_dimension_numbers<[1], [0], [0], [1], [0, 0, 1, 1], [], []>} : vector<8x4xf32>, vector<4x342xf32>, vector<8x342xf32> -> vector<8x342xf32>
    %35 = arith.addf %29, %34 : vector<8x342xf32>
    %c5 = arith.constant 5 : index
    %c0_34 = arith.constant 0 : index
    %c0_35 = arith.constant 0 : index
    %36 = vector.load %arg3[%c5, %c0_34, %c0_35] : memref<9x8x4xf32, #tpu.memory_space<vmem>>, vector<1x8x4xf32>
    %37 = vector.shape_cast %36 : vector<1x8x4xf32> to vector<8x4xf32>
    %c0_36 = arith.constant 0 : index
    %c0_37 = arith.constant 0 : index
    %c20 = arith.constant 20 : index
    %38 = vector.load %arg2[%c0_36, %c0_37, %c20] : memref<1x4x384xf32, #tpu.memory_space<vmem>>, vector<1x4x342xf32>
    %39 = vector.shape_cast %38 : vector<1x4x342xf32> to vector<4x342xf32>
    %cst_38 = arith.constant dense<0.000000e+00> : vector<8x342xf32>
    %40 = tpu.matmul %37, %39, %cst_38 {dimension_numbers = #tpu.dot_dimension_numbers<[1], [0], [0], [1], [0, 0, 1, 1], [], []>} : vector<8x4xf32>, vector<4x342xf32>, vector<8x342xf32> -> vector<8x342xf32>
    %41 = arith.addf %35, %40 : vector<8x342xf32>
    %c6 = arith.constant 6 : index
    %c0_39 = arith.constant 0 : index
    %c0_40 = arith.constant 0 : index
    %42 = vector.load %arg3[%c6, %c0_39, %c0_40] : memref<9x8x4xf32, #tpu.memory_space<vmem>>, vector<1x8x4xf32>
    %43 = vector.shape_cast %42 : vector<1x8x4xf32> to vector<8x4xf32>
    %c0_41 = arith.constant 0 : index
    %c0_42 = arith.constant 0 : index
    %c36 = arith.constant 36 : index
    %44 = vector.load %arg2[%c0_41, %c0_42, %c36] : memref<1x4x384xf32, #tpu.memory_space<vmem>>, vector<1x4x342xf32>
    %45 = vector.shape_cast %44 : vector<1x4x342xf32> to vector<4x342xf32>
    %cst_43 = arith.constant dense<0.000000e+00> : vector<8x342xf32>
    %46 = tpu.matmul %43, %45, %cst_43 {dimension_numbers = #tpu.dot_dimension_numbers<[1], [0], [0], [1], [0, 0, 1, 1], [], []>} : vector<8x4xf32>, vector<4x342xf32>, vector<8x342xf32> -> vector<8x342xf32>
    %47 = arith.addf %41, %46 : vector<8x342xf32>
    %c7 = arith.constant 7 : index
    %c0_44 = arith.constant 0 : index
    %c0_45 = arith.constant 0 : index
    %48 = vector.load %arg3[%c7, %c0_44, %c0_45] : memref<9x8x4xf32, #tpu.memory_space<vmem>>, vector<1x8x4xf32>
    %49 = vector.shape_cast %48 : vector<1x8x4xf32> to vector<8x4xf32>
    %c0_46 = arith.constant 0 : index
    %c0_47 = arith.constant 0 : index
    %c37 = arith.constant 37 : index
    %50 = vector.load %arg2[%c0_46, %c0_47, %c37] : memref<1x4x384xf32, #tpu.memory_space<vmem>>, vector<1x4x342xf32>
    %51 = vector.shape_cast %50 : vector<1x4x342xf32> to vector<4x342xf32>
    %cst_48 = arith.constant dense<0.000000e+00> : vector<8x342xf32>
    %52 = tpu.matmul %49, %51, %cst_48 {dimension_numbers = #tpu.dot_dimension_numbers<[1], [0], [0], [1], [0, 0, 1, 1], [], []>} : vector<8x4xf32>, vector<4x342xf32>, vector<8x342xf32> -> vector<8x342xf32>
    %53 = arith.addf %47, %52 : vector<8x342xf32>
    %c8 = arith.constant 8 : index
    %c0_49 = arith.constant 0 : index
    %c0_50 = arith.constant 0 : index
    %54 = vector.load %arg3[%c8, %c0_49, %c0_50] : memref<9x8x4xf32, #tpu.memory_space<vmem>>, vector<1x8x4xf32>
    %55 = vector.shape_cast %54 : vector<1x8x4xf32> to vector<8x4xf32>
    %c0_51 = arith.constant 0 : index
    %c0_52 = arith.constant 0 : index
    %c38 = arith.constant 38 : index
    %56 = vector.load %arg2[%c0_51, %c0_52, %c38] : memref<1x4x384xf32, #tpu.memory_space<vmem>>, vector<1x4x342xf32>
    %57 = vector.shape_cast %56 : vector<1x4x342xf32> to vector<4x342xf32>
    %cst_53 = arith.constant dense<0.000000e+00> : vector<8x342xf32>
    %58 = tpu.matmul %55, %57, %cst_53 {dimension_numbers = #tpu.dot_dimension_numbers<[1], [0], [0], [1], [0, 0, 1, 1], [], []>} : vector<8x4xf32>, vector<4x342xf32>, vector<8x342xf32> -> vector<8x342xf32>
    %59 = arith.addf %53, %58 : vector<8x342xf32>
    %cst_54 = arith.constant 0.000000e+00 : f32
    %60 = vector.shape_cast %4 : vector<1x342xi1> to vector<1x342xi1>
    %61 = vector.broadcast %60 : vector<1x342xi1> to vector<8x342xi1>
    %62 = vector.broadcast %cst_54 : f32 to vector<8x342xf32>
    %63 = arith.select %61, %59, %62 : vector<8x342xi1>, vector<8x342xf32>
    %c0_55 = arith.constant 0 : index
    %c19_56 = arith.constant 19 : index
    %64 = vector.load %arg10[%c0_55, %c19_56] : memref<8x384xf32, #tpu.memory_space<vmem>>, vector<8x342xf32>
    tpu.vector_store %arg10[%c0_55, %c19_56], %63 {strides = array<i32>} : memref<8x384xf32, #tpu.memory_space<vmem>>, vector<8x342xf32>,
    %cst_57 = arith.constant 0.000000e+00 : f32
    %65 = vector.broadcast %cst_57 : f32 to vector<8x342xf32>
    %c0_58 = arith.constant 0 : index
    %c0_59 = arith.constant 0 : index
    %c0_60 = arith.constant 0 : index
    %66 = vector.load %arg4[%c0_58, %c0_59, %c0_60] : memref<9x8x8xf32, #tpu.memory_space<vmem>>, vector<1x8x8xf32>
    %67 = vector.shape_cast %66 : vector<1x8x8xf32> to vector<8x8xf32>
    %c0_61 = arith.constant 0 : index
    %c0_62 = arith.constant 0 : index
    %68 = vector.load %arg10[%c0_61, %c0_62] : memref<8x384xf32, #tpu.memory_space<vmem>>, vector<8x342xf32>
    %cst_63 = arith.constant dense<0.000000e+00> : vector<8x342xf32>
    %69 = tpu.matmul %67, %68, %cst_63 {dimension_numbers = #tpu.dot_dimension_numbers<[1], [0], [0], [1], [0, 0, 1, 1], [], []>} : vector<8x8xf32>, vector<8x342xf32>, vector<8x342xf32> -> vector<8x342xf32>
    %70 = arith.addf %65, %69 : vector<8x342xf32>
    %c1_64 = arith.constant 1 : index
    %c0_65 = arith.constant 0 : index
    %c0_66 = arith.constant 0 : index
    %71 = vector.load %arg4[%c1_64, %c0_65, %c0_66] : memref<9x8x8xf32, #tpu.memory_space<vmem>>, vector<1x8x8xf32>
    %72 = vector.shape_cast %71 : vector<1x8x8xf32> to vector<8x8xf32>
    %c0_67 = arith.constant 0 : index
    %c1_68 = arith.constant 1 : index
    %73 = vector.load %arg10[%c0_67, %c1_68] : memref<8x384xf32, #tpu.memory_space<vmem>>, vector<8x342xf32>
    %cst_69 = arith.constant dense<0.000000e+00> : vector<8x342xf32>
    %74 = tpu.matmul %72, %73, %cst_69 {dimension_numbers = #tpu.dot_dimension_numbers<[1], [0], [0], [1], [0, 0, 1, 1], [], []>} : vector<8x8xf32>, vector<8x342xf32>, vector<8x342xf32> -> vector<8x342xf32>
    %75 = arith.addf %70, %74 : vector<8x342xf32>
    %c2_70 = arith.constant 2 : index
    %c0_71 = arith.constant 0 : index
    %c0_72 = arith.constant 0 : index
    %76 = vector.load %arg4[%c2_70, %c0_71, %c0_72] : memref<9x8x8xf32, #tpu.memory_space<vmem>>, vector<1x8x8xf32>
    %77 = vector.shape_cast %76 : vector<1x8x8xf32> to vector<8x8xf32>
    %c0_73 = arith.constant 0 : index
    %c2_74 = arith.constant 2 : index
    %78 = vector.load %arg10[%c0_73, %c2_74] : memref<8x384xf32, #tpu.memory_space<vmem>>, vector<8x342xf32>
    %cst_75 = arith.constant dense<0.000000e+00> : vector<8x342xf32>
    %79 = tpu.matmul %77, %78, %cst_75 {dimension_numbers = #tpu.dot_dimension_numbers<[1], [0], [0], [1], [0, 0, 1, 1], [], []>} : vector<8x8xf32>, vector<8x342xf32>, vector<8x342xf32> -> vector<8x342xf32>
    %80 = arith.addf %75, %79 : vector<8x342xf32>
    %c3_76 = arith.constant 3 : index
    %c0_77 = arith.constant 0 : index
    %c0_78 = arith.constant 0 : index
    %81 = vector.load %arg4[%c3_76, %c0_77, %c0_78] : memref<9x8x8xf32, #tpu.memory_space<vmem>>, vector<1x8x8xf32>
    %82 = vector.shape_cast %81 : vector<1x8x8xf32> to vector<8x8xf32>
    %c0_79 = arith.constant 0 : index
    %c18_80 = arith.constant 18 : index
    %83 = vector.load %arg10[%c0_79, %c18_80] : memref<8x384xf32, #tpu.memory_space<vmem>>, vector<8x342xf32>
    %cst_81 = arith.constant dense<0.000000e+00> : vector<8x342xf32>
    %84 = tpu.matmul %82, %83, %cst_81 {dimension_numbers = #tpu.dot_dimension_numbers<[1], [0], [0], [1], [0, 0, 1, 1], [], []>} : vector<8x8xf32>, vector<8x342xf32>, vector<8x342xf32> -> vector<8x342xf32>
    %85 = arith.addf %80, %84 : vector<8x342xf32>
    %c4_82 = arith.constant 4 : index
    %c0_83 = arith.constant 0 : index
    %c0_84 = arith.constant 0 : index
    %86 = vector.load %arg4[%c4_82, %c0_83, %c0_84] : memref<9x8x8xf32, #tpu.memory_space<vmem>>, vector<1x8x8xf32>
    %87 = vector.shape_cast %86 : vector<1x8x8xf32> to vector<8x8xf32>
    %c0_85 = arith.constant 0 : index
    %c19_86 = arith.constant 19 : index
    %88 = vector.load %arg10[%c0_85, %c19_86] : memref<8x384xf32, #tpu.memory_space<vmem>>, vector<8x342xf32>
    %cst_87 = arith.constant dense<0.000000e+00> : vector<8x342xf32>
    %89 = tpu.matmul %87, %88, %cst_87 {dimension_numbers = #tpu.dot_dimension_numbers<[1], [0], [0], [1], [0, 0, 1, 1], [], []>} : vector<8x8xf32>, vector<8x342xf32>, vector<8x342xf32> -> vector<8x342xf32>
    %90 = arith.addf %85, %89 : vector<8x342xf32>
    %c5_88 = arith.constant 5 : index
    %c0_89 = arith.constant 0 : index
    %c0_90 = arith.constant 0 : index
    %91 = vector.load %arg4[%c5_88, %c0_89, %c0_90] : memref<9x8x8xf32, #tpu.memory_space<vmem>>, vector<1x8x8xf32>
    %92 = vector.shape_cast %91 : vector<1x8x8xf32> to vector<8x8xf32>
    %c0_91 = arith.constant 0 : index
    %c20_92 = arith.constant 20 : index
    %93 = vector.load %arg10[%c0_91, %c20_92] : memref<8x384xf32, #tpu.memory_space<vmem>>, vector<8x342xf32>
    %cst_93 = arith.constant dense<0.000000e+00> : vector<8x342xf32>
    %94 = tpu.matmul %92, %93, %cst_93 {dimension_numbers = #tpu.dot_dimension_numbers<[1], [0], [0], [1], [0, 0, 1, 1], [], []>} : vector<8x8xf32>, vector<8x342xf32>, vector<8x342xf32> -> vector<8x342xf32>
    %95 = arith.addf %90, %94 : vector<8x342xf32>
    %c6_94 = arith.constant 6 : index
    %c0_95 = arith.constant 0 : index
    %c0_96 = arith.constant 0 : index
    %96 = vector.load %arg4[%c6_94, %c0_95, %c0_96] : memref<9x8x8xf32, #tpu.memory_space<vmem>>, vector<1x8x8xf32>
    %97 = vector.shape_cast %96 : vector<1x8x8xf32> to vector<8x8xf32>
    %c0_97 = arith.constant 0 : index
    %c36_98 = arith.constant 36 : index
    %98 = vector.load %arg10[%c0_97, %c36_98] : memref<8x384xf32, #tpu.memory_space<vmem>>, vector<8x342xf32>
    %cst_99 = arith.constant dense<0.000000e+00> : vector<8x342xf32>
    %99 = tpu.matmul %97, %98, %cst_99 {dimension_numbers = #tpu.dot_dimension_numbers<[1], [0], [0], [1], [0, 0, 1, 1], [], []>} : vector<8x8xf32>, vector<8x342xf32>, vector<8x342xf32> -> vector<8x342xf32>
    %100 = arith.addf %95, %99 : vector<8x342xf32>
    %c7_100 = arith.constant 7 : index
    %c0_101 = arith.constant 0 : index
    %c0_102 = arith.constant 0 : index
    %101 = vector.load %arg4[%c7_100, %c0_101, %c0_102] : memref<9x8x8xf32, #tpu.memory_space<vmem>>, vector<1x8x8xf32>
    %102 = vector.shape_cast %101 : vector<1x8x8xf32> to vector<8x8xf32>
    %c0_103 = arith.constant 0 : index
    %c37_104 = arith.constant 37 : index
    %103 = vector.load %arg10[%c0_103, %c37_104] : memref<8x384xf32, #tpu.memory_space<vmem>>, vector<8x342xf32>
    %cst_105 = arith.constant dense<0.000000e+00> : vector<8x342xf32>
    %104 = tpu.matmul %102, %103, %cst_105 {dimension_numbers = #tpu.dot_dimension_numbers<[1], [0], [0], [1], [0, 0, 1, 1], [], []>} : vector<8x8xf32>, vector<8x342xf32>, vector<8x342xf32> -> vector<8x342xf32>
    %105 = arith.addf %100, %104 : vector<8x342xf32>
    %c8_106 = arith.constant 8 : index
    %c0_107 = arith.constant 0 : index
    %c0_108 = arith.constant 0 : index
    %106 = vector.load %arg4[%c8_106, %c0_107, %c0_108] : memref<9x8x8xf32, #tpu.memory_space<vmem>>, vector<1x8x8xf32>
    %107 = vector.shape_cast %106 : vector<1x8x8xf32> to vector<8x8xf32>
    %c0_109 = arith.constant 0 : index
    %c38_110 = arith.constant 38 : index
    %108 = vector.load %arg10[%c0_109, %c38_110] : memref<8x384xf32, #tpu.memory_space<vmem>>, vector<8x342xf32>
    %cst_111 = arith.constant dense<0.000000e+00> : vector<8x342xf32>
    %109 = tpu.matmul %107, %108, %cst_111 {dimension_numbers = #tpu.dot_dimension_numbers<[1], [0], [0], [1], [0, 0, 1, 1], [], []>} : vector<8x8xf32>, vector<8x342xf32>, vector<8x342xf32> -> vector<8x342xf32>
    %110 = arith.addf %105, %109 : vector<8x342xf32>
    %cst_112 = arith.constant 0.000000e+00 : f32
    %111 = vector.shape_cast %4 : vector<1x342xi1> to vector<1x342xi1>
    %112 = vector.broadcast %111 : vector<1x342xi1> to vector<8x342xi1>
    %113 = vector.broadcast %cst_112 : f32 to vector<8x342xf32>
    %114 = arith.select %112, %110, %113 : vector<8x342xi1>, vector<8x342xf32>
    %c0_113 = arith.constant 0 : index
    %c19_114 = arith.constant 19 : index
    %115 = vector.load %arg10[%c0_113, %c19_114] : memref<8x384xf32, #tpu.memory_space<vmem>>, vector<8x342xf32>
    tpu.vector_store %arg10[%c0_113, %c19_114], %114 {strides = array<i32>} : memref<8x384xf32, #tpu.memory_space<vmem>>, vector<8x342xf32>,
    %cst_115 = arith.constant 0.000000e+00 : f32
    %116 = vector.broadcast %cst_115 : f32 to vector<8x342xf32>
    %c0_116 = arith.constant 0 : index
    %c0_117 = arith.constant 0 : index
    %c0_118 = arith.constant 0 : index
    %117 = vector.load %arg5[%c0_116, %c0_117, %c0_118] : memref<9x8x8xf32, #tpu.memory_space<vmem>>, vector<1x8x8xf32>
    %118 = vector.shape_cast %117 : vector<1x8x8xf32> to vector<8x8xf32>
    %c0_119 = arith.constant 0 : index
    %c0_120 = arith.constant 0 : index
    %119 = vector.load %arg10[%c0_119, %c0_120] : memref<8x384xf32, #tpu.memory_space<vmem>>, vector<8x342xf32>
    %cst_121 = arith.constant dense<0.000000e+00> : vector<8x342xf32>
    %120 = tpu.matmul %118, %119, %cst_121 {dimension_numbers = #tpu.dot_dimension_numbers<[1], [0], [0], [1], [0, 0, 1, 1], [], []>} : vector<8x8xf32>, vector<8x342xf32>, vector<8x342xf32> -> vector<8x342xf32>
    %121 = arith.addf %116, %120 : vector<8x342xf32>
    %c1_122 = arith.constant 1 : index
    %c0_123 = arith.constant 0 : index
    %c0_124 = arith.constant 0 : index
    %122 = vector.load %arg5[%c1_122, %c0_123, %c0_124] : memref<9x8x8xf32, #tpu.memory_space<vmem>>, vector<1x8x8xf32>
    %123 = vector.shape_cast %122 : vector<1x8x8xf32> to vector<8x8xf32>
    %c0_125 = arith.constant 0 : index
    %c1_126 = arith.constant 1 : index
    %124 = vector.load %arg10[%c0_125, %c1_126] : memref<8x384xf32, #tpu.memory_space<vmem>>, vector<8x342xf32>
    %cst_127 = arith.constant dense<0.000000e+00> : vector<8x342xf32>
    %125 = tpu.matmul %123, %124, %cst_127 {dimension_numbers = #tpu.dot_dimension_numbers<[1], [0], [0], [1], [0, 0, 1, 1], [], []>} : vector<8x8xf32>, vector<8x342xf32>, vector<8x342xf32> -> vector<8x342xf32>
    %126 = arith.addf %121, %125 : vector<8x342xf32>
    %c2_128 = arith.constant 2 : index
    %c0_129 = arith.constant 0 : index
    %c0_130 = arith.constant 0 : index
    %127 = vector.load %arg5[%c2_128, %c0_129, %c0_130] : memref<9x8x8xf32, #tpu.memory_space<vmem>>, vector<1x8x8xf32>
    %128 = vector.shape_cast %127 : vector<1x8x8xf32> to vector<8x8xf32>
    %c0_131 = arith.constant 0 : index
    %c2_132 = arith.constant 2 : index
    %129 = vector.load %arg10[%c0_131, %c2_132] : memref<8x384xf32, #tpu.memory_space<vmem>>, vector<8x342xf32>
    %cst_133 = arith.constant dense<0.000000e+00> : vector<8x342xf32>
    %130 = tpu.matmul %128, %129, %cst_133 {dimension_numbers = #tpu.dot_dimension_numbers<[1], [0], [0], [1], [0, 0, 1, 1], [], []>} : vector<8x8xf32>, vector<8x342xf32>, vector<8x342xf32> -> vector<8x342xf32>
    %131 = arith.addf %126, %130 : vector<8x342xf32>
    %c3_134 = arith.constant 3 : index
    %c0_135 = arith.constant 0 : index
    %c0_136 = arith.constant 0 : index
    %132 = vector.load %arg5[%c3_134, %c0_135, %c0_136] : memref<9x8x8xf32, #tpu.memory_space<vmem>>, vector<1x8x8xf32>
    %133 = vector.shape_cast %132 : vector<1x8x8xf32> to vector<8x8xf32>
    %c0_137 = arith.constant 0 : index
    %c18_138 = arith.constant 18 : index
    %134 = vector.load %arg10[%c0_137, %c18_138] : memref<8x384xf32, #tpu.memory_space<vmem>>, vector<8x342xf32>
    %cst_139 = arith.constant dense<0.000000e+00> : vector<8x342xf32>
    %135 = tpu.matmul %133, %134, %cst_139 {dimension_numbers = #tpu.dot_dimension_numbers<[1], [0], [0], [1], [0, 0, 1, 1], [], []>} : vector<8x8xf32>, vector<8x342xf32>, vector<8x342xf32> -> vector<8x342xf32>
    %136 = arith.addf %131, %135 : vector<8x342xf32>
    %c4_140 = arith.constant 4 : index
    %c0_141 = arith.constant 0 : index
    %c0_142 = arith.constant 0 : index
    %137 = vector.load %arg5[%c4_140, %c0_141, %c0_142] : memref<9x8x8xf32, #tpu.memory_space<vmem>>, vector<1x8x8xf32>
    %138 = vector.shape_cast %137 : vector<1x8x8xf32> to vector<8x8xf32>
    %c0_143 = arith.constant 0 : index
    %c19_144 = arith.constant 19 : index
    %139 = vector.load %arg10[%c0_143, %c19_144] : memref<8x384xf32, #tpu.memory_space<vmem>>, vector<8x342xf32>
    %cst_145 = arith.constant dense<0.000000e+00> : vector<8x342xf32>
    %140 = tpu.matmul %138, %139, %cst_145 {dimension_numbers = #tpu.dot_dimension_numbers<[1], [0], [0], [1], [0, 0, 1, 1], [], []>} : vector<8x8xf32>, vector<8x342xf32>, vector<8x342xf32> -> vector<8x342xf32>
    %141 = arith.addf %136, %140 : vector<8x342xf32>
    %c5_146 = arith.constant 5 : index
    %c0_147 = arith.constant 0 : index
    %c0_148 = arith.constant 0 : index
    %142 = vector.load %arg5[%c5_146, %c0_147, %c0_148] : memref<9x8x8xf32, #tpu.memory_space<vmem>>, vector<1x8x8xf32>
    %143 = vector.shape_cast %142 : vector<1x8x8xf32> to vector<8x8xf32>
    %c0_149 = arith.constant 0 : index
    %c20_150 = arith.constant 20 : index
    %144 = vector.load %arg10[%c0_149, %c20_150] : memref<8x384xf32, #tpu.memory_space<vmem>>, vector<8x342xf32>
    %cst_151 = arith.constant dense<0.000000e+00> : vector<8x342xf32>
    %145 = tpu.matmul %143, %144, %cst_151 {dimension_numbers = #tpu.dot_dimension_numbers<[1], [0], [0], [1], [0, 0, 1, 1], [], []>} : vector<8x8xf32>, vector<8x342xf32>, vector<8x342xf32> -> vector<8x342xf32>
    %146 = arith.addf %141, %145 : vector<8x342xf32>
    %c6_152 = arith.constant 6 : index
    %c0_153 = arith.constant 0 : index
    %c0_154 = arith.constant 0 : index
    %147 = vector.load %arg5[%c6_152, %c0_153, %c0_154] : memref<9x8x8xf32, #tpu.memory_space<vmem>>, vector<1x8x8xf32>
    %148 = vector.shape_cast %147 : vector<1x8x8xf32> to vector<8x8xf32>
    %c0_155 = arith.constant 0 : index
    %c36_156 = arith.constant 36 : index
    %149 = vector.load %arg10[%c0_155, %c36_156] : memref<8x384xf32, #tpu.memory_space<vmem>>, vector<8x342xf32>
    %cst_157 = arith.constant dense<0.000000e+00> : vector<8x342xf32>
    %150 = tpu.matmul %148, %149, %cst_157 {dimension_numbers = #tpu.dot_dimension_numbers<[1], [0], [0], [1], [0, 0, 1, 1], [], []>} : vector<8x8xf32>, vector<8x342xf32>, vector<8x342xf32> -> vector<8x342xf32>
    %151 = arith.addf %146, %150 : vector<8x342xf32>
    %c7_158 = arith.constant 7 : index
    %c0_159 = arith.constant 0 : index
    %c0_160 = arith.constant 0 : index
    %152 = vector.load %arg5[%c7_158, %c0_159, %c0_160] : memref<9x8x8xf32, #tpu.memory_space<vmem>>, vector<1x8x8xf32>
    %153 = vector.shape_cast %152 : vector<1x8x8xf32> to vector<8x8xf32>
    %c0_161 = arith.constant 0 : index
    %c37_162 = arith.constant 37 : index
    %154 = vector.load %arg10[%c0_161, %c37_162] : memref<8x384xf32, #tpu.memory_space<vmem>>, vector<8x342xf32>
    %cst_163 = arith.constant dense<0.000000e+00> : vector<8x342xf32>
    %155 = tpu.matmul %153, %154, %cst_163 {dimension_numbers = #tpu.dot_dimension_numbers<[1], [0], [0], [1], [0, 0, 1, 1], [], []>} : vector<8x8xf32>, vector<8x342xf32>, vector<8x342xf32> -> vector<8x342xf32>
    %156 = arith.addf %151, %155 : vector<8x342xf32>
    %c8_164 = arith.constant 8 : index
    %c0_165 = arith.constant 0 : index
    %c0_166 = arith.constant 0 : index
    %157 = vector.load %arg5[%c8_164, %c0_165, %c0_166] : memref<9x8x8xf32, #tpu.memory_space<vmem>>, vector<1x8x8xf32>
    %158 = vector.shape_cast %157 : vector<1x8x8xf32> to vector<8x8xf32>
    %c0_167 = arith.constant 0 : index
    %c38_168 = arith.constant 38 : index
    %159 = vector.load %arg10[%c0_167, %c38_168] : memref<8x384xf32, #tpu.memory_space<vmem>>, vector<8x342xf32>
    %cst_169 = arith.constant dense<0.000000e+00> : vector<8x342xf32>
    %160 = tpu.matmul %158, %159, %cst_169 {dimension_numbers = #tpu.dot_dimension_numbers<[1], [0], [0], [1], [0, 0, 1, 1], [], []>} : vector<8x8xf32>, vector<8x342xf32>, vector<8x342xf32> -> vector<8x342xf32>
    %161 = arith.addf %156, %160 : vector<8x342xf32>
    %cst_170 = arith.constant 0.000000e+00 : f32
    %162 = vector.shape_cast %4 : vector<1x342xi1> to vector<1x342xi1>
    %163 = vector.broadcast %162 : vector<1x342xi1> to vector<8x342xi1>
    %164 = vector.broadcast %cst_170 : f32 to vector<8x342xf32>
    %165 = arith.select %163, %161, %164 : vector<8x342xi1>, vector<8x342xf32>
    %c0_171 = arith.constant 0 : index
    %c19_172 = arith.constant 19 : index
    %166 = vector.load %arg10[%c0_171, %c19_172] : memref<8x384xf32, #tpu.memory_space<vmem>>, vector<8x342xf32>
    tpu.vector_store %arg10[%c0_171, %c19_172], %165 {strides = array<i32>} : memref<8x384xf32, #tpu.memory_space<vmem>>, vector<8x342xf32>,
    %cst_173 = arith.constant 0.000000e+00 : f32
    %167 = vector.broadcast %cst_173 : f32 to vector<8x342xf32>
    %c0_174 = arith.constant 0 : index
    %c0_175 = arith.constant 0 : index
    %c0_176 = arith.constant 0 : index
    %168 = vector.load %arg6[%c0_174, %c0_175, %c0_176] : memref<9x8x8xf32, #tpu.memory_space<vmem>>, vector<1x8x8xf32>
    %169 = vector.shape_cast %168 : vector<1x8x8xf32> to vector<8x8xf32>
    %c0_177 = arith.constant 0 : index
    %c0_178 = arith.constant 0 : index
    %170 = vector.load %arg10[%c0_177, %c0_178] : memref<8x384xf32, #tpu.memory_space<vmem>>, vector<8x342xf32>
    %cst_179 = arith.constant dense<0.000000e+00> : vector<8x342xf32>
    %171 = tpu.matmul %169, %170, %cst_179 {dimension_numbers = #tpu.dot_dimension_numbers<[1], [0], [0], [1], [0, 0, 1, 1], [], []>} : vector<8x8xf32>, vector<8x342xf32>, vector<8x342xf32> -> vector<8x342xf32>
    %172 = arith.addf %167, %171 : vector<8x342xf32>
    %c1_180 = arith.constant 1 : index
    %c0_181 = arith.constant 0 : index
    %c0_182 = arith.constant 0 : index
    %173 = vector.load %arg6[%c1_180, %c0_181, %c0_182] : memref<9x8x8xf32, #tpu.memory_space<vmem>>, vector<1x8x8xf32>
    %174 = vector.shape_cast %173 : vector<1x8x8xf32> to vector<8x8xf32>
    %c0_183 = arith.constant 0 : index
    %c1_184 = arith.constant 1 : index
    %175 = vector.load %arg10[%c0_183, %c1_184] : memref<8x384xf32, #tpu.memory_space<vmem>>, vector<8x342xf32>
    %cst_185 = arith.constant dense<0.000000e+00> : vector<8x342xf32>
    %176 = tpu.matmul %174, %175, %cst_185 {dimension_numbers = #tpu.dot_dimension_numbers<[1], [0], [0], [1], [0, 0, 1, 1], [], []>} : vector<8x8xf32>, vector<8x342xf32>, vector<8x342xf32> -> vector<8x342xf32>
    %177 = arith.addf %172, %176 : vector<8x342xf32>
    %c2_186 = arith.constant 2 : index
    %c0_187 = arith.constant 0 : index
    %c0_188 = arith.constant 0 : index
    %178 = vector.load %arg6[%c2_186, %c0_187, %c0_188] : memref<9x8x8xf32, #tpu.memory_space<vmem>>, vector<1x8x8xf32>
    %179 = vector.shape_cast %178 : vector<1x8x8xf32> to vector<8x8xf32>
    %c0_189 = arith.constant 0 : index
    %c2_190 = arith.constant 2 : index
    %180 = vector.load %arg10[%c0_189, %c2_190] : memref<8x384xf32, #tpu.memory_space<vmem>>, vector<8x342xf32>
    %cst_191 = arith.constant dense<0.000000e+00> : vector<8x342xf32>
    %181 = tpu.matmul %179, %180, %cst_191 {dimension_numbers = #tpu.dot_dimension_numbers<[1], [0], [0], [1], [0, 0, 1, 1], [], []>} : vector<8x8xf32>, vector<8x342xf32>, vector<8x342xf32> -> vector<8x342xf32>
    %182 = arith.addf %177, %181 : vector<8x342xf32>
    %c3_192 = arith.constant 3 : index
    %c0_193 = arith.constant 0 : index
    %c0_194 = arith.constant 0 : index
    %183 = vector.load %arg6[%c3_192, %c0_193, %c0_194] : memref<9x8x8xf32, #tpu.memory_space<vmem>>, vector<1x8x8xf32>
    %184 = vector.shape_cast %183 : vector<1x8x8xf32> to vector<8x8xf32>
    %c0_195 = arith.constant 0 : index
    %c18_196 = arith.constant 18 : index
    %185 = vector.load %arg10[%c0_195, %c18_196] : memref<8x384xf32, #tpu.memory_space<vmem>>, vector<8x342xf32>
    %cst_197 = arith.constant dense<0.000000e+00> : vector<8x342xf32>
    %186 = tpu.matmul %184, %185, %cst_197 {dimension_numbers = #tpu.dot_dimension_numbers<[1], [0], [0], [1], [0, 0, 1, 1], [], []>} : vector<8x8xf32>, vector<8x342xf32>, vector<8x342xf32> -> vector<8x342xf32>
    %187 = arith.addf %182, %186 : vector<8x342xf32>
    %c4_198 = arith.constant 4 : index
    %c0_199 = arith.constant 0 : index
    %c0_200 = arith.constant 0 : index
    %188 = vector.load %arg6[%c4_198, %c0_199, %c0_200] : memref<9x8x8xf32, #tpu.memory_space<vmem>>, vector<1x8x8xf32>
    %189 = vector.shape_cast %188 : vector<1x8x8xf32> to vector<8x8xf32>
    %c0_201 = arith.constant 0 : index
    %c19_202 = arith.constant 19 : index
    %190 = vector.load %arg10[%c0_201, %c19_202] : memref<8x384xf32, #tpu.memory_space<vmem>>, vector<8x342xf32>
    %cst_203 = arith.constant dense<0.000000e+00> : vector<8x342xf32>
    %191 = tpu.matmul %189, %190, %cst_203 {dimension_numbers = #tpu.dot_dimension_numbers<[1], [0], [0], [1], [0, 0, 1, 1], [], []>} : vector<8x8xf32>, vector<8x342xf32>, vector<8x342xf32> -> vector<8x342xf32>
    %192 = arith.addf %187, %191 : vector<8x342xf32>
    %c5_204 = arith.constant 5 : index
    %c0_205 = arith.constant 0 : index
    %c0_206 = arith.constant 0 : index
    %193 = vector.load %arg6[%c5_204, %c0_205, %c0_206] : memref<9x8x8xf32, #tpu.memory_space<vmem>>, vector<1x8x8xf32>
    %194 = vector.shape_cast %193 : vector<1x8x8xf32> to vector<8x8xf32>
    %c0_207 = arith.constant 0 : index
    %c20_208 = arith.constant 20 : index
    %195 = vector.load %arg10[%c0_207, %c20_208] : memref<8x384xf32, #tpu.memory_space<vmem>>, vector<8x342xf32>
    %cst_209 = arith.constant dense<0.000000e+00> : vector<8x342xf32>
    %196 = tpu.matmul %194, %195, %cst_209 {dimension_numbers = #tpu.dot_dimension_numbers<[1], [0], [0], [1], [0, 0, 1, 1], [], []>} : vector<8x8xf32>, vector<8x342xf32>, vector<8x342xf32> -> vector<8x342xf32>
    %197 = arith.addf %192, %196 : vector<8x342xf32>
    %c6_210 = arith.constant 6 : index
    %c0_211 = arith.constant 0 : index
    %c0_212 = arith.constant 0 : index
    %198 = vector.load %arg6[%c6_210, %c0_211, %c0_212] : memref<9x8x8xf32, #tpu.memory_space<vmem>>, vector<1x8x8xf32>
    %199 = vector.shape_cast %198 : vector<1x8x8xf32> to vector<8x8xf32>
    %c0_213 = arith.constant 0 : index
    %c36_214 = arith.constant 36 : index
    %200 = vector.load %arg10[%c0_213, %c36_214] : memref<8x384xf32, #tpu.memory_space<vmem>>, vector<8x342xf32>
    %cst_215 = arith.constant dense<0.000000e+00> : vector<8x342xf32>
    %201 = tpu.matmul %199, %200, %cst_215 {dimension_numbers = #tpu.dot_dimension_numbers<[1], [0], [0], [1], [0, 0, 1, 1], [], []>} : vector<8x8xf32>, vector<8x342xf32>, vector<8x342xf32> -> vector<8x342xf32>
    %202 = arith.addf %197, %201 : vector<8x342xf32>
    %c7_216 = arith.constant 7 : index
    %c0_217 = arith.constant 0 : index
    %c0_218 = arith.constant 0 : index
    %203 = vector.load %arg6[%c7_216, %c0_217, %c0_218] : memref<9x8x8xf32, #tpu.memory_space<vmem>>, vector<1x8x8xf32>
    %204 = vector.shape_cast %203 : vector<1x8x8xf32> to vector<8x8xf32>
    %c0_219 = arith.constant 0 : index
    %c37_220 = arith.constant 37 : index
    %205 = vector.load %arg10[%c0_219, %c37_220] : memref<8x384xf32, #tpu.memory_space<vmem>>, vector<8x342xf32>
    %cst_221 = arith.constant dense<0.000000e+00> : vector<8x342xf32>
    %206 = tpu.matmul %204, %205, %cst_221 {dimension_numbers = #tpu.dot_dimension_numbers<[1], [0], [0], [1], [0, 0, 1, 1], [], []>} : vector<8x8xf32>, vector<8x342xf32>, vector<8x342xf32> -> vector<8x342xf32>
    %207 = arith.addf %202, %206 : vector<8x342xf32>
    %c8_222 = arith.constant 8 : index
    %c0_223 = arith.constant 0 : index
    %c0_224 = arith.constant 0 : index
    %208 = vector.load %arg6[%c8_222, %c0_223, %c0_224] : memref<9x8x8xf32, #tpu.memory_space<vmem>>, vector<1x8x8xf32>
    %209 = vector.shape_cast %208 : vector<1x8x8xf32> to vector<8x8xf32>
    %c0_225 = arith.constant 0 : index
    %c38_226 = arith.constant 38 : index
    %210 = vector.load %arg10[%c0_225, %c38_226] : memref<8x384xf32, #tpu.memory_space<vmem>>, vector<8x342xf32>
    %cst_227 = arith.constant dense<0.000000e+00> : vector<8x342xf32>
    %211 = tpu.matmul %209, %210, %cst_227 {dimension_numbers = #tpu.dot_dimension_numbers<[1], [0], [0], [1], [0, 0, 1, 1], [], []>} : vector<8x8xf32>, vector<8x342xf32>, vector<8x342xf32> -> vector<8x342xf32>
    %212 = arith.addf %207, %211 : vector<8x342xf32>
    %cst_228 = arith.constant 0.000000e+00 : f32
    %213 = vector.shape_cast %4 : vector<1x342xi1> to vector<1x342xi1>
    %214 = vector.broadcast %213 : vector<1x342xi1> to vector<8x342xi1>
    %215 = vector.broadcast %cst_228 : f32 to vector<8x342xf32>
    %216 = arith.select %214, %212, %215 : vector<8x342xi1>, vector<8x342xf32>
    %c0_229 = arith.constant 0 : index
    %c19_230 = arith.constant 19 : index
    %217 = vector.load %arg10[%c0_229, %c19_230] : memref<8x384xf32, #tpu.memory_space<vmem>>, vector<8x342xf32>
    tpu.vector_store %arg10[%c0_229, %c19_230], %216 {strides = array<i32>} : memref<8x384xf32, #tpu.memory_space<vmem>>, vector<8x342xf32>,
    %cst_231 = arith.constant 0.000000e+00 : f32
    %218 = vector.broadcast %cst_231 : f32 to vector<8x342xf32>
    %c0_232 = arith.constant 0 : index
    %c0_233 = arith.constant 0 : index
    %c0_234 = arith.constant 0 : index
    %219 = vector.load %arg7[%c0_232, %c0_233, %c0_234] : memref<9x8x8xf32, #tpu.memory_space<vmem>>, vector<1x8x8xf32>
    %220 = vector.shape_cast %219 : vector<1x8x8xf32> to vector<8x8xf32>
    %c0_235 = arith.constant 0 : index
    %c0_236 = arith.constant 0 : index
    %221 = vector.load %arg10[%c0_235, %c0_236] : memref<8x384xf32, #tpu.memory_space<vmem>>, vector<8x342xf32>
    %cst_237 = arith.constant dense<0.000000e+00> : vector<8x342xf32>
    %222 = tpu.matmul %220, %221, %cst_237 {dimension_numbers = #tpu.dot_dimension_numbers<[1], [0], [0], [1], [0, 0, 1, 1], [], []>} : vector<8x8xf32>, vector<8x342xf32>, vector<8x342xf32> -> vector<8x342xf32>
    %223 = arith.addf %218, %222 : vector<8x342xf32>
    %c1_238 = arith.constant 1 : index
    %c0_239 = arith.constant 0 : index
    %c0_240 = arith.constant 0 : index
    %224 = vector.load %arg7[%c1_238, %c0_239, %c0_240] : memref<9x8x8xf32, #tpu.memory_space<vmem>>, vector<1x8x8xf32>
    %225 = vector.shape_cast %224 : vector<1x8x8xf32> to vector<8x8xf32>
    %c0_241 = arith.constant 0 : index
    %c1_242 = arith.constant 1 : index
    %226 = vector.load %arg10[%c0_241, %c1_242] : memref<8x384xf32, #tpu.memory_space<vmem>>, vector<8x342xf32>
    %cst_243 = arith.constant dense<0.000000e+00> : vector<8x342xf32>
    %227 = tpu.matmul %225, %226, %cst_243 {dimension_numbers = #tpu.dot_dimension_numbers<[1], [0], [0], [1], [0, 0, 1, 1], [], []>} : vector<8x8xf32>, vector<8x342xf32>, vector<8x342xf32> -> vector<8x342xf32>
    %228 = arith.addf %223, %227 : vector<8x342xf32>
    %c2_244 = arith.constant 2 : index
    %c0_245 = arith.constant 0 : index
    %c0_246 = arith.constant 0 : index
    %229 = vector.load %arg7[%c2_244, %c0_245, %c0_246] : memref<9x8x8xf32, #tpu.memory_space<vmem>>, vector<1x8x8xf32>
    %230 = vector.shape_cast %229 : vector<1x8x8xf32> to vector<8x8xf32>
    %c0_247 = arith.constant 0 : index
    %c2_248 = arith.constant 2 : index
    %231 = vector.load %arg10[%c0_247, %c2_248] : memref<8x384xf32, #tpu.memory_space<vmem>>, vector<8x342xf32>
    %cst_249 = arith.constant dense<0.000000e+00> : vector<8x342xf32>
    %232 = tpu.matmul %230, %231, %cst_249 {dimension_numbers = #tpu.dot_dimension_numbers<[1], [0], [0], [1], [0, 0, 1, 1], [], []>} : vector<8x8xf32>, vector<8x342xf32>, vector<8x342xf32> -> vector<8x342xf32>
    %233 = arith.addf %228, %232 : vector<8x342xf32>
    %c3_250 = arith.constant 3 : index
    %c0_251 = arith.constant 0 : index
    %c0_252 = arith.constant 0 : index
    %234 = vector.load %arg7[%c3_250, %c0_251, %c0_252] : memref<9x8x8xf32, #tpu.memory_space<vmem>>, vector<1x8x8xf32>
    %235 = vector.shape_cast %234 : vector<1x8x8xf32> to vector<8x8xf32>
    %c0_253 = arith.constant 0 : index
    %c18_254 = arith.constant 18 : index
    %236 = vector.load %arg10[%c0_253, %c18_254] : memref<8x384xf32, #tpu.memory_space<vmem>>, vector<8x342xf32>
    %cst_255 = arith.constant dense<0.000000e+00> : vector<8x342xf32>
    %237 = tpu.matmul %235, %236, %cst_255 {dimension_numbers = #tpu.dot_dimension_numbers<[1], [0], [0], [1], [0, 0, 1, 1], [], []>} : vector<8x8xf32>, vector<8x342xf32>, vector<8x342xf32> -> vector<8x342xf32>
    %238 = arith.addf %233, %237 : vector<8x342xf32>
    %c4_256 = arith.constant 4 : index
    %c0_257 = arith.constant 0 : index
    %c0_258 = arith.constant 0 : index
    %239 = vector.load %arg7[%c4_256, %c0_257, %c0_258] : memref<9x8x8xf32, #tpu.memory_space<vmem>>, vector<1x8x8xf32>
    %240 = vector.shape_cast %239 : vector<1x8x8xf32> to vector<8x8xf32>
    %c0_259 = arith.constant 0 : index
    %c19_260 = arith.constant 19 : index
    %241 = vector.load %arg10[%c0_259, %c19_260] : memref<8x384xf32, #tpu.memory_space<vmem>>, vector<8x342xf32>
    %cst_261 = arith.constant dense<0.000000e+00> : vector<8x342xf32>
    %242 = tpu.matmul %240, %241, %cst_261 {dimension_numbers = #tpu.dot_dimension_numbers<[1], [0], [0], [1], [0, 0, 1, 1], [], []>} : vector<8x8xf32>, vector<8x342xf32>, vector<8x342xf32> -> vector<8x342xf32>
    %243 = arith.addf %238, %242 : vector<8x342xf32>
    %c5_262 = arith.constant 5 : index
    %c0_263 = arith.constant 0 : index
    %c0_264 = arith.constant 0 : index
    %244 = vector.load %arg7[%c5_262, %c0_263, %c0_264] : memref<9x8x8xf32, #tpu.memory_space<vmem>>, vector<1x8x8xf32>
    %245 = vector.shape_cast %244 : vector<1x8x8xf32> to vector<8x8xf32>
    %c0_265 = arith.constant 0 : index
    %c20_266 = arith.constant 20 : index
    %246 = vector.load %arg10[%c0_265, %c20_266] : memref<8x384xf32, #tpu.memory_space<vmem>>, vector<8x342xf32>
    %cst_267 = arith.constant dense<0.000000e+00> : vector<8x342xf32>
    %247 = tpu.matmul %245, %246, %cst_267 {dimension_numbers = #tpu.dot_dimension_numbers<[1], [0], [0], [1], [0, 0, 1, 1], [], []>} : vector<8x8xf32>, vector<8x342xf32>, vector<8x342xf32> -> vector<8x342xf32>
    %248 = arith.addf %243, %247 : vector<8x342xf32>
    %c6_268 = arith.constant 6 : index
    %c0_269 = arith.constant 0 : index
    %c0_270 = arith.constant 0 : index
    %249 = vector.load %arg7[%c6_268, %c0_269, %c0_270] : memref<9x8x8xf32, #tpu.memory_space<vmem>>, vector<1x8x8xf32>
    %250 = vector.shape_cast %249 : vector<1x8x8xf32> to vector<8x8xf32>
    %c0_271 = arith.constant 0 : index
    %c36_272 = arith.constant 36 : index
    %251 = vector.load %arg10[%c0_271, %c36_272] : memref<8x384xf32, #tpu.memory_space<vmem>>, vector<8x342xf32>
    %cst_273 = arith.constant dense<0.000000e+00> : vector<8x342xf32>
    %252 = tpu.matmul %250, %251, %cst_273 {dimension_numbers = #tpu.dot_dimension_numbers<[1], [0], [0], [1], [0, 0, 1, 1], [], []>} : vector<8x8xf32>, vector<8x342xf32>, vector<8x342xf32> -> vector<8x342xf32>
    %253 = arith.addf %248, %252 : vector<8x342xf32>
    %c7_274 = arith.constant 7 : index
    %c0_275 = arith.constant 0 : index
    %c0_276 = arith.constant 0 : index
    %254 = vector.load %arg7[%c7_274, %c0_275, %c0_276] : memref<9x8x8xf32, #tpu.memory_space<vmem>>, vector<1x8x8xf32>
    %255 = vector.shape_cast %254 : vector<1x8x8xf32> to vector<8x8xf32>
    %c0_277 = arith.constant 0 : index
    %c37_278 = arith.constant 37 : index
    %256 = vector.load %arg10[%c0_277, %c37_278] : memref<8x384xf32, #tpu.memory_space<vmem>>, vector<8x342xf32>
    %cst_279 = arith.constant dense<0.000000e+00> : vector<8x342xf32>
    %257 = tpu.matmul %255, %256, %cst_279 {dimension_numbers = #tpu.dot_dimension_numbers<[1], [0], [0], [1], [0, 0, 1, 1], [], []>} : vector<8x8xf32>, vector<8x342xf32>, vector<8x342xf32> -> vector<8x342xf32>
    %258 = arith.addf %253, %257 : vector<8x342xf32>
    %c8_280 = arith.constant 8 : index
    %c0_281 = arith.constant 0 : index
    %c0_282 = arith.constant 0 : index
    %259 = vector.load %arg7[%c8_280, %c0_281, %c0_282] : memref<9x8x8xf32, #tpu.memory_space<vmem>>, vector<1x8x8xf32>
    %260 = vector.shape_cast %259 : vector<1x8x8xf32> to vector<8x8xf32>
    %c0_283 = arith.constant 0 : index
    %c38_284 = arith.constant 38 : index
    %261 = vector.load %arg10[%c0_283, %c38_284] : memref<8x384xf32, #tpu.memory_space<vmem>>, vector<8x342xf32>
    %cst_285 = arith.constant dense<0.000000e+00> : vector<8x342xf32>
    %262 = tpu.matmul %260, %261, %cst_285 {dimension_numbers = #tpu.dot_dimension_numbers<[1], [0], [0], [1], [0, 0, 1, 1], [], []>} : vector<8x8xf32>, vector<8x342xf32>, vector<8x342xf32> -> vector<8x342xf32>
    %263 = arith.addf %258, %262 : vector<8x342xf32>
    %c0_286 = arith.constant 0 : index
    %c0_287 = arith.constant 0 : index
    %264 = vector.load %arg8[%c0_286, %c0_287] : memref<8x3xf32, #tpu.memory_space<vmem>>, vector<8x1xf32>
    %c0_288 = arith.constant 0 : index
    %c1_289 = arith.constant 1 : index
    %265 = vector.load %arg8[%c0_288, %c1_289] : memref<8x3xf32, #tpu.memory_space<vmem>>, vector<8x1xf32>
    %c0_290 = arith.constant 0 : index
    %c2_291 = arith.constant 2 : index
    %266 = vector.load %arg8[%c0_290, %c2_291] : memref<8x3xf32, #tpu.memory_space<vmem>>, vector<8x1xf32>
    %267 = vector.broadcast %264 : vector<8x1xf32> to vector<8x342xf32>
    %268 = arith.mulf %263, %267 : vector<8x342xf32>
    %269 = vector.broadcast %265 : vector<8x1xf32> to vector<8x342xf32>
    %270 = arith.addf %268, %269 : vector<8x342xf32>
    %cst_292 = arith.constant 0.000000e+00 : f32
    %271 = vector.broadcast %cst_292 : f32 to vector<8x342xf32>
    %272 = arith.cmpf oge, %270, %271 : vector<8x342xf32>
    %273 = vector.broadcast %266 : vector<8x1xf32> to vector<8x342xf32>
    %274 = arith.mulf %273, %270 : vector<8x342xf32>
    %275 = arith.select %272, %270, %274 : vector<8x342xi1>, vector<8x342xf32>
    %c0_293 = arith.constant 0 : index
    %c0_294 = arith.constant 0 : index
    %c0_295 = arith.constant 0 : index
    %276 = vector.load %arg9[%c0_293, %c0_294, %c0_295] : memref<1x8x342xf32, #tpu.memory_space<vmem>>, vector<1x8x342xf32>
    %277 = vector.shape_cast %276 : vector<1x8x342xf32> to vector<8x342xf32>
    %278 = vector.shape_cast %275 : vector<8x342xf32> to vector<1x8x342xf32>
    tpu.vector_store %arg9[%c0_293, %c0_294, %c0_295], %278 {strides = array<i32>} : memref<1x8x342xf32, #tpu.memory_space<vmem>>, vector<1x8x342xf32>,
    return
  }
  func.func @transform_0(%arg0: i32) -> (i32, i32) {
    %c0_i32 = arith.constant 0 : i32
    %c0_i32_0 = arith.constant 0 : i32
    %c0_i32_1 = arith.constant 0 : i32
    return %c0_i32, %c0_i32_0 : i32, i32
  }
  func.func @transform_1(%arg0: i32) -> (i32, i32, i32) {
    %c0_i32 = arith.constant 0 : i32
    %c0_i32_0 = arith.constant 0 : i32
    %c0_i32_1 = arith.constant 0 : i32
    return %arg0, %c0_i32, %c0_i32_0 : i32, i32, i32
  }
  func.func @transform_2(%arg0: i32) -> (i32, i32, i32) {
    %c0_i32 = arith.constant 0 : i32
    %c0_i32_0 = arith.constant 0 : i32
    %c0_i32_1 = arith.constant 0 : i32
    %c0_i32_2 = arith.constant 0 : i32
    return %c0_i32, %c0_i32_0, %c0_i32_1 : i32, i32, i32
  }
  func.func @transform_3(%arg0: i32) -> (i32, i32, i32) {
    %c0_i32 = arith.constant 0 : i32
    %c0_i32_0 = arith.constant 0 : i32
    %c0_i32_1 = arith.constant 0 : i32
    %c0_i32_2 = arith.constant 0 : i32
    return %c0_i32, %c0_i32_0, %c0_i32_1 : i32, i32, i32
  }
  func.func @transform_4(%arg0: i32) -> (i32, i32, i32) {
    %c0_i32 = arith.constant 0 : i32
    %c0_i32_0 = arith.constant 0 : i32
    %c0_i32_1 = arith.constant 0 : i32
    %c0_i32_2 = arith.constant 0 : i32
    return %c0_i32, %c0_i32_0, %c0_i32_1 : i32, i32, i32
  }
  func.func @transform_5(%arg0: i32) -> (i32, i32, i32) {
    %c0_i32 = arith.constant 0 : i32
    %c0_i32_0 = arith.constant 0 : i32
    %c0_i32_1 = arith.constant 0 : i32
    %c0_i32_2 = arith.constant 0 : i32
    return %c0_i32, %c0_i32_0, %c0_i32_1 : i32, i32, i32
  }
  func.func @transform_6(%arg0: i32) -> (i32, i32, i32) {
    %c0_i32 = arith.constant 0 : i32
    %c0_i32_0 = arith.constant 0 : i32
    %c0_i32_1 = arith.constant 0 : i32
    %c0_i32_2 = arith.constant 0 : i32
    return %c0_i32, %c0_i32_0, %c0_i32_1 : i32, i32, i32
  }
  func.func @transform_7(%arg0: i32) -> (i32, i32) {
    %c0_i32 = arith.constant 0 : i32
    %c0_i32_0 = arith.constant 0 : i32
    %c0_i32_1 = arith.constant 0 : i32
    return %c0_i32, %c0_i32_0 : i32, i32
  }
  func.func @transform_8(%arg0: i32) -> (i32, i32, i32) {
    %c0_i32 = arith.constant 0 : i32
    %c0_i32_0 = arith.constant 0 : i32
    %c0_i32_1 = arith.constant 0 : i32
    return %arg0, %c0_i32, %c0_i32_0 : i32, i32, i32
  }
}

</mosaic_0001>

<llo_original>
// kernel: tpu_custom_call.1
$region0: #{tpu_custom_call.1}
  #allocation0 [shape = 'u32[]', space=smem, size = 0x4, offset = 0x4, fixed_abs, tag = 'smem constant byte address 0x4 - core index']
  #allocation1 [shape = 'u32[72,128]{1,0:T(1,128)}', space=vmem, size = 0x9000, scoped, tag = 'internal scratch']
  #allocation2 [shape = 'f32[8,384]{1,0:T(8,128)}', space=vmem, size = 0x3000, scoped, tag = 'scratch operand']
  %s0 = inlined_call_operand.vmem [shape: f32[1,342], index: 0, kind: input, shape index: {}]
  %s1 = inlined_call_operand.vmem [shape: f32[2,4,384], index: 1, kind: input, shape index: {}]
  %s2 = inlined_call_operand.vmem [shape: f32[9,8,4], index: 2, kind: input, shape index: {}]
  %s3 = inlined_call_operand.vmem [shape: f32[9,8,8], index: 3, kind: input, shape index: {}]
  %s4 = inlined_call_operand.vmem [shape: f32[9,8,8], index: 4, kind: input, shape index: {}]
  %s5 = inlined_call_operand.vmem [shape: f32[9,8,8], index: 5, kind: input, shape index: {}]
  %s6 = inlined_call_operand.vmem [shape: f32[9,8,8], index: 6, kind: input, shape index: {}]
  %s7 = inlined_call_operand.vmem [shape: f32[8,3], index: 7, kind: input, shape index: {}]
  %s8 = inlined_call_operand.hbm [shape: f32[2,8,342], index: 8, kind: output, shape index: {}]
  %s9 = sld [smem:[#allocation0]]
  $region65: #{tpu_custom_call.1} parent=0
    _
  %s11 = ssub.s32 1, %s9
  %s12 = scalar_select 0, %s11, %s9
  $region1: #{tpu_custom_call.1} parent=0
    #allocation3 [shape = 'u8[24576]{0}', space=vmem, size = 0x6000, scoped, tag = 'output window, operand 0']
    #allocation4 [shape = 's32[2]{0}', space=sflag, size = 0x8, scoped, tag = 'scoped memory for tpu_custom_call.1']
    %13 = vsyncpa [#allocation4], 0
    %s14 = scalar_lea.sflag [#allocation4], 1
    %15 = vsyncpa %s14, 0
    loop: start=0, step=1, limit=4
    $region2: #{tpu_custom_call.1} parent=1 // loop_pre_header
      _
    $region3: #{tpu_custom_call.1} parent=1 // loop_header
      %s17 = sphi 0, %s21
      %p18 = scmp.ge.s32.totalorder %s17, 4
      %s25 = sphi 0, %s25
      %s27 = sphi 0, %s25
      %s28 = sphi 0, %s27
      %s42 = sphi 0, %s28
      %s48 = sphi 0, %s50
      %s51 = sphi 0, %s48
      %s52 = sphi 0, %s51
      %s68 = sphi 0, %s52
      %s72 = sphi 0, %s72
      %s74 = sphi 0, %s72
      %s75 = sphi 0, %s74
      %s89 = sphi 0, %s75
      %s93 = sphi 0, %s93
      %s95 = sphi 0, %s93
      %s96 = sphi 0, %s95
      %s110 = sphi 0, %s96
      %s114 = sphi 0, %s114
      %s116 = sphi 0, %s114
      %s117 = sphi 0, %s116
      %s131 = sphi 0, %s117
      %s135 = sphi 0, %s135
      %s137 = sphi 0, %s135
      %s138 = sphi 0, %s137
      %s152 = sphi 0, %s138
      %s156 = sphi 0, %s156
      %s158 = sphi 0, %s156
      %s159 = sphi 0, %s158
      %s173 = sphi 0, %s159
      %s177 = sphi 0, %s177
      %s179 = sphi 0, %s177
      %s180 = sphi 0, %s179
      %s194 = sphi 0, %s180
      %s200 = sphi 0, %s202
      %s203 = sphi 0, %s200
      %s204 = sphi 0, %s203
      %s220 = sphi 0, %s204
    $region4: #{tpu_custom_call.1} parent=1 // loop_header_branch
      %20 = sbr.rel (%p18) target = $region8
    $region5: #{tpu_custom_call.1} parent=1 // loop_body
      %s22 = ssub.s32 %s17, 1
      %s23 = ssub.s32 %s17, 2
      %s24 = sadd.s32 %s17, 1
      %s26 = sadd.s32 %s25, 1
      %p29 = scmp.eq.s32.totalorder %s17, 1
      %p30 = scmp.ne.s32.totalorder %s25, %s27
      %p31 = scmp.eq.s32.totalorder %s17, 0
      %p32 = por %p30, %p31
      %p33 = scmp.ne.s32.totalorder %s25, %s27
      %p34 = scmp.eq.s32.totalorder %s22, 1
      %p35 = por %p33, %p34
      %p36 = scmp.ne.s32.totalorder %s27, %s28
      %p37 = scmp.eq.s32.totalorder %s22, 0
      %p38 = por %p36, %p37
      %p39 = scmp.ne.s32.totalorder %s27, %s28
      %p40 = scmp.eq.s32.totalorder %s23, 1
      %p41 = por %p39, %p40
      %p43 = scmp.ne.s32.totalorder %s28, %s42
      %p44 = scmp.eq.s32.totalorder %s23, 0
      %p45 = por %p43, %p44
      %s46 = ssub.s32 %s17, %s24
      %p47 = scmp.eq.s32.totalorder %s46, 0
      %s49 = sadd.s32 %s48, 1
      %s50 = scalar_select %p47, %s48, %s49
      %p53 = pneg %p47
      %p54 = scmp.eq.s32.totalorder %s17, 1
      %p55 = por %p53, %p54
      %p56 = scmp.ne.s32.totalorder %s48, %s51
      %p57 = scmp.eq.s32.totalorder %s17, 0
      %p58 = por %p56, %p57
      %p59 = scmp.ne.s32.totalorder %s48, %s51
      %p60 = scmp.eq.s32.totalorder %s22, 1
      %p61 = por %p59, %p60
      %p62 = scmp.ne.s32.totalorder %s51, %s52
      %p63 = scmp.eq.s32.totalorder %s22, 0
      %p64 = por %p62, %p63
      %p65 = scmp.ne.s32.totalorder %s51, %s52
      %p66 = scmp.eq.s32.totalorder %s23, 1
      %p67 = por %p65, %p66
      %p69 = scmp.ne.s32.totalorder %s52, %s68
      %p70 = scmp.eq.s32.totalorder %s23, 0
      %p71 = por %p69, %p70
      %s73 = sadd.s32 %s72, 1
      %p76 = scmp.eq.s32.totalorder %s17, 1
      %p77 = scmp.ne.s32.totalorder %s72, %s74
      %p78 = scmp.eq.s32.totalorder %s17, 0
      %p79 = por %p77, %p78
      %p80 = scmp.ne.s32.totalorder %s72, %s74
      %p81 = scmp.eq.s32.totalorder %s22, 1
      %p82 = por %p80, %p81
      %p83 = scmp.ne.s32.totalorder %s74, %s75
      %p84 = scmp.eq.s32.totalorder %s22, 0
      %p85 = por %p83, %p84
      %p86 = scmp.ne.s32.totalorder %s74, %s75
      %p87 = scmp.eq.s32.totalorder %s23, 1
      %p88 = por %p86, %p87
      %p90 = scmp.ne.s32.totalorder %s75, %s89
      %p91 = scmp.eq.s32.totalorder %s23, 0
      %p92 = por %p90, %p91
      %s94 = sadd.s32 %s93, 1
      %p97 = scmp.eq.s32.totalorder %s17, 1
      %p98 = scmp.ne.s32.totalorder %s93, %s95
      %p99 = scmp.eq.s32.totalorder %s17, 0
      %p100 = por %p98, %p99
      %p101 = scmp.ne.s32.totalorder %s93, %s95
      %p102 = scmp.eq.s32.totalorder %s22, 1
      %p103 = por %p101, %p102
      %p104 = scmp.ne.s32.totalorder %s95, %s96
      %p105 = scmp.eq.s32.totalorder %s22, 0
      %p106 = por %p104, %p105
      %p107 = scmp.ne.s32.totalorder %s95, %s96
      %p108 = scmp.eq.s32.totalorder %s23, 1
      %p109 = por %p107, %p108
      %p111 = scmp.ne.s32.totalorder %s96, %s110
      %p112 = scmp.eq.s32.totalorder %s23, 0
      %p113 = por %p111, %p112
      %s115 = sadd.s32 %s114, 1
      %p118 = scmp.eq.s32.totalorder %s17, 1
      %p119 = scmp.ne.s32.totalorder %s114, %s116
      %p120 = scmp.eq.s32.totalorder %s17, 0
      %p121 = por %p119, %p120
      %p122 = scmp.ne.s32.totalorder %s114, %s116
      %p123 = scmp.eq.s32.totalorder %s22, 1
      %p124 = por %p122, %p123
      %p125 = scmp.ne.s32.totalorder %s116, %s117
      %p126 = scmp.eq.s32.totalorder %s22, 0
      %p127 = por %p125, %p126
      %p128 = scmp.ne.s32.totalorder %s116, %s117
      %p129 = scmp.eq.s32.totalorder %s23, 1
      %p130 = por %p128, %p129
      %p132 = scmp.ne.s32.totalorder %s117, %s131
      %p133 = scmp.eq.s32.totalorder %s23, 0
      %p134 = por %p132, %p133
      %s136 = sadd.s32 %s135, 1
      %p139 = scmp.eq.s32.totalorder %s17, 1
      %p140 = scmp.ne.s32.totalorder %s135, %s137
      %p141 = scmp.eq.s32.totalorder %s17, 0
      %p142 = por %p140, %p141
      %p143 = scmp.ne.s32.totalorder %s135, %s137
      %p144 = scmp.eq.s32.totalorder %s22, 1
      %p145 = por %p143, %p144
      %p146 = scmp.ne.s32.totalorder %s137, %s138
      %p147 = scmp.eq.s32.totalorder %s22, 0
      %p148 = por %p146, %p147
      %p149 = scmp.ne.s32.totalorder %s137, %s138
      %p150 = scmp.eq.s32.totalorder %s23, 1
      %p151 = por %p149, %p150
      %p153 = scmp.ne.s32.totalorder %s138, %s152
      %p154 = scmp.eq.s32.totalorder %s23, 0
      %p155 = por %p153, %p154
      %s157 = sadd.s32 %s156, 1
      %p160 = scmp.eq.s32.totalorder %s17, 1
      %p161 = scmp.ne.s32.totalorder %s156, %s158
      %p162 = scmp.eq.s32.totalorder %s17, 0
      %p163 = por %p161, %p162
      %p164 = scmp.ne.s32.totalorder %s156, %s158
      %p165 = scmp.eq.s32.totalorder %s22, 1
      %p166 = por %p164, %p165
      %p167 = scmp.ne.s32.totalorder %s158, %s159
      %p168 = scmp.eq.s32.totalorder %s22, 0
      %p169 = por %p167, %p168
      %p170 = scmp.ne.s32.totalorder %s158, %s159
      %p171 = scmp.eq.s32.totalorder %s23, 1
      %p172 = por %p170, %p171
      %p174 = scmp.ne.s32.totalorder %s159, %s173
      %p175 = scmp.eq.s32.totalorder %s23, 0
      %p176 = por %p174, %p175
      %s178 = sadd.s32 %s177, 1
      %p181 = scmp.eq.s32.totalorder %s17, 1
      %p182 = scmp.ne.s32.totalorder %s177, %s179
      %p183 = scmp.eq.s32.totalorder %s17, 0
      %p184 = por %p182, %p183
      %p185 = scmp.ne.s32.totalorder %s177, %s179
      %p186 = scmp.eq.s32.totalorder %s22, 1
      %p187 = por %p185, %p186
      %p188 = scmp.ne.s32.totalorder %s179, %s180
      %p189 = scmp.eq.s32.totalorder %s22, 0
      %p190 = por %p188, %p189
      %p191 = scmp.ne.s32.totalorder %s179, %s180
      %p192 = scmp.eq.s32.totalorder %s23, 1
      %p193 = por %p191, %p192
      %p195 = scmp.ne.s32.totalorder %s180, %s194
      %p196 = scmp.eq.s32.totalorder %s23, 0
      %p197 = por %p195, %p196
      %s198 = ssub.s32 %s17, %s24
      %p199 = scmp.eq.s32.totalorder %s198, 0
      %s201 = sadd.s32 %s200, 1
      %s202 = scalar_select %p199, %s200, %s201
      %p205 = pneg %p199
      %p206 = scmp.eq.s32.totalorder %s17, 1
      %p207 = por %p205, %p206
      %p208 = scmp.ne.s32.totalorder %s200, %s203
      %p209 = scmp.eq.s32.totalorder %s17, 0
      %p210 = por %p208, %p209
      %p211 = scmp.ne.s32.totalorder %s200, %s203
      %p212 = scmp.eq.s32.totalorder %s22, 1
      %p213 = por %p211, %p212
      %p214 = scmp.ne.s32.totalorder %s203, %s204
      %p215 = scmp.eq.s32.totalorder %s22, 0
      %p216 = por %p214, %p215
      %p217 = scmp.ne.s32.totalorder %s203, %s204
      %p218 = scmp.eq.s32.totalorder %s23, 1
      %p219 = por %p217, %p218
      %p221 = scmp.ne.s32.totalorder %s204, %s220
      %p222 = scmp.eq.s32.totalorder %s23, 0
      %p223 = por %p221, %p222
      %p224 = scmp.le.s32.totalorder 1, %s17
      %p225 = scmp.lt.s32.totalorder %s17, 3
      %p226 = pnand %p224, %p225
      %p227 = pneg %p226
      // Predicated region
      $region9: #{tpu_custom_call.1} parent=5 // pred_check
        _
      $region10: #{tpu_custom_call.1} parent=5 // pred_check_branch
        %229 = sbr.rel (%p226) target = $region12
      $region11: #{tpu_custom_call.1} parent=5 // pred_region
        %s230 = ssub.s32 %s17, 1
        // Predicated region
        $region13: #{tpu_custom_call.1} parent=11 // pred_check
          %p231 = pneg %p38
        $region14: #{tpu_custom_call.1} parent=11 // pred_check_branch
          %233 = sbr.rel (%p231) target = $region16
        $region15: #{tpu_custom_call.1} parent=11 // pred_region
          _
        $region16: #{tpu_custom_call.1} parent=11 // pred_fallthru
          _
        // Predicated region
        $region17: #{tpu_custom_call.1} parent=11 // pred_check
          %p234 = pneg %p85
        $region18: #{tpu_custom_call.1} parent=11 // pred_check_branch
          %236 = sbr.rel (%p234) target = $region20
        $region19: #{tpu_custom_call.1} parent=11 // pred_region
          _
        $region20: #{tpu_custom_call.1} parent=11 // pred_fallthru
          _
        // Predicated region
        $region21: #{tpu_custom_call.1} parent=11 // pred_check
          %p237 = pneg %p106
        $region22: #{tpu_custom_call.1} parent=11 // pred_check_branch
          %239 = sbr.rel (%p237) target = $region24
        $region23: #{tpu_custom_call.1} parent=11 // pred_region
          _
        $region24: #{tpu_custom_call.1} parent=11 // pred_fallthru
          _
        // Predicated region
        $region25: #{tpu_custom_call.1} parent=11 // pred_check
          %p240 = pneg %p127
        $region26: #{tpu_custom_call.1} parent=11 // pred_check_branch
          %242 = sbr.rel (%p240) target = $region28
        $region27: #{tpu_custom_call.1} parent=11 // pred_region
          _
        $region28: #{tpu_custom_call.1} parent=11 // pred_fallthru
          _
        // Predicated region
        $region29: #{tpu_custom_call.1} parent=11 // pred_check
          %p243 = pneg %p148
        $region30: #{tpu_custom_call.1} parent=11 // pred_check_branch
          %245 = sbr.rel (%p243) target = $region32
        $region31: #{tpu_custom_call.1} parent=11 // pred_region
          _
        $region32: #{tpu_custom_call.1} parent=11 // pred_fallthru
          _
        // Predicated region
        $region33: #{tpu_custom_call.1} parent=11 // pred_check
          %p246 = pneg %p169
        $region34: #{tpu_custom_call.1} parent=11 // pred_check_branch
          %248 = sbr.rel (%p246) target = $region36
        $region35: #{tpu_custom_call.1} parent=11 // pred_region
          _
        $region36: #{tpu_custom_call.1} parent=11 // pred_fallthru
          _
        // Predicated region
        $region37: #{tpu_custom_call.1} parent=11 // pred_check
          %p249 = pneg %p190
        $region38: #{tpu_custom_call.1} parent=11 // pred_check_branch
          %251 = sbr.rel (%p249) target = $region40
        $region39: #{tpu_custom_call.1} parent=11 // pred_region
          _
        $region40: #{tpu_custom_call.1} parent=11 // pred_fallthru
          _
      $region12: #{tpu_custom_call.1} parent=5 // pred_fallthru
        _
      %p252 = scmp.lt.s32.totalorder %s17, 2
      // Predicated region
      $region41: #{tpu_custom_call.1} parent=5 // pred_check
        %p253 = pneg %p252
      $region42: #{tpu_custom_call.1} parent=5 // pred_check_branch
        %255 = sbr.rel (%p253) target = $region44
      $region43: #{tpu_custom_call.1} parent=5 // pred_region
        // Predicated region
        $region45: #{tpu_custom_call.1} parent=43 // pred_check
          %p256 = pneg %p58
        $region46: #{tpu_custom_call.1} parent=43 // pred_check_branch
          %258 = sbr.rel (%p256) target = $region48
        $region47: #{tpu_custom_call.1} parent=43 // pred_region
          %p259 = scmp.lt.s32.totalorder %s17, 1
          %s260 = scalar_select %p259, %s17, 1
          %s261 = smul.addr %s260, 3
          %s262 = smul.addr %s261, 4
          %s263 = scalar_lea.vmem %s1, %s262
        $region48: #{tpu_custom_call.1} parent=43 // pred_fallthru
          _
      $region44: #{tpu_custom_call.1} parent=5 // pred_fallthru
        _
      %p264 = scmp.le.s32.totalorder 1, %s17
      %p265 = scmp.lt.s32.totalorder %s17, 3
      %p266 = pnand %p264, %p265
      %p267 = pneg %p266
      // Predicated region
      $region49: #{tpu_custom_call.1} parent=5 // pred_check
        _
      $region50: #{tpu_custom_call.1} parent=5 // pred_check_branch
        %269 = sbr.rel (%p266) target = $region52
      $region51: #{tpu_custom_call.1} parent=5 // pred_region
        %s270 = ssub.s32 %s17, 1
        %p271 = pneg %p38
        %p272 = pneg %p35
        %p273 = scmp.lt.s32.totalorder %s22, 1
        %s274 = scalar_select %p273, %s22, 1
        %s275 = smul.addr %s274, 3
        %s276 = smul.addr %s275, 4
        %s277 = scalar_lea.vmem %s1, %s276
        %p278 = pneg %p64
        %p279 = pneg %p61
        %p280 = pneg %p85
        %p281 = pneg %p82
        %p282 = pneg %p106
        %p283 = pneg %p103
        %p284 = pneg %p127
        %p285 = pneg %p124
        %p286 = pneg %p148
        %p287 = pneg %p145
        %p288 = pneg %p169
        %p289 = pneg %p166
        %p290 = pneg %p190
        %p291 = pneg %p187
        %p292 = pneg %p216
        %p293 = pneg %p213
        %s294 = sand.u32 %s203, 1
        %s295 = scalar_lea.sflag [#allocation4], %s294
        %s296 = sand.u32 %s203, 1
        %s297 = smul.addr %s296, 24
        %s298 = scalar_lea.vmem [#allocation3], %s297
        %p299 = scmp.lt.s32.totalorder %s22, 1
        %s300 = scalar_select %p299, %s22, 1
        %s301 = smul.addr %s300, 3
        %s302 = smul.addr %s301, 4
        %s303 = scalar_lea.vmem %s1, %s302
        %304 = vst [vmem:[#allocation2] sm:$0xff] 0.0
        %305 = vst [vmem:[#allocation2 + $0x8] sm:$0xff] 0.0
        %306 = vst [vmem:[#allocation2 + $0x10] sm:$0xff] 0.0
        %v307 = vld [vmem:[%s0] sm:$0x7]
        %vm308 = vcmp.gt.f32.partialorder %v307, 0.5
        %v309 = vld [vmem:[%s2] sm:$0xff]
        %v310 = vld [vmem:[%s303] sm:$0xff]
        %v311 = vld [vmem:[%s303 + $0x8] sm:$0xf]
        %s312 = scalar_lea.vmem %s2, 8
        %v313 = vld [vmem:[%s312] sm:$0xff]
        %316 = vst [vmem:[#allocation1] ss:$2 sm:$0xff] %v310
        %s317 = scalar_lea.vmem [#allocation1], 16
        %318 = vst [vmem:[%s317] ss:$2 sm:$0xff] %v311
        %v319 = vld.sshfl [vmem:[#allocation1] sm:$0xff pattern:$0x75316420]
        %v320 = vld.sshfl [vmem:[#allocation1 + $0x8] sm:$0xff pattern:$0x75316420]
        %v321 = vld.sshfl [vmem:[#allocation1 + $0x10] sm:$0xff pattern:$0x75316420]
        %322 = vrot.lane.b32.xlu0 %v319, 127
        %v323 = vpop.permute.xlu0 %322
        %324 = vrot.lane.b32.xlu0 %v320, 127
        %v325 = vpop.permute.xlu0 %324
        %326 = vrot.lane.b32.xlu0 %v321, 127
        %v327 = vpop.permute.xlu0 %326
        %vm328 = vcmask 1039360
        %v329 = vsel %vm328, %v323, %v325
        %v330 = vsel %vm328, %v325, %v327
        %vm331 = vcmask 31744
        %v333 = vsel %vm331, %v313, 0
        %vm335 = vcmask 1043456
        %v336 = vsel %vm335, %v329, 0
        %v338 = vsel %vm335, %v330, 0
        %v340 = vsel %vm335, %v327, 0
        %342 = vmatpush.msra.mxu0 0.0
        %343 = vmatpush.msra.mxu0 0.0
        %344 = vmatpush.msra.mxu0 0.0
        %345 = vmatpush.msra.mxu0 0.0
        %346 = vmatpush.msra.mxu0 0.0
        %347 = vmatpush.msra.mxu0 0.0
        %348 = vmatpush.msra.mxu0 0.0
        %349 = vmatpush.msra.mxu0 0.0
        %350 = vmatpush.msra.mxu0 0.0
        %351 = vmatpush.msra.mxu0 0.0
        %352 = vmatpush.msra.mxu0 0.0
        %353 = vmatpush.msra.mxu0 0.0
        %354 = vmatpush.msra.mxu0 0.0
        %355 = vmatpush.msra.mxu0 0.0
        %356 = vmatpush.msra.mxu0 0.0
        %357 = vmatpush.msra.mxu0 %v336
        %358 = vmatmul.f32.gmra.mxu0 %v333
        %v359 = vpop.f32.mrf.mxu0
        %v360 = vadd.f32 0.0, %v359
        %361 = vdwg.mxu0
        %362 = vmatpush.msra.mxu0 0.0
        %363 = vmatpush.msra.mxu0 0.0
        %364 = vmatpush.msra.mxu0 0.0
        %365 = vmatpush.msra.mxu0 0.0
        %366 = vmatpush.msra.mxu0 0.0
        %367 = vmatpush.msra.mxu0 0.0
        %368 = vmatpush.msra.mxu0 0.0
        %369 = vmatpush.msra.mxu0 0.0
        %370 = vmatpush.msra.mxu0 0.0
        %371 = vmatpush.msra.mxu0 0.0
        %372 = vmatpush.msra.mxu0 0.0
        %373 = vmatpush.msra.mxu0 0.0
        %374 = vmatpush.msra.mxu0 0.0
        %375 = vmatpush.msra.mxu0 0.0
        %376 = vmatpush.msra.mxu0 0.0
        %377 = vmatpush.msra.mxu0 %v338
        %378 = vmatmul.f32.gmra.mxu0 %v333
        %v379 = vpop.f32.mrf.mxu0
        %v380 = vadd.f32 0.0, %v379
        %381 = vdwg.mxu0
        %382 = vmatpush.msra.mxu0 0.0
        %383 = vmatpush.msra.mxu0 0.0
        %384 = vmatpush.msra.mxu0 0.0
        %385 = vmatpush.msra.mxu0 0.0
        %386 = vmatpush.msra.mxu0 0.0
        %387 = vmatpush.msra.mxu0 0.0
        %388 = vmatpush.msra.mxu0 0.0
        %389 = vmatpush.msra.mxu0 0.0
        %390 = vmatpush.msra.mxu0 0.0
        %391 = vmatpush.msra.mxu0 0.0
        %392 = vmatpush.msra.mxu0 0.0
        %393 = vmatpush.msra.mxu0 0.0
        %394 = vmatpush.msra.mxu0 0.0
        %395 = vmatpush.msra.mxu0 0.0
        %396 = vmatpush.msra.mxu0 0.0
        %397 = vmatpush.msra.mxu0 %v340
        %398 = vmatmul.f32.gmra.mxu0 %v333
        %v399 = vpop.f32.mrf.mxu0
        %v400 = vadd.f32 0.0, %v399
        %401 = vdwg.mxu0
        %402 = vst [vmem:[#allocation1] ss:$2 sm:$0xff] %v310
        %s403 = scalar_lea.vmem [#allocation1], 16
        %404 = vst [vmem:[%s403] ss:$2 sm:$0xff] %v311
        %v405 = vld.sshfl [vmem:[#allocation1] sm:$0xff pattern:$0x75316420]
        %v406 = vld.sshfl [vmem:[#allocation1 + $0x8] sm:$0xff pattern:$0x75316420]
        %v407 = vld.sshfl [vmem:[#allocation1 + $0x10] sm:$0xff pattern:$0x75316420]
        %v409 = vsel %vm331, %v309, 0
        %v411 = vsel %vm335, %v405, 0
        %v413 = vsel %vm335, %v406, 0
        %v415 = vsel %vm335, %v407, 0
        %417 = vmatpush.msra.mxu0 0.0
        %418 = vmatpush.msra.mxu0 0.0
        %419 = vmatpush.msra.mxu0 0.0
        %420 = vmatpush.msra.mxu0 0.0
        %421 = vmatpush.msra.mxu0 0.0
        %422 = vmatpush.msra.mxu0 0.0
        %423 = vmatpush.msra.mxu0 0.0
        %424 = vmatpush.msra.mxu0 0.0
        %425 = vmatpush.msra.mxu0 0.0
        %426 = vmatpush.msra.mxu0 0.0
        %427 = vmatpush.msra.mxu0 0.0
        %428 = vmatpush.msra.mxu0 0.0
        %429 = vmatpush.msra.mxu0 0.0
        %430 = vmatpush.msra.mxu0 0.0
        %431 = vmatpush.msra.mxu0 0.0
        %432 = vmatpush.msra.mxu0 %v411
        %433 = vmatmul.f32.gmra.mxu0 %v409
        %v434 = vpop.f32.mrf.mxu0
        %v435 = vadd.f32 %v360, %v434
        %436 = vdwg.mxu0
        %437 = vmatpush.msra.mxu0 0.0
        %438 = vmatpush.msra.mxu0 0.0
        %439 = vmatpush.msra.mxu0 0.0
        %440 = vmatpush.msra.mxu0 0.0
        %441 = vmatpush.msra.mxu0 0.0
        %442 = vmatpush.msra.mxu0 0.0
        %443 = vmatpush.msra.mxu0 0.0
        %444 = vmatpush.msra.mxu0 0.0
        %445 = vmatpush.msra.mxu0 0.0
        %446 = vmatpush.msra.mxu0 0.0
        %447 = vmatpush.msra.mxu0 0.0
        %448 = vmatpush.msra.mxu0 0.0
        %449 = vmatpush.msra.mxu0 0.0
        %450 = vmatpush.msra.mxu0 0.0
        %451 = vmatpush.msra.mxu0 0.0
        %452 = vmatpush.msra.mxu0 %v413
        %453 = vmatmul.f32.gmra.mxu0 %v409
        %v454 = vpop.f32.mrf.mxu0
        %v455 = vadd.f32 %v380, %v454
        %456 = vdwg.mxu0
        %457 = vmatpush.msra.mxu0 0.0
        %458 = vmatpush.msra.mxu0 0.0
        %459 = vmatpush.msra.mxu0 0.0
        %460 = vmatpush.msra.mxu0 0.0
        %461 = vmatpush.msra.mxu0 0.0
        %462 = vmatpush.msra.mxu0 0.0
        %463 = vmatpush.msra.mxu0 0.0
        %464 = vmatpush.msra.mxu0 0.0
        %465 = vmatpush.msra.mxu0 0.0
        %466 = vmatpush.msra.mxu0 0.0
        %467 = vmatpush.msra.mxu0 0.0
        %468 = vmatpush.msra.mxu0 0.0
        %469 = vmatpush.msra.mxu0 0.0
        %470 = vmatpush.msra.mxu0 0.0
        %471 = vmatpush.msra.mxu0 0.0
        %472 = vmatpush.msra.mxu0 %v415
        %473 = vmatmul.f32.gmra.mxu0 %v409
        %v474 = vpop.f32.mrf.mxu0
        %v475 = vadd.f32 %v400, %v474
        %476 = vdwg.mxu0
        %s477 = scalar_lea.vmem %s2, 16
        %v478 = vld [vmem:[%s477] sm:$0xff]
        %v479 = vld [vmem:[%s303] sm:$0xff]
        %v480 = vld [vmem:[%s303 + $0x8] sm:$0xf]
        %483 = vst [vmem:[#allocation1] ss:$2 sm:$0xff] %v479
        %s484 = scalar_lea.vmem [#allocation1], 16
        %485 = vst [vmem:[%s484] ss:$2 sm:$0xff] %v480
        %v486 = vld.sshfl [vmem:[#allocation1] sm:$0xff pattern:$0x75316420]
        %v487 = vld.sshfl [vmem:[#allocation1 + $0x8] sm:$0xff pattern:$0x75316420]
        %v488 = vld.sshfl [vmem:[#allocation1 + $0x10] sm:$0xff pattern:$0x75316420]
        %489 = vrot.lane.b32.xlu0 %v486, 126
        %v490 = vpop.permute.xlu0 %489
        %491 = vrot.lane.b32.xlu0 %v487, 126
        %v492 = vpop.permute.xlu0 %491
        %493 = vrot.lane.b32.xlu0 %v488, 126
        %v494 = vpop.permute.xlu0 %493
        %vm495 = vcmask 1031168
        %v496 = vsel %vm495, %v490, %v492
        %v497 = vsel %vm495, %v492, %v494
        %v499 = vsel %vm331, %v478, 0
        %v501 = vsel %vm335, %v496, 0
        %v503 = vsel %vm335, %v497, 0
        %v505 = vsel %vm335, %v494, 0
        %507 = vmatpush.msra.mxu0 0.0
        %508 = vmatpush.msra.mxu0 0.0
        %509 = vmatpush.msra.mxu0 0.0
        %510 = vmatpush.msra.mxu0 0.0
        %511 = vmatpush.msra.mxu0 0.0
        %512 = vmatpush.msra.mxu0 0.0
        %513 = vmatpush.msra.mxu0 0.0
        %514 = vmatpush.msra.mxu0 0.0
        %515 = vmatpush.msra.mxu0 0.0
        %516 = vmatpush.msra.mxu0 0.0
        %517 = vmatpush.msra.mxu0 0.0
        %518 = vmatpush.msra.mxu0 0.0
        %519 = vmatpush.msra.mxu0 0.0
        %520 = vmatpush.msra.mxu0 0.0
        %521 = vmatpush.msra.mxu0 0.0
        %522 = vmatpush.msra.mxu0 %v501
        %523 = vmatmul.f32.gmra.mxu0 %v499
        %v524 = vpop.f32.mrf.mxu0
        %v525 = vadd.f32 0.0, %v524
        %526 = vdwg.mxu0
        %527 = vmatpush.msra.mxu0 0.0
        %528 = vmatpush.msra.mxu0 0.0
        %529 = vmatpush.msra.mxu0 0.0
        %530 = vmatpush.msra.mxu0 0.0
        %531 = vmatpush.msra.mxu0 0.0
        %532 = vmatpush.msra.mxu0 0.0
        %533 = vmatpush.msra.mxu0 0.0
        %534 = vmatpush.msra.mxu0 0.0
        %535 = vmatpush.msra.mxu0 0.0
        %536 = vmatpush.msra.mxu0 0.0
        %537 = vmatpush.msra.mxu0 0.0
        %538 = vmatpush.msra.mxu0 0.0
        %539 = vmatpush.msra.mxu0 0.0
        %540 = vmatpush.msra.mxu0 0.0
        %541 = vmatpush.msra.mxu0 0.0
        %542 = vmatpush.msra.mxu0 %v503
        %543 = vmatmul.f32.gmra.mxu0 %v499
        %v544 = vpop.f32.mrf.mxu0
        %v545 = vadd.f32 0.0, %v544
        %546 = vdwg.mxu0
        %547 = vmatpush.msra.mxu0 0.0
        %548 = vmatpush.msra.mxu0 0.0
        %549 = vmatpush.msra.mxu0 0.0
        %550 = vmatpush.msra.mxu0 0.0
        %551 = vmatpush.msra.mxu0 0.0
        %552 = vmatpush.msra.mxu0 0.0
        %553 = vmatpush.msra.mxu0 0.0
        %554 = vmatpush.msra.mxu0 0.0
        %555 = vmatpush.msra.mxu0 0.0
        %556 = vmatpush.msra.mxu0 0.0
        %557 = vmatpush.msra.mxu0 0.0
        %558 = vmatpush.msra.mxu0 0.0
        %559 = vmatpush.msra.mxu0 0.0
        %560 = vmatpush.msra.mxu0 0.0
        %561 = vmatpush.msra.mxu0 0.0
        %562 = vmatpush.msra.mxu0 %v505
        %563 = vmatmul.f32.gmra.mxu0 %v499
        %v564 = vpop.f32.mrf.mxu0
        %v565 = vadd.f32 0.0, %v564
        %566 = vdwg.mxu0
        %v567 = vadd.f32 %v435, %v525
        %v568 = vadd.f32 %v455, %v545
        %v569 = vadd.f32 %v475, %v565
        %s570 = scalar_lea.vmem %s2, 24
        %v571 = vld [vmem:[%s570] sm:$0xff]
        %v572 = vld [vmem:[%s303] sm:$0xff]
        %v573 = vld [vmem:[%s303 + $0x8] sm:$0xf]
        %576 = vst [vmem:[#allocation1] ss:$2 sm:$0xff] %v572
        %s577 = scalar_lea.vmem [#allocation1], 16
        %578 = vst [vmem:[%s577] ss:$2 sm:$0xff] %v573
        %v579 = vld.sshfl [vmem:[#allocation1] sm:$0xff pattern:$0x75316420]
        %v580 = vld.sshfl [vmem:[#allocation1 + $0x8] sm:$0xff pattern:$0x75316420]
        %v581 = vld.sshfl [vmem:[#allocation1 + $0x10] sm:$0xff pattern:$0x75316420]
        %582 = vrot.lane.b32.xlu0 %v579, 110
        %v583 = vpop.permute.xlu0 %582
        %584 = vrot.lane.b32.xlu0 %v580, 110
        %v585 = vpop.permute.xlu0 %584
        %586 = vrot.lane.b32.xlu0 %v581, 110
        %v587 = vpop.permute.xlu0 %586
        %vm588 = vcmask 900096
        %v589 = vsel %vm588, %v583, %v585
        %v590 = vsel %vm588, %v585, %v587
        %v592 = vsel %vm331, %v571, 0
        %v594 = vsel %vm335, %v589, 0
        %v596 = vsel %vm335, %v590, 0
        %v598 = vsel %vm335, %v587, 0
        %600 = vmatpush.msra.mxu0 0.0
        %601 = vmatpush.msra.mxu0 0.0
        %602 = vmatpush.msra.mxu0 0.0
        %603 = vmatpush.msra.mxu0 0.0
        %604 = vmatpush.msra.mxu0 0.0
        %605 = vmatpush.msra.mxu0 0.0
        %606 = vmatpush.msra.mxu0 0.0
        %607 = vmatpush.msra.mxu0 0.0
        %608 = vmatpush.msra.mxu0 0.0
        %609 = vmatpush.msra.mxu0 0.0
        %610 = vmatpush.msra.mxu0 0.0
        %611 = vmatpush.msra.mxu0 0.0
        %612 = vmatpush.msra.mxu0 0.0
        %613 = vmatpush.msra.mxu0 0.0
        %614 = vmatpush.msra.mxu0 0.0
        %615 = vmatpush.msra.mxu0 %v594
        %616 = vmatmul.f32.gmra.mxu0 %v592
        %v617 = vpop.f32.mrf.mxu0
        %v618 = vadd.f32 0.0, %v617
        %619 = vdwg.mxu0
        %620 = vmatpush.msra.mxu0 0.0
        %621 = vmatpush.msra.mxu0 0.0
        %622 = vmatpush.msra.mxu0 0.0
        %623 = vmatpush.msra.mxu0 0.0
        %624 = vmatpush.msra.mxu0 0.0
        %625 = vmatpush.msra.mxu0 0.0
        %626 = vmatpush.msra.mxu0 0.0
        %627 = vmatpush.msra.mxu0 0.0
        %628 = vmatpush.msra.mxu0 0.0
        %629 = vmatpush.msra.mxu0 0.0
        %630 = vmatpush.msra.mxu0 0.0
        %631 = vmatpush.msra.mxu0 0.0
        %632 = vmatpush.msra.mxu0 0.0
        %633 = vmatpush.msra.mxu0 0.0
        %634 = vmatpush.msra.mxu0 0.0
        %635 = vmatpush.msra.mxu0 %v596
        %636 = vmatmul.f32.gmra.mxu0 %v592
        %v637 = vpop.f32.mrf.mxu0
        %v638 = vadd.f32 0.0, %v637
        %639 = vdwg.mxu0
        %640 = vmatpush.msra.mxu0 0.0
        %641 = vmatpush.msra.mxu0 0.0
        %642 = vmatpush.msra.mxu0 0.0
        %643 = vmatpush.msra.mxu0 0.0
        %644 = vmatpush.msra.mxu0 0.0
        %645 = vmatpush.msra.mxu0 0.0
        %646 = vmatpush.msra.mxu0 0.0
        %647 = vmatpush.msra.mxu0 0.0
        %648 = vmatpush.msra.mxu0 0.0
        %649 = vmatpush.msra.mxu0 0.0
        %650 = vmatpush.msra.mxu0 0.0
        %651 = vmatpush.msra.mxu0 0.0
        %652 = vmatpush.msra.mxu0 0.0
        %653 = vmatpush.msra.mxu0 0.0
        %654 = vmatpush.msra.mxu0 0.0
        %655 = vmatpush.msra.mxu0 %v598
        %656 = vmatmul.f32.gmra.mxu0 %v592
        %v657 = vpop.f32.mrf.mxu0
        %v658 = vadd.f32 0.0, %v657
        %659 = vdwg.mxu0
        %v660 = vadd.f32 %v567, %v618
        %v661 = vadd.f32 %v568, %v638
        %v662 = vadd.f32 %v569, %v658
        %s663 = scalar_lea.vmem %s2, 32
        %v664 = vld [vmem:[%s663] sm:$0xff]
        %v665 = vld [vmem:[%s303] sm:$0xff]
        %v666 = vld [vmem:[%s303 + $0x8] sm:$0xf]
        %669 = vst [vmem:[#allocation1] ss:$2 sm:$0xff] %v665
        %s670 = scalar_lea.vmem [#allocation1], 16
        %671 = vst [vmem:[%s670] ss:$2 sm:$0xff] %v666
        %v672 = vld.sshfl [vmem:[#allocation1] sm:$0xff pattern:$0x75316420]
        %v673 = vld.sshfl [vmem:[#allocation1 + $0x8] sm:$0xff pattern:$0x75316420]
        %v674 = vld.sshfl [vmem:[#allocation1 + $0x10] sm:$0xff pattern:$0x75316420]
        %675 = vrot.lane.b32.xlu0 %v672, 109
        %v676 = vpop.permute.xlu0 %675
        %677 = vrot.lane.b32.xlu0 %v673, 109
        %v678 = vpop.permute.xlu0 %677
        %679 = vrot.lane.b32.xlu0 %v674, 109
        %v680 = vpop.permute.xlu0 %679
        %vm681 = vcmask 891904
        %v682 = vsel %vm681, %v676, %v678
        %v683 = vsel %vm681, %v678, %v680
        %v685 = vsel %vm331, %v664, 0
        %v687 = vsel %vm335, %v682, 0
        %v689 = vsel %vm335, %v683, 0
        %v691 = vsel %vm335, %v680, 0
        %693 = vmatpush.msra.mxu0 0.0
        %694 = vmatpush.msra.mxu0 0.0
        %695 = vmatpush.msra.mxu0 0.0
        %696 = vmatpush.msra.mxu0 0.0
        %697 = vmatpush.msra.mxu0 0.0
        %698 = vmatpush.msra.mxu0 0.0
        %699 = vmatpush.msra.mxu0 0.0
        %700 = vmatpush.msra.mxu0 0.0
        %701 = vmatpush.msra.mxu0 0.0
        %702 = vmatpush.msra.mxu0 0.0
        %703 = vmatpush.msra.mxu0 0.0
        %704 = vmatpush.msra.mxu0 0.0
        %705 = vmatpush.msra.mxu0 0.0
        %706 = vmatpush.msra.mxu0 0.0
        %707 = vmatpush.msra.mxu0 0.0
        %708 = vmatpush.msra.mxu0 %v687
        %709 = vmatmul.f32.gmra.mxu0 %v685
        %v710 = vpop.f32.mrf.mxu0
        %v711 = vadd.f32 0.0, %v710
        %712 = vdwg.mxu0
        %713 = vmatpush.msra.mxu0 0.0
        %714 = vmatpush.msra.mxu0 0.0
        %715 = vmatpush.msra.mxu0 0.0
        %716 = vmatpush.msra.mxu0 0.0
        %717 = vmatpush.msra.mxu0 0.0
        %718 = vmatpush.msra.mxu0 0.0
        %719 = vmatpush.msra.mxu0 0.0
        %720 = vmatpush.msra.mxu0 0.0
        %721 = vmatpush.msra.mxu0 0.0
        %722 = vmatpush.msra.mxu0 0.0
        %723 = vmatpush.msra.mxu0 0.0
        %724 = vmatpush.msra.mxu0 0.0
        %725 = vmatpush.msra.mxu0 0.0
        %726 = vmatpush.msra.mxu0 0.0
        %727 = vmatpush.msra.mxu0 0.0
        %728 = vmatpush.msra.mxu0 %v689
        %729 = vmatmul.f32.gmra.mxu0 %v685
        %v730 = vpop.f32.mrf.mxu0
        %v731 = vadd.f32 0.0, %v730
        %732 = vdwg.mxu0
        %733 = vmatpush.msra.mxu0 0.0
        %734 = vmatpush.msra.mxu0 0.0
        %735 = vmatpush.msra.mxu0 0.0
        %736 = vmatpush.msra.mxu0 0.0
        %737 = vmatpush.msra.mxu0 0.0
        %738 = vmatpush.msra.mxu0 0.0
        %739 = vmatpush.msra.mxu0 0.0
        %740 = vmatpush.msra.mxu0 0.0
        %741 = vmatpush.msra.mxu0 0.0
        %742 = vmatpush.msra.mxu0 0.0
        %743 = vmatpush.msra.mxu0 0.0
        %744 = vmatpush.msra.mxu0 0.0
        %745 = vmatpush.msra.mxu0 0.0
        %746 = vmatpush.msra.mxu0 0.0
        %747 = vmatpush.msra.mxu0 0.0
        %748 = vmatpush.msra.mxu0 %v691
        %749 = vmatmul.f32.gmra.mxu0 %v685
        %v750 = vpop.f32.mrf.mxu0
        %v751 = vadd.f32 0.0, %v750
        %752 = vdwg.mxu0
        %v753 = vadd.f32 %v660, %v711
        %v754 = vadd.f32 %v661, %v731
        %v755 = vadd.f32 %v662, %v751
        %s756 = scalar_lea.vmem %s2, 40
        %v757 = vld [vmem:[%s756] sm:$0xff]
        %v758 = vld [vmem:[%s303] sm:$0xff]
        %v759 = vld [vmem:[%s303 + $0x8] sm:$0xf]
        %762 = vst [vmem:[#allocation1] ss:$2 sm:$0xff] %v758
        %s763 = scalar_lea.vmem [#allocation1], 16
        %764 = vst [vmem:[%s763] ss:$2 sm:$0xff] %v759
        %v765 = vld.sshfl [vmem:[#allocation1] sm:$0xff pattern:$0x75316420]
        %v766 = vld.sshfl [vmem:[#allocation1 + $0x8] sm:$0xff pattern:$0x75316420]
        %v767 = vld.sshfl [vmem:[#allocation1 + $0x10] sm:$0xff pattern:$0x75316420]
        %768 = vrot.lane.b32.xlu0 %v765, 108
        %v769 = vpop.permute.xlu0 %768
        %770 = vrot.lane.b32.xlu0 %v766, 108
        %v771 = vpop.permute.xlu0 %770
        %772 = vrot.lane.b32.xlu0 %v767, 108
        %v773 = vpop.permute.xlu0 %772
        %vm774 = vcmask 883712
        %v775 = vsel %vm774, %v769, %v771
        %v776 = vsel %vm774, %v771, %v773
        %v778 = vsel %vm331, %v757, 0
        %v780 = vsel %vm335, %v775, 0
        %v782 = vsel %vm335, %v776, 0
        %v784 = vsel %vm335, %v773, 0
        %786 = vmatpush.msra.mxu0 0.0
        %787 = vmatpush.msra.mxu0 0.0
        %788 = vmatpush.msra.mxu0 0.0
        %789 = vmatpush.msra.mxu0 0.0
        %790 = vmatpush.msra.mxu0 0.0
        %791 = vmatpush.msra.mxu0 0.0
        %792 = vmatpush.msra.mxu0 0.0
        %793 = vmatpush.msra.mxu0 0.0
        %794 = vmatpush.msra.mxu0 0.0
        %795 = vmatpush.msra.mxu0 0.0
        %796 = vmatpush.msra.mxu0 0.0
        %797 = vmatpush.msra.mxu0 0.0
        %798 = vmatpush.msra.mxu0 0.0
        %799 = vmatpush.msra.mxu0 0.0
        %800 = vmatpush.msra.mxu0 0.0
        %801 = vmatpush.msra.mxu0 %v780
        %802 = vmatmul.f32.gmra.mxu0 %v778
        %v803 = vpop.f32.mrf.mxu0
        %v804 = vadd.f32 0.0, %v803
        %805 = vdwg.mxu0
        %806 = vmatpush.msra.mxu0 0.0
        %807 = vmatpush.msra.mxu0 0.0
        %808 = vmatpush.msra.mxu0 0.0
        %809 = vmatpush.msra.mxu0 0.0
        %810 = vmatpush.msra.mxu0 0.0
        %811 = vmatpush.msra.mxu0 0.0
        %812 = vmatpush.msra.mxu0 0.0
        %813 = vmatpush.msra.mxu0 0.0
        %814 = vmatpush.msra.mxu0 0.0
        %815 = vmatpush.msra.mxu0 0.0
        %816 = vmatpush.msra.mxu0 0.0
        %817 = vmatpush.msra.mxu0 0.0
        %818 = vmatpush.msra.mxu0 0.0
        %819 = vmatpush.msra.mxu0 0.0
        %820 = vmatpush.msra.mxu0 0.0
        %821 = vmatpush.msra.mxu0 %v782
        %822 = vmatmul.f32.gmra.mxu0 %v778
        %v823 = vpop.f32.mrf.mxu0
        %v824 = vadd.f32 0.0, %v823
        %825 = vdwg.mxu0
        %826 = vmatpush.msra.mxu0 0.0
        %827 = vmatpush.msra.mxu0 0.0
        %828 = vmatpush.msra.mxu0 0.0
        %829 = vmatpush.msra.mxu0 0.0
        %830 = vmatpush.msra.mxu0 0.0
        %831 = vmatpush.msra.mxu0 0.0
        %832 = vmatpush.msra.mxu0 0.0
        %833 = vmatpush.msra.mxu0 0.0
        %834 = vmatpush.msra.mxu0 0.0
        %835 = vmatpush.msra.mxu0 0.0
        %836 = vmatpush.msra.mxu0 0.0
        %837 = vmatpush.msra.mxu0 0.0
        %838 = vmatpush.msra.mxu0 0.0
        %839 = vmatpush.msra.mxu0 0.0
        %840 = vmatpush.msra.mxu0 0.0
        %841 = vmatpush.msra.mxu0 %v784
        %842 = vmatmul.f32.gmra.mxu0 %v778
        %v843 = vpop.f32.mrf.mxu0
        %v844 = vadd.f32 0.0, %v843
        %845 = vdwg.mxu0
        %v846 = vadd.f32 %v753, %v804
        %v847 = vadd.f32 %v754, %v824
        %v848 = vadd.f32 %v755, %v844
        %s849 = scalar_lea.vmem %s2, 48
        %v850 = vld [vmem:[%s849] sm:$0xff]
        %v851 = vld [vmem:[%s303] sm:$0xff]
        %v852 = vld [vmem:[%s303 + $0x8] sm:$0xf]
        %855 = vst [vmem:[#allocation1] ss:$2 sm:$0xff] %v851
        %s856 = scalar_lea.vmem [#allocation1], 16
        %857 = vst [vmem:[%s856] ss:$2 sm:$0xff] %v852
        %v858 = vld.sshfl [vmem:[#allocation1] sm:$0xff pattern:$0x75316420]
        %v859 = vld.sshfl [vmem:[#allocation1 + $0x8] sm:$0xff pattern:$0x75316420]
        %v860 = vld.sshfl [vmem:[#allocation1 + $0x10] sm:$0xff pattern:$0x75316420]
        %861 = vrot.lane.b32.xlu0 %v858, 92
        %v862 = vpop.permute.xlu0 %861
        %863 = vrot.lane.b32.xlu0 %v859, 92
        %v864 = vpop.permute.xlu0 %863
        %865 = vrot.lane.b32.xlu0 %v860, 92
        %v866 = vpop.permute.xlu0 %865
        %vm867 = vcmask 752640
        %v868 = vsel %vm867, %v862, %v864
        %v869 = vsel %vm867, %v864, %v866
        %v871 = vsel %vm331, %v850, 0
        %v873 = vsel %vm335, %v868, 0
        %v875 = vsel %vm335, %v869, 0
        %v877 = vsel %vm335, %v866, 0
        %879 = vmatpush.msra.mxu0 0.0
        %880 = vmatpush.msra.mxu0 0.0
        %881 = vmatpush.msra.mxu0 0.0
        %882 = vmatpush.msra.mxu0 0.0
        %883 = vmatpush.msra.mxu0 0.0
        %884 = vmatpush.msra.mxu0 0.0
        %885 = vmatpush.msra.mxu0 0.0
        %886 = vmatpush.msra.mxu0 0.0
        %887 = vmatpush.msra.mxu0 0.0
        %888 = vmatpush.msra.mxu0 0.0
        %889 = vmatpush.msra.mxu0 0.0
        %890 = vmatpush.msra.mxu0 0.0
        %891 = vmatpush.msra.mxu0 0.0
        %892 = vmatpush.msra.mxu0 0.0
        %893 = vmatpush.msra.mxu0 0.0
        %894 = vmatpush.msra.mxu0 %v873
        %895 = vmatmul.f32.gmra.mxu0 %v871
        %v896 = vpop.f32.mrf.mxu0
        %v897 = vadd.f32 0.0, %v896
        %898 = vdwg.mxu0
        %899 = vmatpush.msra.mxu0 0.0
        %900 = vmatpush.msra.mxu0 0.0
        %901 = vmatpush.msra.mxu0 0.0
        %902 = vmatpush.msra.mxu0 0.0
        %903 = vmatpush.msra.mxu0 0.0
        %904 = vmatpush.msra.mxu0 0.0
        %905 = vmatpush.msra.mxu0 0.0
        %906 = vmatpush.msra.mxu0 0.0
        %907 = vmatpush.msra.mxu0 0.0
        %908 = vmatpush.msra.mxu0 0.0
        %909 = vmatpush.msra.mxu0 0.0
        %910 = vmatpush.msra.mxu0 0.0
        %911 = vmatpush.msra.mxu0 0.0
        %912 = vmatpush.msra.mxu0 0.0
        %913 = vmatpush.msra.mxu0 0.0
        %914 = vmatpush.msra.mxu0 %v875
        %915 = vmatmul.f32.gmra.mxu0 %v871
        %v916 = vpop.f32.mrf.mxu0
        %v917 = vadd.f32 0.0, %v916
        %918 = vdwg.mxu0
        %919 = vmatpush.msra.mxu0 0.0
        %920 = vmatpush.msra.mxu0 0.0
        %921 = vmatpush.msra.mxu0 0.0
        %922 = vmatpush.msra.mxu0 0.0
        %923 = vmatpush.msra.mxu0 0.0
        %924 = vmatpush.msra.mxu0 0.0
        %925 = vmatpush.msra.mxu0 0.0
        %926 = vmatpush.msra.mxu0 0.0
        %927 = vmatpush.msra.mxu0 0.0
        %928 = vmatpush.msra.mxu0 0.0
        %929 = vmatpush.msra.mxu0 0.0
        %930 = vmatpush.msra.mxu0 0.0
        %931 = vmatpush.msra.mxu0 0.0
        %932 = vmatpush.msra.mxu0 0.0
        %933 = vmatpush.msra.mxu0 0.0
        %934 = vmatpush.msra.mxu0 %v877
        %935 = vmatmul.f32.gmra.mxu0 %v871
        %v936 = vpop.f32.mrf.mxu0
        %v937 = vadd.f32 0.0, %v936
        %938 = vdwg.mxu0
        %v939 = vadd.f32 %v846, %v897
        %v940 = vadd.f32 %v847, %v917
        %v941 = vadd.f32 %v848, %v937
        %s942 = scalar_lea.vmem %s2, 56
        %v943 = vld [vmem:[%s942] sm:$0xff]
        %v944 = vld [vmem:[%s303] sm:$0xff]
        %v945 = vld [vmem:[%s303 + $0x8] sm:$0xf]
        %948 = vst [vmem:[#allocation1] ss:$2 sm:$0xff] %v944
        %s949 = scalar_lea.vmem [#allocation1], 16
        %950 = vst [vmem:[%s949] ss:$2 sm:$0xff] %v945
        %v951 = vld.sshfl [vmem:[#allocation1] sm:$0xff pattern:$0x75316420]
        %v952 = vld.sshfl [vmem:[#allocation1 + $0x8] sm:$0xff pattern:$0x75316420]
        %v953 = vld.sshfl [vmem:[#allocation1 + $0x10] sm:$0xff pattern:$0x75316420]
        %954 = vrot.lane.b32.xlu0 %v951, 91
        %v955 = vpop.permute.xlu0 %954
        %956 = vrot.lane.b32.xlu0 %v952, 91
        %v957 = vpop.permute.xlu0 %956
        %958 = vrot.lane.b32.xlu0 %v953, 91
        %v959 = vpop.permute.xlu0 %958
        %vm960 = vcmask 744448
        %v961 = vsel %vm960, %v955, %v957
        %v962 = vsel %vm960, %v957, %v959
        %v964 = vsel %vm331, %v943, 0
        %v966 = vsel %vm335, %v961, 0
        %v968 = vsel %vm335, %v962, 0
        %v970 = vsel %vm335, %v959, 0
        %972 = vmatpush.msra.mxu0 0.0
        %973 = vmatpush.msra.mxu0 0.0
        %974 = vmatpush.msra.mxu0 0.0
        %975 = vmatpush.msra.mxu0 0.0
        %976 = vmatpush.msra.mxu0 0.0
        %977 = vmatpush.msra.mxu0 0.0
        %978 = vmatpush.msra.mxu0 0.0
        %979 = vmatpush.msra.mxu0 0.0
        %980 = vmatpush.msra.mxu0 0.0
        %981 = vmatpush.msra.mxu0 0.0
        %982 = vmatpush.msra.mxu0 0.0
        %983 = vmatpush.msra.mxu0 0.0
        %984 = vmatpush.msra.mxu0 0.0
        %985 = vmatpush.msra.mxu0 0.0
        %986 = vmatpush.msra.mxu0 0.0
        %987 = vmatpush.msra.mxu0 %v966
        %988 = vmatmul.f32.gmra.mxu0 %v964
        %v989 = vpop.f32.mrf.mxu0
        %v990 = vadd.f32 0.0, %v989
        %991 = vdwg.mxu0
        %992 = vmatpush.msra.mxu0 0.0
        %993 = vmatpush.msra.mxu0 0.0
        %994 = vmatpush.msra.mxu0 0.0
        %995 = vmatpush.msra.mxu0 0.0
        %996 = vmatpush.msra.mxu0 0.0
        %997 = vmatpush.msra.mxu0 0.0
        %998 = vmatpush.msra.mxu0 0.0
        %999 = vmatpush.msra.mxu0 0.0
        %1000 = vmatpush.msra.mxu0 0.0
        %1001 = vmatpush.msra.mxu0 0.0
        %1002 = vmatpush.msra.mxu0 0.0
        %1003 = vmatpush.msra.mxu0 0.0
        %1004 = vmatpush.msra.mxu0 0.0
        %1005 = vmatpush.msra.mxu0 0.0
        %1006 = vmatpush.msra.mxu0 0.0
        %1007 = vmatpush.msra.mxu0 %v968
        %1008 = vmatmul.f32.gmra.mxu0 %v964
        %v1009 = vpop.f32.mrf.mxu0
        %v1010 = vadd.f32 0.0, %v1009
        %1011 = vdwg.mxu0
        %1012 = vmatpush.msra.mxu0 0.0
        %1013 = vmatpush.msra.mxu0 0.0
        %1014 = vmatpush.msra.mxu0 0.0
        %1015 = vmatpush.msra.mxu0 0.0
        %1016 = vmatpush.msra.mxu0 0.0
        %1017 = vmatpush.msra.mxu0 0.0
        %1018 = vmatpush.msra.mxu0 0.0
        %1019 = vmatpush.msra.mxu0 0.0
        %1020 = vmatpush.msra.mxu0 0.0
        %1021 = vmatpush.msra.mxu0 0.0
        %1022 = vmatpush.msra.mxu0 0.0
        %1023 = vmatpush.msra.mxu0 0.0
        %1024 = vmatpush.msra.mxu0 0.0
        %1025 = vmatpush.msra.mxu0 0.0
        %1026 = vmatpush.msra.mxu0 0.0
        %1027 = vmatpush.msra.mxu0 %v970
        %1028 = vmatmul.f32.gmra.mxu0 %v964
        %v1029 = vpop.f32.mrf.mxu0
        %v1030 = vadd.f32 0.0, %v1029
        %1031 = vdwg.mxu0
        %v1032 = vadd.f32 %v939, %v990
        %v1033 = vadd.f32 %v940, %v1010
        %v1034 = vadd.f32 %v941, %v1030
        %s1035 = scalar_lea.vmem %s2, 64
        %v1036 = vld [vmem:[%s1035] sm:$0xff]
        %v1037 = vld [vmem:[%s303] sm:$0xff]
        %v1038 = vld [vmem:[%s303 + $0x8] sm:$0xf]
        %1041 = vst [vmem:[#allocation1] ss:$2 sm:$0xff] %v1037
        %s1042 = scalar_lea.vmem [#allocation1], 16
        %1043 = vst [vmem:[%s1042] ss:$2 sm:$0xff] %v1038
        %v1044 = vld.sshfl [vmem:[#allocation1] sm:$0xff pattern:$0x75316420]
        %v1045 = vld.sshfl [vmem:[#allocation1 + $0x8] sm:$0xff pattern:$0x75316420]
        %v1046 = vld.sshfl [vmem:[#allocation1 + $0x10] sm:$0xff pattern:$0x75316420]
        %1047 = vrot.lane.b32.xlu0 %v1044, 90
        %v1048 = vpop.permute.xlu0 %1047
        %1049 = vrot.lane.b32.xlu0 %v1045, 90
        %v1050 = vpop.permute.xlu0 %1049
        %1051 = vrot.lane.b32.xlu0 %v1046, 90
        %v1052 = vpop.permute.xlu0 %1051
        %vm1053 = vcmask 736256
        %v1054 = vsel %vm1053, %v1048, %v1050
        %v1055 = vsel %vm1053, %v1050, %v1052
        %v1057 = vsel %vm331, %v1036, 0
        %v1059 = vsel %vm335, %v1054, 0
        %v1061 = vsel %vm335, %v1055, 0
        %v1063 = vsel %vm335, %v1052, 0
        %1065 = vmatpush.msra.mxu0 0.0
        %1066 = vmatpush.msra.mxu0 0.0
        %1067 = vmatpush.msra.mxu0 0.0
        %1068 = vmatpush.msra.mxu0 0.0
        %1069 = vmatpush.msra.mxu0 0.0
        %1070 = vmatpush.msra.mxu0 0.0
        %1071 = vmatpush.msra.mxu0 0.0
        %1072 = vmatpush.msra.mxu0 0.0
        %1073 = vmatpush.msra.mxu0 0.0
        %1074 = vmatpush.msra.mxu0 0.0
        %1075 = vmatpush.msra.mxu0 0.0
        %1076 = vmatpush.msra.mxu0 0.0
        %1077 = vmatpush.msra.mxu0 0.0
        %1078 = vmatpush.msra.mxu0 0.0
        %1079 = vmatpush.msra.mxu0 0.0
        %1080 = vmatpush.msra.mxu0 %v1059
        %1081 = vmatmul.f32.gmra.mxu0 %v1057
        %v1082 = vpop.f32.mrf.mxu0
        %v1083 = vadd.f32 0.0, %v1082
        %1084 = vdwg.mxu0
        %1085 = vmatpush.msra.mxu0 0.0
        %1086 = vmatpush.msra.mxu0 0.0
        %1087 = vmatpush.msra.mxu0 0.0
        %1088 = vmatpush.msra.mxu0 0.0
        %1089 = vmatpush.msra.mxu0 0.0
        %1090 = vmatpush.msra.mxu0 0.0
        %1091 = vmatpush.msra.mxu0 0.0
        %1092 = vmatpush.msra.mxu0 0.0
        %1093 = vmatpush.msra.mxu0 0.0
        %1094 = vmatpush.msra.mxu0 0.0
        %1095 = vmatpush.msra.mxu0 0.0
        %1096 = vmatpush.msra.mxu0 0.0
        %1097 = vmatpush.msra.mxu0 0.0
        %1098 = vmatpush.msra.mxu0 0.0
        %1099 = vmatpush.msra.mxu0 0.0
        %1100 = vmatpush.msra.mxu0 %v1061
        %1101 = vmatmul.f32.gmra.mxu0 %v1057
        %v1102 = vpop.f32.mrf.mxu0
        %v1103 = vadd.f32 0.0, %v1102
        %1104 = vdwg.mxu0
        %1105 = vmatpush.msra.mxu0 0.0
        %1106 = vmatpush.msra.mxu0 0.0
        %1107 = vmatpush.msra.mxu0 0.0
        %1108 = vmatpush.msra.mxu0 0.0
        %1109 = vmatpush.msra.mxu0 0.0
        %1110 = vmatpush.msra.mxu0 0.0
        %1111 = vmatpush.msra.mxu0 0.0
        %1112 = vmatpush.msra.mxu0 0.0
        %1113 = vmatpush.msra.mxu0 0.0
        %1114 = vmatpush.msra.mxu0 0.0
        %1115 = vmatpush.msra.mxu0 0.0
        %1116 = vmatpush.msra.mxu0 0.0
        %1117 = vmatpush.msra.mxu0 0.0
        %1118 = vmatpush.msra.mxu0 0.0
        %1119 = vmatpush.msra.mxu0 0.0
        %1120 = vmatpush.msra.mxu0 %v1063
        %1121 = vmatmul.f32.gmra.mxu0 %v1057
        %v1122 = vpop.f32.mrf.mxu0
        %v1123 = vadd.f32 0.0, %v1122
        %1124 = vdwg.mxu0
        %v1125 = vadd.f32 %v1032, %v1083
        %v1126 = vadd.f32 %v1033, %v1103
        %v1127 = vadd.f32 %v1034, %v1123
        %v1128 = vsel %vm308, 1, 0
        %v1129 = vperm.slane %v1128, 0
        %v1130 = vperm.slane %v1128, 1
        %v1131 = vperm.slane %v1128, 2
        %vm1132 = vcmp.eq.s32.totalorder %v1129, 1
        %vm1133 = vcmp.eq.s32.totalorder %v1130, 1
        %vm1134 = vcmp.eq.s32.totalorder %v1131, 1
        %v1135 = vsel %vm1132, %v1125, 0.0
        %v1136 = vsel %vm1133, %v1126, 0.0
        %v1137 = vsel %vm1134, %v1127, 0.0
        %1141 = vrot.lane.b32.xlu0 %v1135, 19
        %v1142 = vpop.permute.xlu0 %1141
        %1143 = vrot.lane.b32.xlu0 %v1136, 19
        %v1144 = vpop.permute.xlu0 %1143
        %1145 = vrot.lane.b32.xlu0 %v1137, 19
        %v1146 = vpop.permute.xlu0 %1145
        %vm1147 = vcmask 154624
        %v1148 = vsel %vm1147, %v1142, %v1144
        %v1149 = vsel %vm1147, %v1144, %v1146
        %vm1153 = vcmask 1047704
        %1154 = vst.msk [vmem:[#allocation2] sm:$0xff] %vm1153, %v1142
        %1155 = vst [vmem:[#allocation2 + $0x8] sm:$0xff] %v1148
        %vm1156 = vcmask 859136
        %1157 = vst.msk [vmem:[#allocation2 + $0x10] sm:$0xff] %vm1156, %v1149
        %v1158 = vld [vmem:[%s3] sm:$0xff]
        %v1159 = vld [vmem:[#allocation2] sm:$0xff]
        %v1160 = vld [vmem:[#allocation2 + $0x8] sm:$0xff]
        %v1161 = vld [vmem:[#allocation2 + $0x10] sm:$0xff]
        %s1162 = scalar_lea.vmem %s3, 8
        %v1163 = vld [vmem:[%s1162] sm:$0xff]
        %1167 = vrot.lane.b32.xlu0 %v1159, 127
        %v1168 = vpop.permute.xlu0 %1167
        %1169 = vrot.lane.b32.xlu0 %v1160, 127
        %v1170 = vpop.permute.xlu0 %1169
        %1171 = vrot.lane.b32.xlu0 %v1161, 127
        %v1172 = vpop.permute.xlu0 %1171
        %v1173 = vsel %vm328, %v1168, %v1170
        %v1174 = vsel %vm328, %v1170, %v1172
        %vm1178 = vcmask 64512
        %v1180 = vsel %vm1178, %v1163, 0
        %1182 = vmatpush.msra.mxu0 0.0
        %1183 = vmatpush.msra.mxu0 0.0
        %1184 = vmatpush.msra.mxu0 0.0
        %1185 = vmatpush.msra.mxu0 0.0
        %1186 = vmatpush.msra.mxu0 0.0
        %1187 = vmatpush.msra.mxu0 0.0
        %1188 = vmatpush.msra.mxu0 0.0
        %1189 = vmatpush.msra.mxu0 0.0
        %1190 = vmatpush.msra.mxu0 0.0
        %1191 = vmatpush.msra.mxu0 0.0
        %1192 = vmatpush.msra.mxu0 0.0
        %1193 = vmatpush.msra.mxu0 0.0
        %1194 = vmatpush.msra.mxu0 0.0
        %1195 = vmatpush.msra.mxu0 0.0
        %1196 = vmatpush.msra.mxu0 0.0
        %1197 = vmatpush.msra.mxu0 %v1173
        %1198 = vmatmul.f32.gmra.mxu0 %v1180
        %v1199 = vpop.f32.mrf.mxu0
        %v1200 = vadd.f32 0.0, %v1199
        %1201 = vdwg.mxu0
        %1202 = vmatpush.msra.mxu0 0.0
        %1203 = vmatpush.msra.mxu0 0.0
        %1204 = vmatpush.msra.mxu0 0.0
        %1205 = vmatpush.msra.mxu0 0.0
        %1206 = vmatpush.msra.mxu0 0.0
        %1207 = vmatpush.msra.mxu0 0.0
        %1208 = vmatpush.msra.mxu0 0.0
        %1209 = vmatpush.msra.mxu0 0.0
        %1210 = vmatpush.msra.mxu0 0.0
        %1211 = vmatpush.msra.mxu0 0.0
        %1212 = vmatpush.msra.mxu0 0.0
        %1213 = vmatpush.msra.mxu0 0.0
        %1214 = vmatpush.msra.mxu0 0.0
        %1215 = vmatpush.msra.mxu0 0.0
        %1216 = vmatpush.msra.mxu0 0.0
        %1217 = vmatpush.msra.mxu0 %v1174
        %1218 = vmatmul.f32.gmra.mxu0 %v1180
        %v1219 = vpop.f32.mrf.mxu0
        %v1220 = vadd.f32 0.0, %v1219
        %1221 = vdwg.mxu0
        %1222 = vmatpush.msra.mxu0 0.0
        %1223 = vmatpush.msra.mxu0 0.0
        %1224 = vmatpush.msra.mxu0 0.0
        %1225 = vmatpush.msra.mxu0 0.0
        %1226 = vmatpush.msra.mxu0 0.0
        %1227 = vmatpush.msra.mxu0 0.0
        %1228 = vmatpush.msra.mxu0 0.0
        %1229 = vmatpush.msra.mxu0 0.0
        %1230 = vmatpush.msra.mxu0 0.0
        %1231 = vmatpush.msra.mxu0 0.0
        %1232 = vmatpush.msra.mxu0 0.0
        %1233 = vmatpush.msra.mxu0 0.0
        %1234 = vmatpush.msra.mxu0 0.0
        %1235 = vmatpush.msra.mxu0 0.0
        %1236 = vmatpush.msra.mxu0 0.0
        %1237 = vmatpush.msra.mxu0 %v1172
        %1238 = vmatmul.f32.gmra.mxu0 %v1180
        %v1239 = vpop.f32.mrf.mxu0
        %v1240 = vadd.f32 0.0, %v1239
        %1241 = vdwg.mxu0
        %v1243 = vsel %vm1178, %v1158, 0
        %1245 = vmatpush.msra.mxu0 0.0
        %1246 = vmatpush.msra.mxu0 0.0
        %1247 = vmatpush.msra.mxu0 0.0
        %1248 = vmatpush.msra.mxu0 0.0
        %1249 = vmatpush.msra.mxu0 0.0
        %1250 = vmatpush.msra.mxu0 0.0
        %1251 = vmatpush.msra.mxu0 0.0
        %1252 = vmatpush.msra.mxu0 0.0
        %1253 = vmatpush.msra.mxu0 0.0
        %1254 = vmatpush.msra.mxu0 0.0
        %1255 = vmatpush.msra.mxu0 0.0
        %1256 = vmatpush.msra.mxu0 0.0
        %1257 = vmatpush.msra.mxu0 0.0
        %1258 = vmatpush.msra.mxu0 0.0
        %1259 = vmatpush.msra.mxu0 0.0
        %1260 = vmatpush.msra.mxu0 %v1159
        %1261 = vmatmul.f32.gmra.mxu0 %v1243
        %v1262 = vpop.f32.mrf.mxu0
        %v1263 = vadd.f32 %v1200, %v1262
        %1264 = vdwg.mxu0
        %1265 = vmatpush.msra.mxu0 0.0
        %1266 = vmatpush.msra.mxu0 0.0
        %1267 = vmatpush.msra.mxu0 0.0
        %1268 = vmatpush.msra.mxu0 0.0
        %1269 = vmatpush.msra.mxu0 0.0
        %1270 = vmatpush.msra.mxu0 0.0
        %1271 = vmatpush.msra.mxu0 0.0
        %1272 = vmatpush.msra.mxu0 0.0
        %1273 = vmatpush.msra.mxu0 0.0
        %1274 = vmatpush.msra.mxu0 0.0
        %1275 = vmatpush.msra.mxu0 0.0
        %1276 = vmatpush.msra.mxu0 0.0
        %1277 = vmatpush.msra.mxu0 0.0
        %1278 = vmatpush.msra.mxu0 0.0
        %1279 = vmatpush.msra.mxu0 0.0
        %1280 = vmatpush.msra.mxu0 %v1160
        %1281 = vmatmul.f32.gmra.mxu0 %v1243
        %v1282 = vpop.f32.mrf.mxu0
        %v1283 = vadd.f32 %v1220, %v1282
        %1284 = vdwg.mxu0
        %1285 = vmatpush.msra.mxu0 0.0
        %1286 = vmatpush.msra.mxu0 0.0
        %1287 = vmatpush.msra.mxu0 0.0
        %1288 = vmatpush.msra.mxu0 0.0
        %1289 = vmatpush.msra.mxu0 0.0
        %1290 = vmatpush.msra.mxu0 0.0
        %1291 = vmatpush.msra.mxu0 0.0
        %1292 = vmatpush.msra.mxu0 0.0
        %1293 = vmatpush.msra.mxu0 0.0
        %1294 = vmatpush.msra.mxu0 0.0
        %1295 = vmatpush.msra.mxu0 0.0
        %1296 = vmatpush.msra.mxu0 0.0
        %1297 = vmatpush.msra.mxu0 0.0
        %1298 = vmatpush.msra.mxu0 0.0
        %1299 = vmatpush.msra.mxu0 0.0
        %1300 = vmatpush.msra.mxu0 %v1161
        %1301 = vmatmul.f32.gmra.mxu0 %v1243
        %v1302 = vpop.f32.mrf.mxu0
        %v1303 = vadd.f32 %v1240, %v1302
        %1304 = vdwg.mxu0
        %s1305 = scalar_lea.vmem %s3, 16
        %v1306 = vld [vmem:[%s1305] sm:$0xff]
        %1307 = vrot.lane.b32.xlu0 %v1159, 126
        %v1308 = vpop.permute.xlu0 %1307
        %1309 = vrot.lane.b32.xlu0 %v1160, 126
        %v1310 = vpop.permute.xlu0 %1309
        %1311 = vrot.lane.b32.xlu0 %v1161, 126
        %v1312 = vpop.permute.xlu0 %1311
        %v1313 = vsel %vm495, %v1308, %v1310
        %v1314 = vsel %vm495, %v1310, %v1312
        %v1319 = vsel %vm1178, %v1306, 0
        %1321 = vmatpush.msra.mxu0 0.0
        %1322 = vmatpush.msra.mxu0 0.0
        %1323 = vmatpush.msra.mxu0 0.0
        %1324 = vmatpush.msra.mxu0 0.0
        %1325 = vmatpush.msra.mxu0 0.0
        %1326 = vmatpush.msra.mxu0 0.0
        %1327 = vmatpush.msra.mxu0 0.0
        %1328 = vmatpush.msra.mxu0 0.0
        %1329 = vmatpush.msra.mxu0 0.0
        %1330 = vmatpush.msra.mxu0 0.0
        %1331 = vmatpush.msra.mxu0 0.0
        %1332 = vmatpush.msra.mxu0 0.0
        %1333 = vmatpush.msra.mxu0 0.0
        %1334 = vmatpush.msra.mxu0 0.0
        %1335 = vmatpush.msra.mxu0 0.0
        %1336 = vmatpush.msra.mxu0 %v1313
        %1337 = vmatmul.f32.gmra.mxu0 %v1319
        %v1338 = vpop.f32.mrf.mxu0
        %v1339 = vadd.f32 0.0, %v1338
        %1340 = vdwg.mxu0
        %1341 = vmatpush.msra.mxu0 0.0
        %1342 = vmatpush.msra.mxu0 0.0
        %1343 = vmatpush.msra.mxu0 0.0
        %1344 = vmatpush.msra.mxu0 0.0
        %1345 = vmatpush.msra.mxu0 0.0
        %1346 = vmatpush.msra.mxu0 0.0
        %1347 = vmatpush.msra.mxu0 0.0
        %1348 = vmatpush.msra.mxu0 0.0
        %1349 = vmatpush.msra.mxu0 0.0
        %1350 = vmatpush.msra.mxu0 0.0
        %1351 = vmatpush.msra.mxu0 0.0
        %1352 = vmatpush.msra.mxu0 0.0
        %1353 = vmatpush.msra.mxu0 0.0
        %1354 = vmatpush.msra.mxu0 0.0
        %1355 = vmatpush.msra.mxu0 0.0
        %1356 = vmatpush.msra.mxu0 %v1314
        %1357 = vmatmul.f32.gmra.mxu0 %v1319
        %v1358 = vpop.f32.mrf.mxu0
        %v1359 = vadd.f32 0.0, %v1358
        %1360 = vdwg.mxu0
        %1361 = vmatpush.msra.mxu0 0.0
        %1362 = vmatpush.msra.mxu0 0.0
        %1363 = vmatpush.msra.mxu0 0.0
        %1364 = vmatpush.msra.mxu0 0.0
        %1365 = vmatpush.msra.mxu0 0.0
        %1366 = vmatpush.msra.mxu0 0.0
        %1367 = vmatpush.msra.mxu0 0.0
        %1368 = vmatpush.msra.mxu0 0.0
        %1369 = vmatpush.msra.mxu0 0.0
        %1370 = vmatpush.msra.mxu0 0.0
        %1371 = vmatpush.msra.mxu0 0.0
        %1372 = vmatpush.msra.mxu0 0.0
        %1373 = vmatpush.msra.mxu0 0.0
        %1374 = vmatpush.msra.mxu0 0.0
        %1375 = vmatpush.msra.mxu0 0.0
        %1376 = vmatpush.msra.mxu0 %v1312
        %1377 = vmatmul.f32.gmra.mxu0 %v1319
        %v1378 = vpop.f32.mrf.mxu0
        %v1379 = vadd.f32 0.0, %v1378
        %1380 = vdwg.mxu0
        %v1381 = vadd.f32 %v1263, %v1339
        %v1382 = vadd.f32 %v1283, %v1359
        %v1383 = vadd.f32 %v1303, %v1379
        %s1384 = scalar_lea.vmem %s3, 24
        %v1385 = vld [vmem:[%s1384] sm:$0xff]
        %1386 = vrot.lane.b32.xlu0 %v1159, 110
        %v1387 = vpop.permute.xlu0 %1386
        %1388 = vrot.lane.b32.xlu0 %v1160, 110
        %v1389 = vpop.permute.xlu0 %1388
        %1390 = vrot.lane.b32.xlu0 %v1161, 110
        %v1391 = vpop.permute.xlu0 %1390
        %v1392 = vsel %vm588, %v1387, %v1389
        %v1393 = vsel %vm588, %v1389, %v1391
        %v1398 = vsel %vm1178, %v1385, 0
        %1400 = vmatpush.msra.mxu0 0.0
        %1401 = vmatpush.msra.mxu0 0.0
        %1402 = vmatpush.msra.mxu0 0.0
        %1403 = vmatpush.msra.mxu0 0.0
        %1404 = vmatpush.msra.mxu0 0.0
        %1405 = vmatpush.msra.mxu0 0.0
        %1406 = vmatpush.msra.mxu0 0.0
        %1407 = vmatpush.msra.mxu0 0.0
        %1408 = vmatpush.msra.mxu0 0.0
        %1409 = vmatpush.msra.mxu0 0.0
        %1410 = vmatpush.msra.mxu0 0.0
        %1411 = vmatpush.msra.mxu0 0.0
        %1412 = vmatpush.msra.mxu0 0.0
        %1413 = vmatpush.msra.mxu0 0.0
        %1414 = vmatpush.msra.mxu0 0.0
        %1415 = vmatpush.msra.mxu0 %v1392
        %1416 = vmatmul.f32.gmra.mxu0 %v1398
        %v1417 = vpop.f32.mrf.mxu0
        %v1418 = vadd.f32 0.0, %v1417
        %1419 = vdwg.mxu0
        %1420 = vmatpush.msra.mxu0 0.0
        %1421 = vmatpush.msra.mxu0 0.0
        %1422 = vmatpush.msra.mxu0 0.0
        %1423 = vmatpush.msra.mxu0 0.0
        %1424 = vmatpush.msra.mxu0 0.0
        %1425 = vmatpush.msra.mxu0 0.0
        %1426 = vmatpush.msra.mxu0 0.0
        %1427 = vmatpush.msra.mxu0 0.0
        %1428 = vmatpush.msra.mxu0 0.0
        %1429 = vmatpush.msra.mxu0 0.0
        %1430 = vmatpush.msra.mxu0 0.0
        %1431 = vmatpush.msra.mxu0 0.0
        %1432 = vmatpush.msra.mxu0 0.0
        %1433 = vmatpush.msra.mxu0 0.0
        %1434 = vmatpush.msra.mxu0 0.0
        %1435 = vmatpush.msra.mxu0 %v1393
        %1436 = vmatmul.f32.gmra.mxu0 %v1398
        %v1437 = vpop.f32.mrf.mxu0
        %v1438 = vadd.f32 0.0, %v1437
        %1439 = vdwg.mxu0
        %1440 = vmatpush.msra.mxu0 0.0
        %1441 = vmatpush.msra.mxu0 0.0
        %1442 = vmatpush.msra.mxu0 0.0
        %1443 = vmatpush.msra.mxu0 0.0
        %1444 = vmatpush.msra.mxu0 0.0
        %1445 = vmatpush.msra.mxu0 0.0
        %1446 = vmatpush.msra.mxu0 0.0
        %1447 = vmatpush.msra.mxu0 0.0
        %1448 = vmatpush.msra.mxu0 0.0
        %1449 = vmatpush.msra.mxu0 0.0
        %1450 = vmatpush.msra.mxu0 0.0
        %1451 = vmatpush.msra.mxu0 0.0
        %1452 = vmatpush.msra.mxu0 0.0
        %1453 = vmatpush.msra.mxu0 0.0
        %1454 = vmatpush.msra.mxu0 0.0
        %1455 = vmatpush.msra.mxu0 %v1391
        %1456 = vmatmul.f32.gmra.mxu0 %v1398
        %v1457 = vpop.f32.mrf.mxu0
        %v1458 = vadd.f32 0.0, %v1457
        %1459 = vdwg.mxu0
        %v1460 = vadd.f32 %v1381, %v1418
        %v1461 = vadd.f32 %v1382, %v1438
        %v1462 = vadd.f32 %v1383, %v1458
        %s1463 = scalar_lea.vmem %s3, 32
        %v1464 = vld [vmem:[%s1463] sm:$0xff]
        %1465 = vrot.lane.b32.xlu0 %v1159, 109
        %v1466 = vpop.permute.xlu0 %1465
        %1467 = vrot.lane.b32.xlu0 %v1160, 109
        %v1468 = vpop.permute.xlu0 %1467
        %1469 = vrot.lane.b32.xlu0 %v1161, 109
        %v1470 = vpop.permute.xlu0 %1469
        %v1471 = vsel %vm681, %v1466, %v1468
        %v1472 = vsel %vm681, %v1468, %v1470
        %v1477 = vsel %vm1178, %v1464, 0
        %1479 = vmatpush.msra.mxu0 0.0
        %1480 = vmatpush.msra.mxu0 0.0
        %1481 = vmatpush.msra.mxu0 0.0
        %1482 = vmatpush.msra.mxu0 0.0
        %1483 = vmatpush.msra.mxu0 0.0
        %1484 = vmatpush.msra.mxu0 0.0
        %1485 = vmatpush.msra.mxu0 0.0
        %1486 = vmatpush.msra.mxu0 0.0
        %1487 = vmatpush.msra.mxu0 0.0
        %1488 = vmatpush.msra.mxu0 0.0
        %1489 = vmatpush.msra.mxu0 0.0
        %1490 = vmatpush.msra.mxu0 0.0
        %1491 = vmatpush.msra.mxu0 0.0
        %1492 = vmatpush.msra.mxu0 0.0
        %1493 = vmatpush.msra.mxu0 0.0
        %1494 = vmatpush.msra.mxu0 %v1471
        %1495 = vmatmul.f32.gmra.mxu0 %v1477
        %v1496 = vpop.f32.mrf.mxu0
        %v1497 = vadd.f32 0.0, %v1496
        %1498 = vdwg.mxu0
        %1499 = vmatpush.msra.mxu0 0.0
        %1500 = vmatpush.msra.mxu0 0.0
        %1501 = vmatpush.msra.mxu0 0.0
        %1502 = vmatpush.msra.mxu0 0.0
        %1503 = vmatpush.msra.mxu0 0.0
        %1504 = vmatpush.msra.mxu0 0.0
        %1505 = vmatpush.msra.mxu0 0.0
        %1506 = vmatpush.msra.mxu0 0.0
        %1507 = vmatpush.msra.mxu0 0.0
        %1508 = vmatpush.msra.mxu0 0.0
        %1509 = vmatpush.msra.mxu0 0.0
        %1510 = vmatpush.msra.mxu0 0.0
        %1511 = vmatpush.msra.mxu0 0.0
        %1512 = vmatpush.msra.mxu0 0.0
        %1513 = vmatpush.msra.mxu0 0.0
        %1514 = vmatpush.msra.mxu0 %v1472
        %1515 = vmatmul.f32.gmra.mxu0 %v1477
        %v1516 = vpop.f32.mrf.mxu0
        %v1517 = vadd.f32 0.0, %v1516
        %1518 = vdwg.mxu0
        %1519 = vmatpush.msra.mxu0 0.0
        %1520 = vmatpush.msra.mxu0 0.0
        %1521 = vmatpush.msra.mxu0 0.0
        %1522 = vmatpush.msra.mxu0 0.0
        %1523 = vmatpush.msra.mxu0 0.0
        %1524 = vmatpush.msra.mxu0 0.0
        %1525 = vmatpush.msra.mxu0 0.0
        %1526 = vmatpush.msra.mxu0 0.0
        %1527 = vmatpush.msra.mxu0 0.0
        %1528 = vmatpush.msra.mxu0 0.0
        %1529 = vmatpush.msra.mxu0 0.0
        %1530 = vmatpush.msra.mxu0 0.0
        %1531 = vmatpush.msra.mxu0 0.0
        %1532 = vmatpush.msra.mxu0 0.0
        %1533 = vmatpush.msra.mxu0 0.0
        %1534 = vmatpush.msra.mxu0 %v1470
        %1535 = vmatmul.f32.gmra.mxu0 %v1477
        %v1536 = vpop.f32.mrf.mxu0
        %v1537 = vadd.f32 0.0, %v1536
        %1538 = vdwg.mxu0
        %v1539 = vadd.f32 %v1460, %v1497
        %v1540 = vadd.f32 %v1461, %v1517
        %v1541 = vadd.f32 %v1462, %v1537
        %s1542 = scalar_lea.vmem %s3, 40
        %v1543 = vld [vmem:[%s1542] sm:$0xff]
        %1544 = vrot.lane.b32.xlu0 %v1159, 108
        %v1545 = vpop.permute.xlu0 %1544
        %1546 = vrot.lane.b32.xlu0 %v1160, 108
        %v1547 = vpop.permute.xlu0 %1546
        %1548 = vrot.lane.b32.xlu0 %v1161, 108
        %v1549 = vpop.permute.xlu0 %1548
        %v1550 = vsel %vm774, %v1545, %v1547
        %v1551 = vsel %vm774, %v1547, %v1549
        %v1556 = vsel %vm1178, %v1543, 0
        %1558 = vmatpush.msra.mxu0 0.0
        %1559 = vmatpush.msra.mxu0 0.0
        %1560 = vmatpush.msra.mxu0 0.0
        %1561 = vmatpush.msra.mxu0 0.0
        %1562 = vmatpush.msra.mxu0 0.0
        %1563 = vmatpush.msra.mxu0 0.0
        %1564 = vmatpush.msra.mxu0 0.0
        %1565 = vmatpush.msra.mxu0 0.0
        %1566 = vmatpush.msra.mxu0 0.0
        %1567 = vmatpush.msra.mxu0 0.0
        %1568 = vmatpush.msra.mxu0 0.0
        %1569 = vmatpush.msra.mxu0 0.0
        %1570 = vmatpush.msra.mxu0 0.0
        %1571 = vmatpush.msra.mxu0 0.0
        %1572 = vmatpush.msra.mxu0 0.0
        %1573 = vmatpush.msra.mxu0 %v1550
        %1574 = vmatmul.f32.gmra.mxu0 %v1556
        %v1575 = vpop.f32.mrf.mxu0
        %v1576 = vadd.f32 0.0, %v1575
        %1577 = vdwg.mxu0
        %1578 = vmatpush.msra.mxu0 0.0
        %1579 = vmatpush.msra.mxu0 0.0
        %1580 = vmatpush.msra.mxu0 0.0
        %1581 = vmatpush.msra.mxu0 0.0
        %1582 = vmatpush.msra.mxu0 0.0
        %1583 = vmatpush.msra.mxu0 0.0
        %1584 = vmatpush.msra.mxu0 0.0
        %1585 = vmatpush.msra.mxu0 0.0
        %1586 = vmatpush.msra.mxu0 0.0
        %1587 = vmatpush.msra.mxu0 0.0
        %1588 = vmatpush.msra.mxu0 0.0
        %1589 = vmatpush.msra.mxu0 0.0
        %1590 = vmatpush.msra.mxu0 0.0
        %1591 = vmatpush.msra.mxu0 0.0
        %1592 = vmatpush.msra.mxu0 0.0
        %1593 = vmatpush.msra.mxu0 %v1551
        %1594 = vmatmul.f32.gmra.mxu0 %v1556
        %v1595 = vpop.f32.mrf.mxu0
        %v1596 = vadd.f32 0.0, %v1595
        %1597 = vdwg.mxu0
        %1598 = vmatpush.msra.mxu0 0.0
        %1599 = vmatpush.msra.mxu0 0.0
        %1600 = vmatpush.msra.mxu0 0.0
        %1601 = vmatpush.msra.mxu0 0.0
        %1602 = vmatpush.msra.mxu0 0.0
        %1603 = vmatpush.msra.mxu0 0.0
        %1604 = vmatpush.msra.mxu0 0.0
        %1605 = vmatpush.msra.mxu0 0.0
        %1606 = vmatpush.msra.mxu0 0.0
        %1607 = vmatpush.msra.mxu0 0.0
        %1608 = vmatpush.msra.mxu0 0.0
        %1609 = vmatpush.msra.mxu0 0.0
        %1610 = vmatpush.msra.mxu0 0.0
        %1611 = vmatpush.msra.mxu0 0.0
        %1612 = vmatpush.msra.mxu0 0.0
        %1613 = vmatpush.msra.mxu0 %v1549
        %1614 = vmatmul.f32.gmra.mxu0 %v1556
        %v1615 = vpop.f32.mrf.mxu0
        %v1616 = vadd.f32 0.0, %v1615
        %1617 = vdwg.mxu0
        %v1618 = vadd.f32 %v1539, %v1576
        %v1619 = vadd.f32 %v1540, %v1596
        %v1620 = vadd.f32 %v1541, %v1616
        %s1621 = scalar_lea.vmem %s3, 48
        %v1622 = vld [vmem:[%s1621] sm:$0xff]
        %1623 = vrot.lane.b32.xlu0 %v1159, 92
        %v1624 = vpop.permute.xlu0 %1623
        %1625 = vrot.lane.b32.xlu0 %v1160, 92
        %v1626 = vpop.permute.xlu0 %1625
        %1627 = vrot.lane.b32.xlu0 %v1161, 92
        %v1628 = vpop.permute.xlu0 %1627
        %v1629 = vsel %vm867, %v1624, %v1626
        %v1630 = vsel %vm867, %v1626, %v1628
        %v1635 = vsel %vm1178, %v1622, 0
        %1637 = vmatpush.msra.mxu0 0.0
        %1638 = vmatpush.msra.mxu0 0.0
        %1639 = vmatpush.msra.mxu0 0.0
        %1640 = vmatpush.msra.mxu0 0.0
        %1641 = vmatpush.msra.mxu0 0.0
        %1642 = vmatpush.msra.mxu0 0.0
        %1643 = vmatpush.msra.mxu0 0.0
        %1644 = vmatpush.msra.mxu0 0.0
        %1645 = vmatpush.msra.mxu0 0.0
        %1646 = vmatpush.msra.mxu0 0.0
        %1647 = vmatpush.msra.mxu0 0.0
        %1648 = vmatpush.msra.mxu0 0.0
        %1649 = vmatpush.msra.mxu0 0.0
        %1650 = vmatpush.msra.mxu0 0.0
        %1651 = vmatpush.msra.mxu0 0.0
        %1652 = vmatpush.msra.mxu0 %v1629
        %1653 = vmatmul.f32.gmra.mxu0 %v1635
        %v1654 = vpop.f32.mrf.mxu0
        %v1655 = vadd.f32 0.0, %v1654
        %1656 = vdwg.mxu0
        %1657 = vmatpush.msra.mxu0 0.0
        %1658 = vmatpush.msra.mxu0 0.0
        %1659 = vmatpush.msra.mxu0 0.0
        %1660 = vmatpush.msra.mxu0 0.0
        %1661 = vmatpush.msra.mxu0 0.0
        %1662 = vmatpush.msra.mxu0 0.0
        %1663 = vmatpush.msra.mxu0 0.0
        %1664 = vmatpush.msra.mxu0 0.0
        %1665 = vmatpush.msra.mxu0 0.0
        %1666 = vmatpush.msra.mxu0 0.0
        %1667 = vmatpush.msra.mxu0 0.0
        %1668 = vmatpush.msra.mxu0 0.0
        %1669 = vmatpush.msra.mxu0 0.0
        %1670 = vmatpush.msra.mxu0 0.0
        %1671 = vmatpush.msra.mxu0 0.0
        %1672 = vmatpush.msra.mxu0 %v1630
        %1673 = vmatmul.f32.gmra.mxu0 %v1635
        %v1674 = vpop.f32.mrf.mxu0
        %v1675 = vadd.f32 0.0, %v1674
        %1676 = vdwg.mxu0
        %1677 = vmatpush.msra.mxu0 0.0
        %1678 = vmatpush.msra.mxu0 0.0
        %1679 = vmatpush.msra.mxu0 0.0
        %1680 = vmatpush.msra.mxu0 0.0
        %1681 = vmatpush.msra.mxu0 0.0
        %1682 = vmatpush.msra.mxu0 0.0
        %1683 = vmatpush.msra.mxu0 0.0
        %1684 = vmatpush.msra.mxu0 0.0
        %1685 = vmatpush.msra.mxu0 0.0
        %1686 = vmatpush.msra.mxu0 0.0
        %1687 = vmatpush.msra.mxu0 0.0
        %1688 = vmatpush.msra.mxu0 0.0
        %1689 = vmatpush.msra.mxu0 0.0
        %1690 = vmatpush.msra.mxu0 0.0
        %1691 = vmatpush.msra.mxu0 0.0
        %1692 = vmatpush.msra.mxu0 %v1628
        %1693 = vmatmul.f32.gmra.mxu0 %v1635
        %v1694 = vpop.f32.mrf.mxu0
        %v1695 = vadd.f32 0.0, %v1694
        %1696 = vdwg.mxu0
        %v1697 = vadd.f32 %v1618, %v1655
        %v1698 = vadd.f32 %v1619, %v1675
        %v1699 = vadd.f32 %v1620, %v1695
        %s1700 = scalar_lea.vmem %s3, 56
        %v1701 = vld [vmem:[%s1700] sm:$0xff]
        %1702 = vrot.lane.b32.xlu0 %v1159, 91
        %v1703 = vpop.permute.xlu0 %1702
        %1704 = vrot.lane.b32.xlu0 %v1160, 91
        %v1705 = vpop.permute.xlu0 %1704
        %1706 = vrot.lane.b32.xlu0 %v1161, 91
        %v1707 = vpop.permute.xlu0 %1706
        %v1708 = vsel %vm960, %v1703, %v1705
        %v1709 = vsel %vm960, %v1705, %v1707
        %v1714 = vsel %vm1178, %v1701, 0
        %1716 = vmatpush.msra.mxu0 0.0
        %1717 = vmatpush.msra.mxu0 0.0
        %1718 = vmatpush.msra.mxu0 0.0
        %1719 = vmatpush.msra.mxu0 0.0
        %1720 = vmatpush.msra.mxu0 0.0
        %1721 = vmatpush.msra.mxu0 0.0
        %1722 = vmatpush.msra.mxu0 0.0
        %1723 = vmatpush.msra.mxu0 0.0
        %1724 = vmatpush.msra.mxu0 0.0
        %1725 = vmatpush.msra.mxu0 0.0
        %1726 = vmatpush.msra.mxu0 0.0
        %1727 = vmatpush.msra.mxu0 0.0
        %1728 = vmatpush.msra.mxu0 0.0
        %1729 = vmatpush.msra.mxu0 0.0
        %1730 = vmatpush.msra.mxu0 0.0
        %1731 = vmatpush.msra.mxu0 %v1708
        %1732 = vmatmul.f32.gmra.mxu0 %v1714
        %v1733 = vpop.f32.mrf.mxu0
        %v1734 = vadd.f32 0.0, %v1733
        %1735 = vdwg.mxu0
        %1736 = vmatpush.msra.mxu0 0.0
        %1737 = vmatpush.msra.mxu0 0.0
        %1738 = vmatpush.msra.mxu0 0.0
        %1739 = vmatpush.msra.mxu0 0.0
        %1740 = vmatpush.msra.mxu0 0.0
        %1741 = vmatpush.msra.mxu0 0.0
        %1742 = vmatpush.msra.mxu0 0.0
        %1743 = vmatpush.msra.mxu0 0.0
        %1744 = vmatpush.msra.mxu0 0.0
        %1745 = vmatpush.msra.mxu0 0.0
        %1746 = vmatpush.msra.mxu0 0.0
        %1747 = vmatpush.msra.mxu0 0.0
        %1748 = vmatpush.msra.mxu0 0.0
        %1749 = vmatpush.msra.mxu0 0.0
        %1750 = vmatpush.msra.mxu0 0.0
        %1751 = vmatpush.msra.mxu0 %v1709
        %1752 = vmatmul.f32.gmra.mxu0 %v1714
        %v1753 = vpop.f32.mrf.mxu0
        %v1754 = vadd.f32 0.0, %v1753
        %1755 = vdwg.mxu0
        %1756 = vmatpush.msra.mxu0 0.0
        %1757 = vmatpush.msra.mxu0 0.0
        %1758 = vmatpush.msra.mxu0 0.0
        %1759 = vmatpush.msra.mxu0 0.0
        %1760 = vmatpush.msra.mxu0 0.0
        %1761 = vmatpush.msra.mxu0 0.0
        %1762 = vmatpush.msra.mxu0 0.0
        %1763 = vmatpush.msra.mxu0 0.0
        %1764 = vmatpush.msra.mxu0 0.0
        %1765 = vmatpush.msra.mxu0 0.0
        %1766 = vmatpush.msra.mxu0 0.0
        %1767 = vmatpush.msra.mxu0 0.0
        %1768 = vmatpush.msra.mxu0 0.0
        %1769 = vmatpush.msra.mxu0 0.0
        %1770 = vmatpush.msra.mxu0 0.0
        %1771 = vmatpush.msra.mxu0 %v1707
        %1772 = vmatmul.f32.gmra.mxu0 %v1714
        %v1773 = vpop.f32.mrf.mxu0
        %v1774 = vadd.f32 0.0, %v1773
        %1775 = vdwg.mxu0
        %v1776 = vadd.f32 %v1697, %v1734
        %v1777 = vadd.f32 %v1698, %v1754
        %v1778 = vadd.f32 %v1699, %v1774
        %s1779 = scalar_lea.vmem %s3, 64
        %v1780 = vld [vmem:[%s1779] sm:$0xff]
        %1781 = vrot.lane.b32.xlu0 %v1159, 90
        %v1782 = vpop.permute.xlu0 %1781
        %1783 = vrot.lane.b32.xlu0 %v1160, 90
        %v1784 = vpop.permute.xlu0 %1783
        %1785 = vrot.lane.b32.xlu0 %v1161, 90
        %v1786 = vpop.permute.xlu0 %1785
        %v1787 = vsel %vm1053, %v1782, %v1784
        %v1788 = vsel %vm1053, %v1784, %v1786
        %v1793 = vsel %vm1178, %v1780, 0
        %1795 = vmatpush.msra.mxu0 0.0
        %1796 = vmatpush.msra.mxu0 0.0
        %1797 = vmatpush.msra.mxu0 0.0
        %1798 = vmatpush.msra.mxu0 0.0
        %1799 = vmatpush.msra.mxu0 0.0
        %1800 = vmatpush.msra.mxu0 0.0
        %1801 = vmatpush.msra.mxu0 0.0
        %1802 = vmatpush.msra.mxu0 0.0
        %1803 = vmatpush.msra.mxu0 0.0
        %1804 = vmatpush.msra.mxu0 0.0
        %1805 = vmatpush.msra.mxu0 0.0
        %1806 = vmatpush.msra.mxu0 0.0
        %1807 = vmatpush.msra.mxu0 0.0
        %1808 = vmatpush.msra.mxu0 0.0
        %1809 = vmatpush.msra.mxu0 0.0
        %1810 = vmatpush.msra.mxu0 %v1787
        %1811 = vmatmul.f32.gmra.mxu0 %v1793
        %v1812 = vpop.f32.mrf.mxu0
        %v1813 = vadd.f32 0.0, %v1812
        %1814 = vdwg.mxu0
        %1815 = vmatpush.msra.mxu0 0.0
        %1816 = vmatpush.msra.mxu0 0.0
        %1817 = vmatpush.msra.mxu0 0.0
        %1818 = vmatpush.msra.mxu0 0.0
        %1819 = vmatpush.msra.mxu0 0.0
        %1820 = vmatpush.msra.mxu0 0.0
        %1821 = vmatpush.msra.mxu0 0.0
        %1822 = vmatpush.msra.mxu0 0.0
        %1823 = vmatpush.msra.mxu0 0.0
        %1824 = vmatpush.msra.mxu0 0.0
        %1825 = vmatpush.msra.mxu0 0.0
        %1826 = vmatpush.msra.mxu0 0.0
        %1827 = vmatpush.msra.mxu0 0.0
        %1828 = vmatpush.msra.mxu0 0.0
        %1829 = vmatpush.msra.mxu0 0.0
        %1830 = vmatpush.msra.mxu0 %v1788
        %1831 = vmatmul.f32.gmra.mxu0 %v1793
        %v1832 = vpop.f32.mrf.mxu0
        %v1833 = vadd.f32 0.0, %v1832
        %1834 = vdwg.mxu0
        %1835 = vmatpush.msra.mxu0 0.0
        %1836 = vmatpush.msra.mxu0 0.0
        %1837 = vmatpush.msra.mxu0 0.0
        %1838 = vmatpush.msra.mxu0 0.0
        %1839 = vmatpush.msra.mxu0 0.0
        %1840 = vmatpush.msra.mxu0 0.0
        %1841 = vmatpush.msra.mxu0 0.0
        %1842 = vmatpush.msra.mxu0 0.0
        %1843 = vmatpush.msra.mxu0 0.0
        %1844 = vmatpush.msra.mxu0 0.0
        %1845 = vmatpush.msra.mxu0 0.0
        %1846 = vmatpush.msra.mxu0 0.0
        %1847 = vmatpush.msra.mxu0 0.0
        %1848 = vmatpush.msra.mxu0 0.0
        %1849 = vmatpush.msra.mxu0 0.0
        %1850 = vmatpush.msra.mxu0 %v1786
        %1851 = vmatmul.f32.gmra.mxu0 %v1793
        %v1852 = vpop.f32.mrf.mxu0
        %v1853 = vadd.f32 0.0, %v1852
        %1854 = vdwg.mxu0
        %v1855 = vadd.f32 %v1776, %v1813
        %v1856 = vadd.f32 %v1777, %v1833
        %v1857 = vadd.f32 %v1778, %v1853
        %v1858 = vsel %vm1132, %v1855, 0.0
        %v1859 = vsel %vm1133, %v1856, 0.0
        %v1860 = vsel %vm1134, %v1857, 0.0
        %1864 = vrot.lane.b32.xlu0 %v1858, 19
        %v1865 = vpop.permute.xlu0 %1864
        %1866 = vrot.lane.b32.xlu0 %v1859, 19
        %v1867 = vpop.permute.xlu0 %1866
        %1868 = vrot.lane.b32.xlu0 %v1860, 19
        %v1869 = vpop.permute.xlu0 %1868
        %v1870 = vsel %vm1147, %v1865, %v1867
        %v1871 = vsel %vm1147, %v1867, %v1869
        %1875 = vst.msk [vmem:[#allocation2] sm:$0xff] %vm1153, %v1865
        %1876 = vst [vmem:[#allocation2 + $0x8] sm:$0xff] %v1870
        %1877 = vst.msk [vmem:[#allocation2 + $0x10] sm:$0xff] %vm1156, %v1871
        %v1878 = vld [vmem:[%s4] sm:$0xff]
        %v1879 = vld [vmem:[#allocation2] sm:$0xff]
        %v1880 = vld [vmem:[#allocation2 + $0x8] sm:$0xff]
        %v1881 = vld [vmem:[#allocation2 + $0x10] sm:$0xff]
        %s1882 = scalar_lea.vmem %s4, 8
        %v1883 = vld [vmem:[%s1882] sm:$0xff]
        %1887 = vrot.lane.b32.xlu0 %v1879, 127
        %v1888 = vpop.permute.xlu0 %1887
        %1889 = vrot.lane.b32.xlu0 %v1880, 127
        %v1890 = vpop.permute.xlu0 %1889
        %1891 = vrot.lane.b32.xlu0 %v1881, 127
        %v1892 = vpop.permute.xlu0 %1891
        %v1893 = vsel %vm328, %v1888, %v1890
        %v1894 = vsel %vm328, %v1890, %v1892
        %v1899 = vsel %vm1178, %v1883, 0
        %1901 = vmatpush.msra.mxu0 0.0
        %1902 = vmatpush.msra.mxu0 0.0
        %1903 = vmatpush.msra.mxu0 0.0
        %1904 = vmatpush.msra.mxu0 0.0
        %1905 = vmatpush.msra.mxu0 0.0
        %1906 = vmatpush.msra.mxu0 0.0
        %1907 = vmatpush.msra.mxu0 0.0
        %1908 = vmatpush.msra.mxu0 0.0
        %1909 = vmatpush.msra.mxu0 0.0
        %1910 = vmatpush.msra.mxu0 0.0
        %1911 = vmatpush.msra.mxu0 0.0
        %1912 = vmatpush.msra.mxu0 0.0
        %1913 = vmatpush.msra.mxu0 0.0
        %1914 = vmatpush.msra.mxu0 0.0
        %1915 = vmatpush.msra.mxu0 0.0
        %1916 = vmatpush.msra.mxu0 %v1893
        %1917 = vmatmul.f32.gmra.mxu0 %v1899
        %v1918 = vpop.f32.mrf.mxu0
        %v1919 = vadd.f32 0.0, %v1918
        %1920 = vdwg.mxu0
        %1921 = vmatpush.msra.mxu0 0.0
        %1922 = vmatpush.msra.mxu0 0.0
        %1923 = vmatpush.msra.mxu0 0.0
        %1924 = vmatpush.msra.mxu0 0.0
        %1925 = vmatpush.msra.mxu0 0.0
        %1926 = vmatpush.msra.mxu0 0.0
        %1927 = vmatpush.msra.mxu0 0.0
        %1928 = vmatpush.msra.mxu0 0.0
        %1929 = vmatpush.msra.mxu0 0.0
        %1930 = vmatpush.msra.mxu0 0.0
        %1931 = vmatpush.msra.mxu0 0.0
        %1932 = vmatpush.msra.mxu0 0.0
        %1933 = vmatpush.msra.mxu0 0.0
        %1934 = vmatpush.msra.mxu0 0.0
        %1935 = vmatpush.msra.mxu0 0.0
        %1936 = vmatpush.msra.mxu0 %v1894
        %1937 = vmatmul.f32.gmra.mxu0 %v1899
        %v1938 = vpop.f32.mrf.mxu0
        %v1939 = vadd.f32 0.0, %v1938
        %1940 = vdwg.mxu0
        %1941 = vmatpush.msra.mxu0 0.0
        %1942 = vmatpush.msra.mxu0 0.0
        %1943 = vmatpush.msra.mxu0 0.0
        %1944 = vmatpush.msra.mxu0 0.0
        %1945 = vmatpush.msra.mxu0 0.0
        %1946 = vmatpush.msra.mxu0 0.0
        %1947 = vmatpush.msra.mxu0 0.0
        %1948 = vmatpush.msra.mxu0 0.0
        %1949 = vmatpush.msra.mxu0 0.0
        %1950 = vmatpush.msra.mxu0 0.0
        %1951 = vmatpush.msra.mxu0 0.0
        %1952 = vmatpush.msra.mxu0 0.0
        %1953 = vmatpush.msra.mxu0 0.0
        %1954 = vmatpush.msra.mxu0 0.0
        %1955 = vmatpush.msra.mxu0 0.0
        %1956 = vmatpush.msra.mxu0 %v1892
        %1957 = vmatmul.f32.gmra.mxu0 %v1899
        %v1958 = vpop.f32.mrf.mxu0
        %v1959 = vadd.f32 0.0, %v1958
        %1960 = vdwg.mxu0
        %v1962 = vsel %vm1178, %v1878, 0
        %1964 = vmatpush.msra.mxu0 0.0
        %1965 = vmatpush.msra.mxu0 0.0
        %1966 = vmatpush.msra.mxu0 0.0
        %1967 = vmatpush.msra.mxu0 0.0
        %1968 = vmatpush.msra.mxu0 0.0
        %1969 = vmatpush.msra.mxu0 0.0
        %1970 = vmatpush.msra.mxu0 0.0
        %1971 = vmatpush.msra.mxu0 0.0
        %1972 = vmatpush.msra.mxu0 0.0
        %1973 = vmatpush.msra.mxu0 0.0
        %1974 = vmatpush.msra.mxu0 0.0
        %1975 = vmatpush.msra.mxu0 0.0
        %1976 = vmatpush.msra.mxu0 0.0
        %1977 = vmatpush.msra.mxu0 0.0
        %1978 = vmatpush.msra.mxu0 0.0
        %1979 = vmatpush.msra.mxu0 %v1879
        %1980 = vmatmul.f32.gmra.mxu0 %v1962
        %v1981 = vpop.f32.mrf.mxu0
        %v1982 = vadd.f32 %v1919, %v1981
        %1983 = vdwg.mxu0
        %1984 = vmatpush.msra.mxu0 0.0
        %1985 = vmatpush.msra.mxu0 0.0
        %1986 = vmatpush.msra.mxu0 0.0
        %1987 = vmatpush.msra.mxu0 0.0
        %1988 = vmatpush.msra.mxu0 0.0
        %1989 = vmatpush.msra.mxu0 0.0
        %1990 = vmatpush.msra.mxu0 0.0
        %1991 = vmatpush.msra.mxu0 0.0
        %1992 = vmatpush.msra.mxu0 0.0
        %1993 = vmatpush.msra.mxu0 0.0
        %1994 = vmatpush.msra.mxu0 0.0
        %1995 = vmatpush.msra.mxu0 0.0
        %1996 = vmatpush.msra.mxu0 0.0
        %1997 = vmatpush.msra.mxu0 0.0
        %1998 = vmatpush.msra.mxu0 0.0
        %1999 = vmatpush.msra.mxu0 %v1880
        %2000 = vmatmul.f32.gmra.mxu0 %v1962
        %v2001 = vpop.f32.mrf.mxu0
        %v2002 = vadd.f32 %v1939, %v2001
        %2003 = vdwg.mxu0
        %2004 = vmatpush.msra.mxu0 0.0
        %2005 = vmatpush.msra.mxu0 0.0
        %2006 = vmatpush.msra.mxu0 0.0
        %2007 = vmatpush.msra.mxu0 0.0
        %2008 = vmatpush.msra.mxu0 0.0
        %2009 = vmatpush.msra.mxu0 0.0
        %2010 = vmatpush.msra.mxu0 0.0
        %2011 = vmatpush.msra.mxu0 0.0
        %2012 = vmatpush.msra.mxu0 0.0
        %2013 = vmatpush.msra.mxu0 0.0
        %2014 = vmatpush.msra.mxu0 0.0
        %2015 = vmatpush.msra.mxu0 0.0
        %2016 = vmatpush.msra.mxu0 0.0
        %2017 = vmatpush.msra.mxu0 0.0
        %2018 = vmatpush.msra.mxu0 0.0
        %2019 = vmatpush.msra.mxu0 %v1881
        %2020 = vmatmul.f32.gmra.mxu0 %v1962
        %v2021 = vpop.f32.mrf.mxu0
        %v2022 = vadd.f32 %v1959, %v2021
        %2023 = vdwg.mxu0
        %s2024 = scalar_lea.vmem %s4, 16
        %v2025 = vld [vmem:[%s2024] sm:$0xff]
        %2026 = vrot.lane.b32.xlu0 %v1879, 126
        %v2027 = vpop.permute.xlu0 %2026
        %2028 = vrot.lane.b32.xlu0 %v1880, 126
        %v2029 = vpop.permute.xlu0 %2028
        %2030 = vrot.lane.b32.xlu0 %v1881, 126
        %v2031 = vpop.permute.xlu0 %2030
        %v2032 = vsel %vm495, %v2027, %v2029
        %v2033 = vsel %vm495, %v2029, %v2031
        %v2038 = vsel %vm1178, %v2025, 0
        %2040 = vmatpush.msra.mxu0 0.0
        %2041 = vmatpush.msra.mxu0 0.0
        %2042 = vmatpush.msra.mxu0 0.0
        %2043 = vmatpush.msra.mxu0 0.0
        %2044 = vmatpush.msra.mxu0 0.0
        %2045 = vmatpush.msra.mxu0 0.0
        %2046 = vmatpush.msra.mxu0 0.0
        %2047 = vmatpush.msra.mxu0 0.0
        %2048 = vmatpush.msra.mxu0 0.0
        %2049 = vmatpush.msra.mxu0 0.0
        %2050 = vmatpush.msra.mxu0 0.0
        %2051 = vmatpush.msra.mxu0 0.0
        %2052 = vmatpush.msra.mxu0 0.0
        %2053 = vmatpush.msra.mxu0 0.0
        %2054 = vmatpush.msra.mxu0 0.0
        %2055 = vmatpush.msra.mxu0 %v2032
        %2056 = vmatmul.f32.gmra.mxu0 %v2038
        %v2057 = vpop.f32.mrf.mxu0
        %v2058 = vadd.f32 0.0, %v2057
        %2059 = vdwg.mxu0
        %2060 = vmatpush.msra.mxu0 0.0
        %2061 = vmatpush.msra.mxu0 0.0
        %2062 = vmatpush.msra.mxu0 0.0
        %2063 = vmatpush.msra.mxu0 0.0
        %2064 = vmatpush.msra.mxu0 0.0
        %2065 = vmatpush.msra.mxu0 0.0
        %2066 = vmatpush.msra.mxu0 0.0
        %2067 = vmatpush.msra.mxu0 0.0
        %2068 = vmatpush.msra.mxu0 0.0
        %2069 = vmatpush.msra.mxu0 0.0
        %2070 = vmatpush.msra.mxu0 0.0
        %2071 = vmatpush.msra.mxu0 0.0
        %2072 = vmatpush.msra.mxu0 0.0
        %2073 = vmatpush.msra.mxu0 0.0
        %2074 = vmatpush.msra.mxu0 0.0
        %2075 = vmatpush.msra.mxu0 %v2033
        %2076 = vmatmul.f32.gmra.mxu0 %v2038
        %v2077 = vpop.f32.mrf.mxu0
        %v2078 = vadd.f32 0.0, %v2077
        %2079 = vdwg.mxu0
        %2080 = vmatpush.msra.mxu0 0.0
        %2081 = vmatpush.msra.mxu0 0.0
        %2082 = vmatpush.msra.mxu0 0.0
        %2083 = vmatpush.msra.mxu0 0.0
        %2084 = vmatpush.msra.mxu0 0.0
        %2085 = vmatpush.msra.mxu0 0.0
        %2086 = vmatpush.msra.mxu0 0.0
        %2087 = vmatpush.msra.mxu0 0.0
        %2088 = vmatpush.msra.mxu0 0.0
        %2089 = vmatpush.msra.mxu0 0.0
        %2090 = vmatpush.msra.mxu0 0.0
        %2091 = vmatpush.msra.mxu0 0.0
        %2092 = vmatpush.msra.mxu0 0.0
        %2093 = vmatpush.msra.mxu0 0.0
        %2094 = vmatpush.msra.mxu0 0.0
        %2095 = vmatpush.msra.mxu0 %v2031
        %2096 = vmatmul.f32.gmra.mxu0 %v2038
        %v2097 = vpop.f32.mrf.mxu0
        %v2098 = vadd.f32 0.0, %v2097
        %2099 = vdwg.mxu0
        %v2100 = vadd.f32 %v1982, %v2058
        %v2101 = vadd.f32 %v2002, %v2078
        %v2102 = vadd.f32 %v2022, %v2098
        %s2103 = scalar_lea.vmem %s4, 24
        %v2104 = vld [vmem:[%s2103] sm:$0xff]
        %2105 = vrot.lane.b32.xlu0 %v1879, 110
        %v2106 = vpop.permute.xlu0 %2105
        %2107 = vrot.lane.b32.xlu0 %v1880, 110
        %v2108 = vpop.permute.xlu0 %2107
        %2109 = vrot.lane.b32.xlu0 %v1881, 110
        %v2110 = vpop.permute.xlu0 %2109
        %v2111 = vsel %vm588, %v2106, %v2108
        %v2112 = vsel %vm588, %v2108, %v2110
        %v2117 = vsel %vm1178, %v2104, 0
        %2119 = vmatpush.msra.mxu0 0.0
        %2120 = vmatpush.msra.mxu0 0.0
        %2121 = vmatpush.msra.mxu0 0.0
        %2122 = vmatpush.msra.mxu0 0.0
        %2123 = vmatpush.msra.mxu0 0.0
        %2124 = vmatpush.msra.mxu0 0.0
        %2125 = vmatpush.msra.mxu0 0.0
        %2126 = vmatpush.msra.mxu0 0.0
        %2127 = vmatpush.msra.mxu0 0.0
        %2128 = vmatpush.msra.mxu0 0.0
        %2129 = vmatpush.msra.mxu0 0.0
        %2130 = vmatpush.msra.mxu0 0.0
        %2131 = vmatpush.msra.mxu0 0.0
        %2132 = vmatpush.msra.mxu0 0.0
        %2133 = vmatpush.msra.mxu0 0.0
        %2134 = vmatpush.msra.mxu0 %v2111
        %2135 = vmatmul.f32.gmra.mxu0 %v2117
        %v2136 = vpop.f32.mrf.mxu0
        %v2137 = vadd.f32 0.0, %v2136
        %2138 = vdwg.mxu0
        %2139 = vmatpush.msra.mxu0 0.0
        %2140 = vmatpush.msra.mxu0 0.0
        %2141 = vmatpush.msra.mxu0 0.0
        %2142 = vmatpush.msra.mxu0 0.0
        %2143 = vmatpush.msra.mxu0 0.0
        %2144 = vmatpush.msra.mxu0 0.0
        %2145 = vmatpush.msra.mxu0 0.0
        %2146 = vmatpush.msra.mxu0 0.0
        %2147 = vmatpush.msra.mxu0 0.0
        %2148 = vmatpush.msra.mxu0 0.0
        %2149 = vmatpush.msra.mxu0 0.0
        %2150 = vmatpush.msra.mxu0 0.0
        %2151 = vmatpush.msra.mxu0 0.0
        %2152 = vmatpush.msra.mxu0 0.0
        %2153 = vmatpush.msra.mxu0 0.0
        %2154 = vmatpush.msra.mxu0 %v2112
        %2155 = vmatmul.f32.gmra.mxu0 %v2117
        %v2156 = vpop.f32.mrf.mxu0
        %v2157 = vadd.f32 0.0, %v2156
        %2158 = vdwg.mxu0
        %2159 = vmatpush.msra.mxu0 0.0
        %2160 = vmatpush.msra.mxu0 0.0
        %2161 = vmatpush.msra.mxu0 0.0
        %2162 = vmatpush.msra.mxu0 0.0
        %2163 = vmatpush.msra.mxu0 0.0
        %2164 = vmatpush.msra.mxu0 0.0
        %2165 = vmatpush.msra.mxu0 0.0
        %2166 = vmatpush.msra.mxu0 0.0
        %2167 = vmatpush.msra.mxu0 0.0
        %2168 = vmatpush.msra.mxu0 0.0
        %2169 = vmatpush.msra.mxu0 0.0
        %2170 = vmatpush.msra.mxu0 0.0
        %2171 = vmatpush.msra.mxu0 0.0
        %2172 = vmatpush.msra.mxu0 0.0
        %2173 = vmatpush.msra.mxu0 0.0
        %2174 = vmatpush.msra.mxu0 %v2110
        %2175 = vmatmul.f32.gmra.mxu0 %v2117
        %v2176 = vpop.f32.mrf.mxu0
        %v2177 = vadd.f32 0.0, %v2176
        %2178 = vdwg.mxu0
        %v2179 = vadd.f32 %v2100, %v2137
        %v2180 = vadd.f32 %v2101, %v2157
        %v2181 = vadd.f32 %v2102, %v2177
        %s2182 = scalar_lea.vmem %s4, 32
        %v2183 = vld [vmem:[%s2182] sm:$0xff]
        %2184 = vrot.lane.b32.xlu0 %v1879, 109
        %v2185 = vpop.permute.xlu0 %2184
        %2186 = vrot.lane.b32.xlu0 %v1880, 109
        %v2187 = vpop.permute.xlu0 %2186
        %2188 = vrot.lane.b32.xlu0 %v1881, 109
        %v2189 = vpop.permute.xlu0 %2188
        %v2190 = vsel %vm681, %v2185, %v2187
        %v2191 = vsel %vm681, %v2187, %v2189
        %v2196 = vsel %vm1178, %v2183, 0
        %2198 = vmatpush.msra.mxu0 0.0
        %2199 = vmatpush.msra.mxu0 0.0
        %2200 = vmatpush.msra.mxu0 0.0
        %2201 = vmatpush.msra.mxu0 0.0
        %2202 = vmatpush.msra.mxu0 0.0
        %2203 = vmatpush.msra.mxu0 0.0
        %2204 = vmatpush.msra.mxu0 0.0
        %2205 = vmatpush.msra.mxu0 0.0
        %2206 = vmatpush.msra.mxu0 0.0
        %2207 = vmatpush.msra.mxu0 0.0
        %2208 = vmatpush.msra.mxu0 0.0
        %2209 = vmatpush.msra.mxu0 0.0
        %2210 = vmatpush.msra.mxu0 0.0
        %2211 = vmatpush.msra.mxu0 0.0
        %2212 = vmatpush.msra.mxu0 0.0
        %2213 = vmatpush.msra.mxu0 %v2190
        %2214 = vmatmul.f32.gmra.mxu0 %v2196
        %v2215 = vpop.f32.mrf.mxu0
        %v2216 = vadd.f32 0.0, %v2215
        %2217 = vdwg.mxu0
        %2218 = vmatpush.msra.mxu0 0.0
        %2219 = vmatpush.msra.mxu0 0.0
        %2220 = vmatpush.msra.mxu0 0.0
        %2221 = vmatpush.msra.mxu0 0.0
        %2222 = vmatpush.msra.mxu0 0.0
        %2223 = vmatpush.msra.mxu0 0.0
        %2224 = vmatpush.msra.mxu0 0.0
        %2225 = vmatpush.msra.mxu0 0.0
        %2226 = vmatpush.msra.mxu0 0.0
        %2227 = vmatpush.msra.mxu0 0.0
        %2228 = vmatpush.msra.mxu0 0.0
        %2229 = vmatpush.msra.mxu0 0.0
        %2230 = vmatpush.msra.mxu0 0.0
        %2231 = vmatpush.msra.mxu0 0.0
        %2232 = vmatpush.msra.mxu0 0.0
        %2233 = vmatpush.msra.mxu0 %v2191
        %2234 = vmatmul.f32.gmra.mxu0 %v2196
        %v2235 = vpop.f32.mrf.mxu0
        %v2236 = vadd.f32 0.0, %v2235
        %2237 = vdwg.mxu0
        %2238 = vmatpush.msra.mxu0 0.0
        %2239 = vmatpush.msra.mxu0 0.0
        %2240 = vmatpush.msra.mxu0 0.0
        %2241 = vmatpush.msra.mxu0 0.0
        %2242 = vmatpush.msra.mxu0 0.0
        %2243 = vmatpush.msra.mxu0 0.0
        %2244 = vmatpush.msra.mxu0 0.0
        %2245 = vmatpush.msra.mxu0 0.0
        %2246 = vmatpush.msra.mxu0 0.0
        %2247 = vmatpush.msra.mxu0 0.0
        %2248 = vmatpush.msra.mxu0 0.0
        %2249 = vmatpush.msra.mxu0 0.0
        %2250 = vmatpush.msra.mxu0 0.0
        %2251 = vmatpush.msra.mxu0 0.0
        %2252 = vmatpush.msra.mxu0 0.0
        %2253 = vmatpush.msra.mxu0 %v2189
        %2254 = vmatmul.f32.gmra.mxu0 %v2196
        %v2255 = vpop.f32.mrf.mxu0
        %v2256 = vadd.f32 0.0, %v2255
        %2257 = vdwg.mxu0
        %v2258 = vadd.f32 %v2179, %v2216
        %v2259 = vadd.f32 %v2180, %v2236
        %v2260 = vadd.f32 %v2181, %v2256
        %s2261 = scalar_lea.vmem %s4, 40
        %v2262 = vld [vmem:[%s2261] sm:$0xff]
        %2263 = vrot.lane.b32.xlu0 %v1879, 108
        %v2264 = vpop.permute.xlu0 %2263
        %2265 = vrot.lane.b32.xlu0 %v1880, 108
        %v2266 = vpop.permute.xlu0 %2265
        %2267 = vrot.lane.b32.xlu0 %v1881, 108
        %v2268 = vpop.permute.xlu0 %2267
        %v2269 = vsel %vm774, %v2264, %v2266
        %v2270 = vsel %vm774, %v2266, %v2268
        %v2275 = vsel %vm1178, %v2262, 0
        %2277 = vmatpush.msra.mxu0 0.0
        %2278 = vmatpush.msra.mxu0 0.0
        %2279 = vmatpush.msra.mxu0 0.0
        %2280 = vmatpush.msra.mxu0 0.0
        %2281 = vmatpush.msra.mxu0 0.0
        %2282 = vmatpush.msra.mxu0 0.0
        %2283 = vmatpush.msra.mxu0 0.0
        %2284 = vmatpush.msra.mxu0 0.0
        %2285 = vmatpush.msra.mxu0 0.0
        %2286 = vmatpush.msra.mxu0 0.0
        %2287 = vmatpush.msra.mxu0 0.0
        %2288 = vmatpush.msra.mxu0 0.0
        %2289 = vmatpush.msra.mxu0 0.0
        %2290 = vmatpush.msra.mxu0 0.0
        %2291 = vmatpush.msra.mxu0 0.0
        %2292 = vmatpush.msra.mxu0 %v2269
        %2293 = vmatmul.f32.gmra.mxu0 %v2275
        %v2294 = vpop.f32.mrf.mxu0
        %v2295 = vadd.f32 0.0, %v2294
        %2296 = vdwg.mxu0
        %2297 = vmatpush.msra.mxu0 0.0
        %2298 = vmatpush.msra.mxu0 0.0
        %2299 = vmatpush.msra.mxu0 0.0
        %2300 = vmatpush.msra.mxu0 0.0
        %2301 = vmatpush.msra.mxu0 0.0
        %2302 = vmatpush.msra.mxu0 0.0
        %2303 = vmatpush.msra.mxu0 0.0
        %2304 = vmatpush.msra.mxu0 0.0
        %2305 = vmatpush.msra.mxu0 0.0
        %2306 = vmatpush.msra.mxu0 0.0
        %2307 = vmatpush.msra.mxu0 0.0
        %2308 = vmatpush.msra.mxu0 0.0
        %2309 = vmatpush.msra.mxu0 0.0
        %2310 = vmatpush.msra.mxu0 0.0
        %2311 = vmatpush.msra.mxu0 0.0
        %2312 = vmatpush.msra.mxu0 %v2270
        %2313 = vmatmul.f32.gmra.mxu0 %v2275
        %v2314 = vpop.f32.mrf.mxu0
        %v2315 = vadd.f32 0.0, %v2314
        %2316 = vdwg.mxu0
        %2317 = vmatpush.msra.mxu0 0.0
        %2318 = vmatpush.msra.mxu0 0.0
        %2319 = vmatpush.msra.mxu0 0.0
        %2320 = vmatpush.msra.mxu0 0.0
        %2321 = vmatpush.msra.mxu0 0.0
        %2322 = vmatpush.msra.mxu0 0.0
        %2323 = vmatpush.msra.mxu0 0.0
        %2324 = vmatpush.msra.mxu0 0.0
        %2325 = vmatpush.msra.mxu0 0.0
        %2326 = vmatpush.msra.mxu0 0.0
        %2327 = vmatpush.msra.mxu0 0.0
        %2328 = vmatpush.msra.mxu0 0.0
        %2329 = vmatpush.msra.mxu0 0.0
        %2330 = vmatpush.msra.mxu0 0.0
        %2331 = vmatpush.msra.mxu0 0.0
        %2332 = vmatpush.msra.mxu0 %v2268
        %2333 = vmatmul.f32.gmra.mxu0 %v2275
        %v2334 = vpop.f32.mrf.mxu0
        %v2335 = vadd.f32 0.0, %v2334
        %2336 = vdwg.mxu0
        %v2337 = vadd.f32 %v2258, %v2295
        %v2338 = vadd.f32 %v2259, %v2315
        %v2339 = vadd.f32 %v2260, %v2335
        %s2340 = scalar_lea.vmem %s4, 48
        %v2341 = vld [vmem:[%s2340] sm:$0xff]
        %2342 = vrot.lane.b32.xlu0 %v1879, 92
        %v2343 = vpop.permute.xlu0 %2342
        %2344 = vrot.lane.b32.xlu0 %v1880, 92
        %v2345 = vpop.permute.xlu0 %2344
        %2346 = vrot.lane.b32.xlu0 %v1881, 92
        %v2347 = vpop.permute.xlu0 %2346
        %v2348 = vsel %vm867, %v2343, %v2345
        %v2349 = vsel %vm867, %v2345, %v2347
        %v2354 = vsel %vm1178, %v2341, 0
        %2356 = vmatpush.msra.mxu0 0.0
        %2357 = vmatpush.msra.mxu0 0.0
        %2358 = vmatpush.msra.mxu0 0.0
        %2359 = vmatpush.msra.mxu0 0.0
        %2360 = vmatpush.msra.mxu0 0.0
        %2361 = vmatpush.msra.mxu0 0.0
        %2362 = vmatpush.msra.mxu0 0.0
        %2363 = vmatpush.msra.mxu0 0.0
        %2364 = vmatpush.msra.mxu0 0.0
        %2365 = vmatpush.msra.mxu0 0.0
        %2366 = vmatpush.msra.mxu0 0.0
        %2367 = vmatpush.msra.mxu0 0.0
        %2368 = vmatpush.msra.mxu0 0.0
        %2369 = vmatpush.msra.mxu0 0.0
        %2370 = vmatpush.msra.mxu0 0.0
        %2371 = vmatpush.msra.mxu0 %v2348
        %2372 = vmatmul.f32.gmra.mxu0 %v2354
        %v2373 = vpop.f32.mrf.mxu0
        %v2374 = vadd.f32 0.0, %v2373
        %2375 = vdwg.mxu0
        %2376 = vmatpush.msra.mxu0 0.0
        %2377 = vmatpush.msra.mxu0 0.0
        %2378 = vmatpush.msra.mxu0 0.0
        %2379 = vmatpush.msra.mxu0 0.0
        %2380 = vmatpush.msra.mxu0 0.0
        %2381 = vmatpush.msra.mxu0 0.0
        %2382 = vmatpush.msra.mxu0 0.0
        %2383 = vmatpush.msra.mxu0 0.0
        %2384 = vmatpush.msra.mxu0 0.0
        %2385 = vmatpush.msra.mxu0 0.0
        %2386 = vmatpush.msra.mxu0 0.0
        %2387 = vmatpush.msra.mxu0 0.0
        %2388 = vmatpush.msra.mxu0 0.0
        %2389 = vmatpush.msra.mxu0 0.0
        %2390 = vmatpush.msra.mxu0 0.0
        %2391 = vmatpush.msra.mxu0 %v2349
        %2392 = vmatmul.f32.gmra.mxu0 %v2354
        %v2393 = vpop.f32.mrf.mxu0
        %v2394 = vadd.f32 0.0, %v2393
        %2395 = vdwg.mxu0
        %2396 = vmatpush.msra.mxu0 0.0
        %2397 = vmatpush.msra.mxu0 0.0
        %2398 = vmatpush.msra.mxu0 0.0
        %2399 = vmatpush.msra.mxu0 0.0
        %2400 = vmatpush.msra.mxu0 0.0
        %2401 = vmatpush.msra.mxu0 0.0
        %2402 = vmatpush.msra.mxu0 0.0
        %2403 = vmatpush.msra.mxu0 0.0
        %2404 = vmatpush.msra.mxu0 0.0
        %2405 = vmatpush.msra.mxu0 0.0
        %2406 = vmatpush.msra.mxu0 0.0
        %2407 = vmatpush.msra.mxu0 0.0
        %2408 = vmatpush.msra.mxu0 0.0
        %2409 = vmatpush.msra.mxu0 0.0
        %2410 = vmatpush.msra.mxu0 0.0
        %2411 = vmatpush.msra.mxu0 %v2347
        %2412 = vmatmul.f32.gmra.mxu0 %v2354
        %v2413 = vpop.f32.mrf.mxu0
        %v2414 = vadd.f32 0.0, %v2413
        %2415 = vdwg.mxu0
        %v2416 = vadd.f32 %v2337, %v2374
        %v2417 = vadd.f32 %v2338, %v2394
        %v2418 = vadd.f32 %v2339, %v2414
        %s2419 = scalar_lea.vmem %s4, 56
        %v2420 = vld [vmem:[%s2419] sm:$0xff]
        %2421 = vrot.lane.b32.xlu0 %v1879, 91
        %v2422 = vpop.permute.xlu0 %2421
        %2423 = vrot.lane.b32.xlu0 %v1880, 91
        %v2424 = vpop.permute.xlu0 %2423
        %2425 = vrot.lane.b32.xlu0 %v1881, 91
        %v2426 = vpop.permute.xlu0 %2425
        %v2427 = vsel %vm960, %v2422, %v2424
        %v2428 = vsel %vm960, %v2424, %v2426
        %v2433 = vsel %vm1178, %v2420, 0
        %2435 = vmatpush.msra.mxu0 0.0
        %2436 = vmatpush.msra.mxu0 0.0
        %2437 = vmatpush.msra.mxu0 0.0
        %2438 = vmatpush.msra.mxu0 0.0
        %2439 = vmatpush.msra.mxu0 0.0
        %2440 = vmatpush.msra.mxu0 0.0
        %2441 = vmatpush.msra.mxu0 0.0
        %2442 = vmatpush.msra.mxu0 0.0
        %2443 = vmatpush.msra.mxu0 0.0
        %2444 = vmatpush.msra.mxu0 0.0
        %2445 = vmatpush.msra.mxu0 0.0
        %2446 = vmatpush.msra.mxu0 0.0
        %2447 = vmatpush.msra.mxu0 0.0
        %2448 = vmatpush.msra.mxu0 0.0
        %2449 = vmatpush.msra.mxu0 0.0
        %2450 = vmatpush.msra.mxu0 %v2427
        %2451 = vmatmul.f32.gmra.mxu0 %v2433
        %v2452 = vpop.f32.mrf.mxu0
        %v2453 = vadd.f32 0.0, %v2452
        %2454 = vdwg.mxu0
        %2455 = vmatpush.msra.mxu0 0.0
        %2456 = vmatpush.msra.mxu0 0.0
        %2457 = vmatpush.msra.mxu0 0.0
        %2458 = vmatpush.msra.mxu0 0.0
        %2459 = vmatpush.msra.mxu0 0.0
        %2460 = vmatpush.msra.mxu0 0.0
        %2461 = vmatpush.msra.mxu0 0.0
        %2462 = vmatpush.msra.mxu0 0.0
        %2463 = vmatpush.msra.mxu0 0.0
        %2464 = vmatpush.msra.mxu0 0.0
        %2465 = vmatpush.msra.mxu0 0.0
        %2466 = vmatpush.msra.mxu0 0.0
        %2467 = vmatpush.msra.mxu0 0.0
        %2468 = vmatpush.msra.mxu0 0.0
        %2469 = vmatpush.msra.mxu0 0.0
        %2470 = vmatpush.msra.mxu0 %v2428
        %2471 = vmatmul.f32.gmra.mxu0 %v2433
        %v2472 = vpop.f32.mrf.mxu0
        %v2473 = vadd.f32 0.0, %v2472
        %2474 = vdwg.mxu0
        %2475 = vmatpush.msra.mxu0 0.0
        %2476 = vmatpush.msra.mxu0 0.0
        %2477 = vmatpush.msra.mxu0 0.0
        %2478 = vmatpush.msra.mxu0 0.0
        %2479 = vmatpush.msra.mxu0 0.0
        %2480 = vmatpush.msra.mxu0 0.0
        %2481 = vmatpush.msra.mxu0 0.0
        %2482 = vmatpush.msra.mxu0 0.0
        %2483 = vmatpush.msra.mxu0 0.0
        %2484 = vmatpush.msra.mxu0 0.0
        %2485 = vmatpush.msra.mxu0 0.0
        %2486 = vmatpush.msra.mxu0 0.0
        %2487 = vmatpush.msra.mxu0 0.0
        %2488 = vmatpush.msra.mxu0 0.0
        %2489 = vmatpush.msra.mxu0 0.0
        %2490 = vmatpush.msra.mxu0 %v2426
        %2491 = vmatmul.f32.gmra.mxu0 %v2433
        %v2492 = vpop.f32.mrf.mxu0
        %v2493 = vadd.f32 0.0, %v2492
        %2494 = vdwg.mxu0
        %v2495 = vadd.f32 %v2416, %v2453
        %v2496 = vadd.f32 %v2417, %v2473
        %v2497 = vadd.f32 %v2418, %v2493
        %s2498 = scalar_lea.vmem %s4, 64
        %v2499 = vld [vmem:[%s2498] sm:$0xff]
        %2500 = vrot.lane.b32.xlu0 %v1879, 90
        %v2501 = vpop.permute.xlu0 %2500
        %2502 = vrot.lane.b32.xlu0 %v1880, 90
        %v2503 = vpop.permute.xlu0 %2502
        %2504 = vrot.lane.b32.xlu0 %v1881, 90
        %v2505 = vpop.permute.xlu0 %2504
        %v2506 = vsel %vm1053, %v2501, %v2503
        %v2507 = vsel %vm1053, %v2503, %v2505
        %v2512 = vsel %vm1178, %v2499, 0
        %2514 = vmatpush.msra.mxu0 0.0
        %2515 = vmatpush.msra.mxu0 0.0
        %2516 = vmatpush.msra.mxu0 0.0
        %2517 = vmatpush.msra.mxu0 0.0
        %2518 = vmatpush.msra.mxu0 0.0
        %2519 = vmatpush.msra.mxu0 0.0
        %2520 = vmatpush.msra.mxu0 0.0
        %2521 = vmatpush.msra.mxu0 0.0
        %2522 = vmatpush.msra.mxu0 0.0
        %2523 = vmatpush.msra.mxu0 0.0
        %2524 = vmatpush.msra.mxu0 0.0
        %2525 = vmatpush.msra.mxu0 0.0
        %2526 = vmatpush.msra.mxu0 0.0
        %2527 = vmatpush.msra.mxu0 0.0
        %2528 = vmatpush.msra.mxu0 0.0
        %2529 = vmatpush.msra.mxu0 %v2506
        %2530 = vmatmul.f32.gmra.mxu0 %v2512
        %v2531 = vpop.f32.mrf.mxu0
        %v2532 = vadd.f32 0.0, %v2531
        %2533 = vdwg.mxu0
        %2534 = vmatpush.msra.mxu0 0.0
        %2535 = vmatpush.msra.mxu0 0.0
        %2536 = vmatpush.msra.mxu0 0.0
        %2537 = vmatpush.msra.mxu0 0.0
        %2538 = vmatpush.msra.mxu0 0.0
        %2539 = vmatpush.msra.mxu0 0.0
        %2540 = vmatpush.msra.mxu0 0.0
        %2541 = vmatpush.msra.mxu0 0.0
        %2542 = vmatpush.msra.mxu0 0.0
        %2543 = vmatpush.msra.mxu0 0.0
        %2544 = vmatpush.msra.mxu0 0.0
        %2545 = vmatpush.msra.mxu0 0.0
        %2546 = vmatpush.msra.mxu0 0.0
        %2547 = vmatpush.msra.mxu0 0.0
        %2548 = vmatpush.msra.mxu0 0.0
        %2549 = vmatpush.msra.mxu0 %v2507
        %2550 = vmatmul.f32.gmra.mxu0 %v2512
        %v2551 = vpop.f32.mrf.mxu0
        %v2552 = vadd.f32 0.0, %v2551
        %2553 = vdwg.mxu0
        %2554 = vmatpush.msra.mxu0 0.0
        %2555 = vmatpush.msra.mxu0 0.0
        %2556 = vmatpush.msra.mxu0 0.0
        %2557 = vmatpush.msra.mxu0 0.0
        %2558 = vmatpush.msra.mxu0 0.0
        %2559 = vmatpush.msra.mxu0 0.0
        %2560 = vmatpush.msra.mxu0 0.0
        %2561 = vmatpush.msra.mxu0 0.0
        %2562 = vmatpush.msra.mxu0 0.0
        %2563 = vmatpush.msra.mxu0 0.0
        %2564 = vmatpush.msra.mxu0 0.0
        %2565 = vmatpush.msra.mxu0 0.0
        %2566 = vmatpush.msra.mxu0 0.0
        %2567 = vmatpush.msra.mxu0 0.0
        %2568 = vmatpush.msra.mxu0 0.0
        %2569 = vmatpush.msra.mxu0 %v2505
        %2570 = vmatmul.f32.gmra.mxu0 %v2512
        %v2571 = vpop.f32.mrf.mxu0
        %v2572 = vadd.f32 0.0, %v2571
        %2573 = vdwg.mxu0
        %v2574 = vadd.f32 %v2495, %v2532
        %v2575 = vadd.f32 %v2496, %v2552
        %v2576 = vadd.f32 %v2497, %v2572
        %v2577 = vsel %vm1132, %v2574, 0.0
        %v2578 = vsel %vm1133, %v2575, 0.0
        %v2579 = vsel %vm1134, %v2576, 0.0
        %2583 = vrot.lane.b32.xlu0 %v2577, 19
        %v2584 = vpop.permute.xlu0 %2583
        %2585 = vrot.lane.b32.xlu0 %v2578, 19
        %v2586 = vpop.permute.xlu0 %2585
        %2587 = vrot.lane.b32.xlu0 %v2579, 19
        %v2588 = vpop.permute.xlu0 %2587
        %v2589 = vsel %vm1147, %v2584, %v2586
        %v2590 = vsel %vm1147, %v2586, %v2588
        %2594 = vst.msk [vmem:[#allocation2] sm:$0xff] %vm1153, %v2584
        %2595 = vst [vmem:[#allocation2 + $0x8] sm:$0xff] %v2589
        %2596 = vst.msk [vmem:[#allocation2 + $0x10] sm:$0xff] %vm1156, %v2590
        %v2597 = vld [vmem:[%s5] sm:$0xff]
        %v2598 = vld [vmem:[#allocation2] sm:$0xff]
        %v2599 = vld [vmem:[#allocation2 + $0x8] sm:$0xff]
        %v2600 = vld [vmem:[#allocation2 + $0x10] sm:$0xff]
        %s2601 = scalar_lea.vmem %s5, 8
        %v2602 = vld [vmem:[%s2601] sm:$0xff]
        %2606 = vrot.lane.b32.xlu0 %v2598, 127
        %v2607 = vpop.permute.xlu0 %2606
        %2608 = vrot.lane.b32.xlu0 %v2599, 127
        %v2609 = vpop.permute.xlu0 %2608
        %2610 = vrot.lane.b32.xlu0 %v2600, 127
        %v2611 = vpop.permute.xlu0 %2610
        %v2612 = vsel %vm328, %v2607, %v2609
        %v2613 = vsel %vm328, %v2609, %v2611
        %v2618 = vsel %vm1178, %v2602, 0
        %2620 = vmatpush.msra.mxu0 0.0
        %2621 = vmatpush.msra.mxu0 0.0
        %2622 = vmatpush.msra.mxu0 0.0
        %2623 = vmatpush.msra.mxu0 0.0
        %2624 = vmatpush.msra.mxu0 0.0
        %2625 = vmatpush.msra.mxu0 0.0
        %2626 = vmatpush.msra.mxu0 0.0
        %2627 = vmatpush.msra.mxu0 0.0
        %2628 = vmatpush.msra.mxu0 0.0
        %2629 = vmatpush.msra.mxu0 0.0
        %2630 = vmatpush.msra.mxu0 0.0
        %2631 = vmatpush.msra.mxu0 0.0
        %2632 = vmatpush.msra.mxu0 0.0
        %2633 = vmatpush.msra.mxu0 0.0
        %2634 = vmatpush.msra.mxu0 0.0
        %2635 = vmatpush.msra.mxu0 %v2612
        %2636 = vmatmul.f32.gmra.mxu0 %v2618
        %v2637 = vpop.f32.mrf.mxu0
        %v2638 = vadd.f32 0.0, %v2637
        %2639 = vdwg.mxu0
        %2640 = vmatpush.msra.mxu0 0.0
        %2641 = vmatpush.msra.mxu0 0.0
        %2642 = vmatpush.msra.mxu0 0.0
        %2643 = vmatpush.msra.mxu0 0.0
        %2644 = vmatpush.msra.mxu0 0.0
        %2645 = vmatpush.msra.mxu0 0.0
        %2646 = vmatpush.msra.mxu0 0.0
        %2647 = vmatpush.msra.mxu0 0.0
        %2648 = vmatpush.msra.mxu0 0.0
        %2649 = vmatpush.msra.mxu0 0.0
        %2650 = vmatpush.msra.mxu0 0.0
        %2651 = vmatpush.msra.mxu0 0.0
        %2652 = vmatpush.msra.mxu0 0.0
        %2653 = vmatpush.msra.mxu0 0.0
        %2654 = vmatpush.msra.mxu0 0.0
        %2655 = vmatpush.msra.mxu0 %v2613
        %2656 = vmatmul.f32.gmra.mxu0 %v2618
        %v2657 = vpop.f32.mrf.mxu0
        %v2658 = vadd.f32 0.0, %v2657
        %2659 = vdwg.mxu0
        %2660 = vmatpush.msra.mxu0 0.0
        %2661 = vmatpush.msra.mxu0 0.0
        %2662 = vmatpush.msra.mxu0 0.0
        %2663 = vmatpush.msra.mxu0 0.0
        %2664 = vmatpush.msra.mxu0 0.0
        %2665 = vmatpush.msra.mxu0 0.0
        %2666 = vmatpush.msra.mxu0 0.0
        %2667 = vmatpush.msra.mxu0 0.0
        %2668 = vmatpush.msra.mxu0 0.0
        %2669 = vmatpush.msra.mxu0 0.0
        %2670 = vmatpush.msra.mxu0 0.0
        %2671 = vmatpush.msra.mxu0 0.0
        %2672 = vmatpush.msra.mxu0 0.0
        %2673 = vmatpush.msra.mxu0 0.0
        %2674 = vmatpush.msra.mxu0 0.0
        %2675 = vmatpush.msra.mxu0 %v2611
        %2676 = vmatmul.f32.gmra.mxu0 %v2618
        %v2677 = vpop.f32.mrf.mxu0
        %v2678 = vadd.f32 0.0, %v2677
        %2679 = vdwg.mxu0
        %v2681 = vsel %vm1178, %v2597, 0
        %2683 = vmatpush.msra.mxu0 0.0
        %2684 = vmatpush.msra.mxu0 0.0
        %2685 = vmatpush.msra.mxu0 0.0
        %2686 = vmatpush.msra.mxu0 0.0
        %2687 = vmatpush.msra.mxu0 0.0
        %2688 = vmatpush.msra.mxu0 0.0
        %2689 = vmatpush.msra.mxu0 0.0
        %2690 = vmatpush.msra.mxu0 0.0
        %2691 = vmatpush.msra.mxu0 0.0
        %2692 = vmatpush.msra.mxu0 0.0
        %2693 = vmatpush.msra.mxu0 0.0
        %2694 = vmatpush.msra.mxu0 0.0
        %2695 = vmatpush.msra.mxu0 0.0
        %2696 = vmatpush.msra.mxu0 0.0
        %2697 = vmatpush.msra.mxu0 0.0
        %2698 = vmatpush.msra.mxu0 %v2598
        %2699 = vmatmul.f32.gmra.mxu0 %v2681
        %v2700 = vpop.f32.mrf.mxu0
        %v2701 = vadd.f32 %v2638, %v2700
        %2702 = vdwg.mxu0
        %2703 = vmatpush.msra.mxu0 0.0
        %2704 = vmatpush.msra.mxu0 0.0
        %2705 = vmatpush.msra.mxu0 0.0
        %2706 = vmatpush.msra.mxu0 0.0
        %2707 = vmatpush.msra.mxu0 0.0
        %2708 = vmatpush.msra.mxu0 0.0
        %2709 = vmatpush.msra.mxu0 0.0
        %2710 = vmatpush.msra.mxu0 0.0
        %2711 = vmatpush.msra.mxu0 0.0
        %2712 = vmatpush.msra.mxu0 0.0
        %2713 = vmatpush.msra.mxu0 0.0
        %2714 = vmatpush.msra.mxu0 0.0
        %2715 = vmatpush.msra.mxu0 0.0
        %2716 = vmatpush.msra.mxu0 0.0
        %2717 = vmatpush.msra.mxu0 0.0
        %2718 = vmatpush.msra.mxu0 %v2599
        %2719 = vmatmul.f32.gmra.mxu0 %v2681
        %v2720 = vpop.f32.mrf.mxu0
        %v2721 = vadd.f32 %v2658, %v2720
        %2722 = vdwg.mxu0
        %2723 = vmatpush.msra.mxu0 0.0
        %2724 = vmatpush.msra.mxu0 0.0
        %2725 = vmatpush.msra.mxu0 0.0
        %2726 = vmatpush.msra.mxu0 0.0
        %2727 = vmatpush.msra.mxu0 0.0
        %2728 = vmatpush.msra.mxu0 0.0
        %2729 = vmatpush.msra.mxu0 0.0
        %2730 = vmatpush.msra.mxu0 0.0
        %2731 = vmatpush.msra.mxu0 0.0
        %2732 = vmatpush.msra.mxu0 0.0
        %2733 = vmatpush.msra.mxu0 0.0
        %2734 = vmatpush.msra.mxu0 0.0
        %2735 = vmatpush.msra.mxu0 0.0
        %2736 = vmatpush.msra.mxu0 0.0
        %2737 = vmatpush.msra.mxu0 0.0
        %2738 = vmatpush.msra.mxu0 %v2600
        %2739 = vmatmul.f32.gmra.mxu0 %v2681
        %v2740 = vpop.f32.mrf.mxu0
        %v2741 = vadd.f32 %v2678, %v2740
        %2742 = vdwg.mxu0
        %s2743 = scalar_lea.vmem %s5, 16
        %v2744 = vld [vmem:[%s2743] sm:$0xff]
        %2745 = vrot.lane.b32.xlu0 %v2598, 126
        %v2746 = vpop.permute.xlu0 %2745
        %2747 = vrot.lane.b32.xlu0 %v2599, 126
        %v2748 = vpop.permute.xlu0 %2747
        %2749 = vrot.lane.b32.xlu0 %v2600, 126
        %v2750 = vpop.permute.xlu0 %2749
        %v2751 = vsel %vm495, %v2746, %v2748
        %v2752 = vsel %vm495, %v2748, %v2750
        %v2757 = vsel %vm1178, %v2744, 0
        %2759 = vmatpush.msra.mxu0 0.0
        %2760 = vmatpush.msra.mxu0 0.0
        %2761 = vmatpush.msra.mxu0 0.0
        %2762 = vmatpush.msra.mxu0 0.0
        %2763 = vmatpush.msra.mxu0 0.0
        %2764 = vmatpush.msra.mxu0 0.0
        %2765 = vmatpush.msra.mxu0 0.0
        %2766 = vmatpush.msra.mxu0 0.0
        %2767 = vmatpush.msra.mxu0 0.0
        %2768 = vmatpush.msra.mxu0 0.0
        %2769 = vmatpush.msra.mxu0 0.0
        %2770 = vmatpush.msra.mxu0 0.0
        %2771 = vmatpush.msra.mxu0 0.0
        %2772 = vmatpush.msra.mxu0 0.0
        %2773 = vmatpush.msra.mxu0 0.0
        %2774 = vmatpush.msra.mxu0 %v2751
        %2775 = vmatmul.f32.gmra.mxu0 %v2757
        %v2776 = vpop.f32.mrf.mxu0
        %v2777 = vadd.f32 0.0, %v2776
        %2778 = vdwg.mxu0
        %2779 = vmatpush.msra.mxu0 0.0
        %2780 = vmatpush.msra.mxu0 0.0
        %2781 = vmatpush.msra.mxu0 0.0
        %2782 = vmatpush.msra.mxu0 0.0
        %2783 = vmatpush.msra.mxu0 0.0
        %2784 = vmatpush.msra.mxu0 0.0
        %2785 = vmatpush.msra.mxu0 0.0
        %2786 = vmatpush.msra.mxu0 0.0
        %2787 = vmatpush.msra.mxu0 0.0
        %2788 = vmatpush.msra.mxu0 0.0
        %2789 = vmatpush.msra.mxu0 0.0
        %2790 = vmatpush.msra.mxu0 0.0
        %2791 = vmatpush.msra.mxu0 0.0
        %2792 = vmatpush.msra.mxu0 0.0
        %2793 = vmatpush.msra.mxu0 0.0
        %2794 = vmatpush.msra.mxu0 %v2752
        %2795 = vmatmul.f32.gmra.mxu0 %v2757
        %v2796 = vpop.f32.mrf.mxu0
        %v2797 = vadd.f32 0.0, %v2796
        %2798 = vdwg.mxu0
        %2799 = vmatpush.msra.mxu0 0.0
        %2800 = vmatpush.msra.mxu0 0.0
        %2801 = vmatpush.msra.mxu0 0.0
        %2802 = vmatpush.msra.mxu0 0.0
        %2803 = vmatpush.msra.mxu0 0.0
        %2804 = vmatpush.msra.mxu0 0.0
        %2805 = vmatpush.msra.mxu0 0.0
        %2806 = vmatpush.msra.mxu0 0.0
        %2807 = vmatpush.msra.mxu0 0.0
        %2808 = vmatpush.msra.mxu0 0.0
        %2809 = vmatpush.msra.mxu0 0.0
        %2810 = vmatpush.msra.mxu0 0.0
        %2811 = vmatpush.msra.mxu0 0.0
        %2812 = vmatpush.msra.mxu0 0.0
        %2813 = vmatpush.msra.mxu0 0.0
        %2814 = vmatpush.msra.mxu0 %v2750
        %2815 = vmatmul.f32.gmra.mxu0 %v2757
        %v2816 = vpop.f32.mrf.mxu0
        %v2817 = vadd.f32 0.0, %v2816
        %2818 = vdwg.mxu0
        %v2819 = vadd.f32 %v2701, %v2777
        %v2820 = vadd.f32 %v2721, %v2797
        %v2821 = vadd.f32 %v2741, %v2817
        %s2822 = scalar_lea.vmem %s5, 24
        %v2823 = vld [vmem:[%s2822] sm:$0xff]
        %2824 = vrot.lane.b32.xlu0 %v2598, 110
        %v2825 = vpop.permute.xlu0 %2824
        %2826 = vrot.lane.b32.xlu0 %v2599, 110
        %v2827 = vpop.permute.xlu0 %2826
        %2828 = vrot.lane.b32.xlu0 %v2600, 110
        %v2829 = vpop.permute.xlu0 %2828
        %v2830 = vsel %vm588, %v2825, %v2827
        %v2831 = vsel %vm588, %v2827, %v2829
        %v2836 = vsel %vm1178, %v2823, 0
        %2838 = vmatpush.msra.mxu0 0.0
        %2839 = vmatpush.msra.mxu0 0.0
        %2840 = vmatpush.msra.mxu0 0.0
        %2841 = vmatpush.msra.mxu0 0.0
        %2842 = vmatpush.msra.mxu0 0.0
        %2843 = vmatpush.msra.mxu0 0.0
        %2844 = vmatpush.msra.mxu0 0.0
        %2845 = vmatpush.msra.mxu0 0.0
        %2846 = vmatpush.msra.mxu0 0.0
        %2847 = vmatpush.msra.mxu0 0.0
        %2848 = vmatpush.msra.mxu0 0.0
        %2849 = vmatpush.msra.mxu0 0.0
        %2850 = vmatpush.msra.mxu0 0.0
        %2851 = vmatpush.msra.mxu0 0.0
        %2852 = vmatpush.msra.mxu0 0.0
        %2853 = vmatpush.msra.mxu0 %v2830
        %2854 = vmatmul.f32.gmra.mxu0 %v2836
        %v2855 = vpop.f32.mrf.mxu0
        %v2856 = vadd.f32 0.0, %v2855
        %2857 = vdwg.mxu0
        %2858 = vmatpush.msra.mxu0 0.0
        %2859 = vmatpush.msra.mxu0 0.0
        %2860 = vmatpush.msra.mxu0 0.0
        %2861 = vmatpush.msra.mxu0 0.0
        %2862 = vmatpush.msra.mxu0 0.0
        %2863 = vmatpush.msra.mxu0 0.0
        %2864 = vmatpush.msra.mxu0 0.0
        %2865 = vmatpush.msra.mxu0 0.0
        %2866 = vmatpush.msra.mxu0 0.0
        %2867 = vmatpush.msra.mxu0 0.0
        %2868 = vmatpush.msra.mxu0 0.0
        %2869 = vmatpush.msra.mxu0 0.0
        %2870 = vmatpush.msra.mxu0 0.0
        %2871 = vmatpush.msra.mxu0 0.0
        %2872 = vmatpush.msra.mxu0 0.0
        %2873 = vmatpush.msra.mxu0 %v2831
        %2874 = vmatmul.f32.gmra.mxu0 %v2836
        %v2875 = vpop.f32.mrf.mxu0
        %v2876 = vadd.f32 0.0, %v2875
        %2877 = vdwg.mxu0
        %2878 = vmatpush.msra.mxu0 0.0
        %2879 = vmatpush.msra.mxu0 0.0
        %2880 = vmatpush.msra.mxu0 0.0
        %2881 = vmatpush.msra.mxu0 0.0
        %2882 = vmatpush.msra.mxu0 0.0
        %2883 = vmatpush.msra.mxu0 0.0
        %2884 = vmatpush.msra.mxu0 0.0
        %2885 = vmatpush.msra.mxu0 0.0
        %2886 = vmatpush.msra.mxu0 0.0
        %2887 = vmatpush.msra.mxu0 0.0
        %2888 = vmatpush.msra.mxu0 0.0
        %2889 = vmatpush.msra.mxu0 0.0
        %2890 = vmatpush.msra.mxu0 0.0
        %2891 = vmatpush.msra.mxu0 0.0
        %2892 = vmatpush.msra.mxu0 0.0
        %2893 = vmatpush.msra.mxu0 %v2829
        %2894 = vmatmul.f32.gmra.mxu0 %v2836
        %v2895 = vpop.f32.mrf.mxu0
        %v2896 = vadd.f32 0.0, %v2895
        %2897 = vdwg.mxu0
        %v2898 = vadd.f32 %v2819, %v2856
        %v2899 = vadd.f32 %v2820, %v2876
        %v2900 = vadd.f32 %v2821, %v2896
        %s2901 = scalar_lea.vmem %s5, 32
        %v2902 = vld [vmem:[%s2901] sm:$0xff]
        %2903 = vrot.lane.b32.xlu0 %v2598, 109
        %v2904 = vpop.permute.xlu0 %2903
        %2905 = vrot.lane.b32.xlu0 %v2599, 109
        %v2906 = vpop.permute.xlu0 %2905
        %2907 = vrot.lane.b32.xlu0 %v2600, 109
        %v2908 = vpop.permute.xlu0 %2907
        %v2909 = vsel %vm681, %v2904, %v2906
        %v2910 = vsel %vm681, %v2906, %v2908
        %v2915 = vsel %vm1178, %v2902, 0
        %2917 = vmatpush.msra.mxu0 0.0
        %2918 = vmatpush.msra.mxu0 0.0
        %2919 = vmatpush.msra.mxu0 0.0
        %2920 = vmatpush.msra.mxu0 0.0
        %2921 = vmatpush.msra.mxu0 0.0
        %2922 = vmatpush.msra.mxu0 0.0
        %2923 = vmatpush.msra.mxu0 0.0
        %2924 = vmatpush.msra.mxu0 0.0
        %2925 = vmatpush.msra.mxu0 0.0
        %2926 = vmatpush.msra.mxu0 0.0
        %2927 = vmatpush.msra.mxu0 0.0
        %2928 = vmatpush.msra.mxu0 0.0
        %2929 = vmatpush.msra.mxu0 0.0
        %2930 = vmatpush.msra.mxu0 0.0
        %2931 = vmatpush.msra.mxu0 0.0
        %2932 = vmatpush.msra.mxu0 %v2909
        %2933 = vmatmul.f32.gmra.mxu0 %v2915
        %v2934 = vpop.f32.mrf.mxu0
        %v2935 = vadd.f32 0.0, %v2934
        %2936 = vdwg.mxu0
        %2937 = vmatpush.msra.mxu0 0.0
        %2938 = vmatpush.msra.mxu0 0.0
        %2939 = vmatpush.msra.mxu0 0.0
        %2940 = vmatpush.msra.mxu0 0.0
        %2941 = vmatpush.msra.mxu0 0.0
        %2942 = vmatpush.msra.mxu0 0.0
        %2943 = vmatpush.msra.mxu0 0.0
        %2944 = vmatpush.msra.mxu0 0.0
        %2945 = vmatpush.msra.mxu0 0.0
        %2946 = vmatpush.msra.mxu0 0.0
        %2947 = vmatpush.msra.mxu0 0.0
        %2948 = vmatpush.msra.mxu0 0.0
        %2949 = vmatpush.msra.mxu0 0.0
        %2950 = vmatpush.msra.mxu0 0.0
        %2951 = vmatpush.msra.mxu0 0.0
        %2952 = vmatpush.msra.mxu0 %v2910
        %2953 = vmatmul.f32.gmra.mxu0 %v2915
        %v2954 = vpop.f32.mrf.mxu0
        %v2955 = vadd.f32 0.0, %v2954
        %2956 = vdwg.mxu0
        %2957 = vmatpush.msra.mxu0 0.0
        %2958 = vmatpush.msra.mxu0 0.0
        %2959 = vmatpush.msra.mxu0 0.0
        %2960 = vmatpush.msra.mxu0 0.0
        %2961 = vmatpush.msra.mxu0 0.0
        %2962 = vmatpush.msra.mxu0 0.0
        %2963 = vmatpush.msra.mxu0 0.0
        %2964 = vmatpush.msra.mxu0 0.0
        %2965 = vmatpush.msra.mxu0 0.0
        %2966 = vmatpush.msra.mxu0 0.0
        %2967 = vmatpush.msra.mxu0 0.0
        %2968 = vmatpush.msra.mxu0 0.0
        %2969 = vmatpush.msra.mxu0 0.0
        %2970 = vmatpush.msra.mxu0 0.0
        %2971 = vmatpush.msra.mxu0 0.0
        %2972 = vmatpush.msra.mxu0 %v2908
        %2973 = vmatmul.f32.gmra.mxu0 %v2915
        %v2974 = vpop.f32.mrf.mxu0
        %v2975 = vadd.f32 0.0, %v2974
        %2976 = vdwg.mxu0
        %v2977 = vadd.f32 %v2898, %v2935
        %v2978 = vadd.f32 %v2899, %v2955
        %v2979 = vadd.f32 %v2900, %v2975
        %s2980 = scalar_lea.vmem %s5, 40
        %v2981 = vld [vmem:[%s2980] sm:$0xff]
        %2982 = vrot.lane.b32.xlu0 %v2598, 108
        %v2983 = vpop.permute.xlu0 %2982
        %2984 = vrot.lane.b32.xlu0 %v2599, 108
        %v2985 = vpop.permute.xlu0 %2984
        %2986 = vrot.lane.b32.xlu0 %v2600, 108
        %v2987 = vpop.permute.xlu0 %2986
        %v2988 = vsel %vm774, %v2983, %v2985
        %v2989 = vsel %vm774, %v2985, %v2987
        %v2994 = vsel %vm1178, %v2981, 0
        %2996 = vmatpush.msra.mxu0 0.0
        %2997 = vmatpush.msra.mxu0 0.0
        %2998 = vmatpush.msra.mxu0 0.0
        %2999 = vmatpush.msra.mxu0 0.0
        %3000 = vmatpush.msra.mxu0 0.0
        %3001 = vmatpush.msra.mxu0 0.0
        %3002 = vmatpush.msra.mxu0 0.0
        %3003 = vmatpush.msra.mxu0 0.0
        %3004 = vmatpush.msra.mxu0 0.0
        %3005 = vmatpush.msra.mxu0 0.0
        %3006 = vmatpush.msra.mxu0 0.0
        %3007 = vmatpush.msra.mxu0 0.0
        %3008 = vmatpush.msra.mxu0 0.0
        %3009 = vmatpush.msra.mxu0 0.0
        %3010 = vmatpush.msra.mxu0 0.0
        %3011 = vmatpush.msra.mxu0 %v2988
        %3012 = vmatmul.f32.gmra.mxu0 %v2994
        %v3013 = vpop.f32.mrf.mxu0
        %v3014 = vadd.f32 0.0, %v3013
        %3015 = vdwg.mxu0
        %3016 = vmatpush.msra.mxu0 0.0
        %3017 = vmatpush.msra.mxu0 0.0
        %3018 = vmatpush.msra.mxu0 0.0
        %3019 = vmatpush.msra.mxu0 0.0
        %3020 = vmatpush.msra.mxu0 0.0
        %3021 = vmatpush.msra.mxu0 0.0
        %3022 = vmatpush.msra.mxu0 0.0
        %3023 = vmatpush.msra.mxu0 0.0
        %3024 = vmatpush.msra.mxu0 0.0
        %3025 = vmatpush.msra.mxu0 0.0
        %3026 = vmatpush.msra.mxu0 0.0
        %3027 = vmatpush.msra.mxu0 0.0
        %3028 = vmatpush.msra.mxu0 0.0
        %3029 = vmatpush.msra.mxu0 0.0
        %3030 = vmatpush.msra.mxu0 0.0
        %3031 = vmatpush.msra.mxu0 %v2989
        %3032 = vmatmul.f32.gmra.mxu0 %v2994
        %v3033 = vpop.f32.mrf.mxu0
        %v3034 = vadd.f32 0.0, %v3033
        %3035 = vdwg.mxu0
        %3036 = vmatpush.msra.mxu0 0.0
        %3037 = vmatpush.msra.mxu0 0.0
        %3038 = vmatpush.msra.mxu0 0.0
        %3039 = vmatpush.msra.mxu0 0.0
        %3040 = vmatpush.msra.mxu0 0.0
        %3041 = vmatpush.msra.mxu0 0.0
        %3042 = vmatpush.msra.mxu0 0.0
        %3043 = vmatpush.msra.mxu0 0.0
        %3044 = vmatpush.msra.mxu0 0.0
        %3045 = vmatpush.msra.mxu0 0.0
        %3046 = vmatpush.msra.mxu0 0.0
        %3047 = vmatpush.msra.mxu0 0.0
        %3048 = vmatpush.msra.mxu0 0.0
        %3049 = vmatpush.msra.mxu0 0.0
        %3050 = vmatpush.msra.mxu0 0.0
        %3051 = vmatpush.msra.mxu0 %v2987
        %3052 = vmatmul.f32.gmra.mxu0 %v2994
        %v3053 = vpop.f32.mrf.mxu0
        %v3054 = vadd.f32 0.0, %v3053
        %3055 = vdwg.mxu0
        %v3056 = vadd.f32 %v2977, %v3014
        %v3057 = vadd.f32 %v2978, %v3034
        %v3058 = vadd.f32 %v2979, %v3054
        %s3059 = scalar_lea.vmem %s5, 48
        %v3060 = vld [vmem:[%s3059] sm:$0xff]
        %3061 = vrot.lane.b32.xlu0 %v2598, 92
        %v3062 = vpop.permute.xlu0 %3061
        %3063 = vrot.lane.b32.xlu0 %v2599, 92
        %v3064 = vpop.permute.xlu0 %3063
        %3065 = vrot.lane.b32.xlu0 %v2600, 92
        %v3066 = vpop.permute.xlu0 %3065
        %v3067 = vsel %vm867, %v3062, %v3064
        %v3068 = vsel %vm867, %v3064, %v3066
        %v3073 = vsel %vm1178, %v3060, 0
        %3075 = vmatpush.msra.mxu0 0.0
        %3076 = vmatpush.msra.mxu0 0.0
        %3077 = vmatpush.msra.mxu0 0.0
        %3078 = vmatpush.msra.mxu0 0.0
        %3079 = vmatpush.msra.mxu0 0.0
        %3080 = vmatpush.msra.mxu0 0.0
        %3081 = vmatpush.msra.mxu0 0.0
        %3082 = vmatpush.msra.mxu0 0.0
        %3083 = vmatpush.msra.mxu0 0.0
        %3084 = vmatpush.msra.mxu0 0.0
        %3085 = vmatpush.msra.mxu0 0.0
        %3086 = vmatpush.msra.mxu0 0.0
        %3087 = vmatpush.msra.mxu0 0.0
        %3088 = vmatpush.msra.mxu0 0.0
        %3089 = vmatpush.msra.mxu0 0.0
        %3090 = vmatpush.msra.mxu0 %v3067
        %3091 = vmatmul.f32.gmra.mxu0 %v3073
        %v3092 = vpop.f32.mrf.mxu0
        %v3093 = vadd.f32 0.0, %v3092
        %3094 = vdwg.mxu0
        %3095 = vmatpush.msra.mxu0 0.0
        %3096 = vmatpush.msra.mxu0 0.0
        %3097 = vmatpush.msra.mxu0 0.0
        %3098 = vmatpush.msra.mxu0 0.0
        %3099 = vmatpush.msra.mxu0 0.0
        %3100 = vmatpush.msra.mxu0 0.0
        %3101 = vmatpush.msra.mxu0 0.0
        %3102 = vmatpush.msra.mxu0 0.0
        %3103 = vmatpush.msra.mxu0 0.0
        %3104 = vmatpush.msra.mxu0 0.0
        %3105 = vmatpush.msra.mxu0 0.0
        %3106 = vmatpush.msra.mxu0 0.0
        %3107 = vmatpush.msra.mxu0 0.0
        %3108 = vmatpush.msra.mxu0 0.0
        %3109 = vmatpush.msra.mxu0 0.0
        %3110 = vmatpush.msra.mxu0 %v3068
        %3111 = vmatmul.f32.gmra.mxu0 %v3073
        %v3112 = vpop.f32.mrf.mxu0
        %v3113 = vadd.f32 0.0, %v3112
        %3114 = vdwg.mxu0
        %3115 = vmatpush.msra.mxu0 0.0
        %3116 = vmatpush.msra.mxu0 0.0
        %3117 = vmatpush.msra.mxu0 0.0
        %3118 = vmatpush.msra.mxu0 0.0
        %3119 = vmatpush.msra.mxu0 0.0
        %3120 = vmatpush.msra.mxu0 0.0
        %3121 = vmatpush.msra.mxu0 0.0
        %3122 = vmatpush.msra.mxu0 0.0
        %3123 = vmatpush.msra.mxu0 0.0
        %3124 = vmatpush.msra.mxu0 0.0
        %3125 = vmatpush.msra.mxu0 0.0
        %3126 = vmatpush.msra.mxu0 0.0
        %3127 = vmatpush.msra.mxu0 0.0
        %3128 = vmatpush.msra.mxu0 0.0
        %3129 = vmatpush.msra.mxu0 0.0
        %3130 = vmatpush.msra.mxu0 %v3066
        %3131 = vmatmul.f32.gmra.mxu0 %v3073
        %v3132 = vpop.f32.mrf.mxu0
        %v3133 = vadd.f32 0.0, %v3132
        %3134 = vdwg.mxu0
        %v3135 = vadd.f32 %v3056, %v3093
        %v3136 = vadd.f32 %v3057, %v3113
        %v3137 = vadd.f32 %v3058, %v3133
        %s3138 = scalar_lea.vmem %s5, 56
        %v3139 = vld [vmem:[%s3138] sm:$0xff]
        %3140 = vrot.lane.b32.xlu0 %v2598, 91
        %v3141 = vpop.permute.xlu0 %3140
        %3142 = vrot.lane.b32.xlu0 %v2599, 91
        %v3143 = vpop.permute.xlu0 %3142
        %3144 = vrot.lane.b32.xlu0 %v2600, 91
        %v3145 = vpop.permute.xlu0 %3144
        %v3146 = vsel %vm960, %v3141, %v3143
        %v3147 = vsel %vm960, %v3143, %v3145
        %v3152 = vsel %vm1178, %v3139, 0
        %3154 = vmatpush.msra.mxu0 0.0
        %3155 = vmatpush.msra.mxu0 0.0
        %3156 = vmatpush.msra.mxu0 0.0
        %3157 = vmatpush.msra.mxu0 0.0
        %3158 = vmatpush.msra.mxu0 0.0
        %3159 = vmatpush.msra.mxu0 0.0
        %3160 = vmatpush.msra.mxu0 0.0
        %3161 = vmatpush.msra.mxu0 0.0
        %3162 = vmatpush.msra.mxu0 0.0
        %3163 = vmatpush.msra.mxu0 0.0
        %3164 = vmatpush.msra.mxu0 0.0
        %3165 = vmatpush.msra.mxu0 0.0
        %3166 = vmatpush.msra.mxu0 0.0
        %3167 = vmatpush.msra.mxu0 0.0
        %3168 = vmatpush.msra.mxu0 0.0
        %3169 = vmatpush.msra.mxu0 %v3146
        %3170 = vmatmul.f32.gmra.mxu0 %v3152
        %v3171 = vpop.f32.mrf.mxu0
        %v3172 = vadd.f32 0.0, %v3171
        %3173 = vdwg.mxu0
        %3174 = vmatpush.msra.mxu0 0.0
        %3175 = vmatpush.msra.mxu0 0.0
        %3176 = vmatpush.msra.mxu0 0.0
        %3177 = vmatpush.msra.mxu0 0.0
        %3178 = vmatpush.msra.mxu0 0.0
        %3179 = vmatpush.msra.mxu0 0.0
        %3180 = vmatpush.msra.mxu0 0.0
        %3181 = vmatpush.msra.mxu0 0.0
        %3182 = vmatpush.msra.mxu0 0.0
        %3183 = vmatpush.msra.mxu0 0.0
        %3184 = vmatpush.msra.mxu0 0.0
        %3185 = vmatpush.msra.mxu0 0.0
        %3186 = vmatpush.msra.mxu0 0.0
        %3187 = vmatpush.msra.mxu0 0.0
        %3188 = vmatpush.msra.mxu0 0.0
        %3189 = vmatpush.msra.mxu0 %v3147
        %3190 = vmatmul.f32.gmra.mxu0 %v3152
        %v3191 = vpop.f32.mrf.mxu0
        %v3192 = vadd.f32 0.0, %v3191
        %3193 = vdwg.mxu0
        %3194 = vmatpush.msra.mxu0 0.0
        %3195 = vmatpush.msra.mxu0 0.0
        %3196 = vmatpush.msra.mxu0 0.0
        %3197 = vmatpush.msra.mxu0 0.0
        %3198 = vmatpush.msra.mxu0 0.0
        %3199 = vmatpush.msra.mxu0 0.0
        %3200 = vmatpush.msra.mxu0 0.0
        %3201 = vmatpush.msra.mxu0 0.0
        %3202 = vmatpush.msra.mxu0 0.0
        %3203 = vmatpush.msra.mxu0 0.0
        %3204 = vmatpush.msra.mxu0 0.0
        %3205 = vmatpush.msra.mxu0 0.0
        %3206 = vmatpush.msra.mxu0 0.0
        %3207 = vmatpush.msra.mxu0 0.0
        %3208 = vmatpush.msra.mxu0 0.0
        %3209 = vmatpush.msra.mxu0 %v3145
        %3210 = vmatmul.f32.gmra.mxu0 %v3152
        %v3211 = vpop.f32.mrf.mxu0
        %v3212 = vadd.f32 0.0, %v3211
        %3213 = vdwg.mxu0
        %v3214 = vadd.f32 %v3135, %v3172
        %v3215 = vadd.f32 %v3136, %v3192
        %v3216 = vadd.f32 %v3137, %v3212
        %s3217 = scalar_lea.vmem %s5, 64
        %v3218 = vld [vmem:[%s3217] sm:$0xff]
        %3219 = vrot.lane.b32.xlu0 %v2598, 90
        %v3220 = vpop.permute.xlu0 %3219
        %3221 = vrot.lane.b32.xlu0 %v2599, 90
        %v3222 = vpop.permute.xlu0 %3221
        %3223 = vrot.lane.b32.xlu0 %v2600, 90
        %v3224 = vpop.permute.xlu0 %3223
        %v3225 = vsel %vm1053, %v3220, %v3222
        %v3226 = vsel %vm1053, %v3222, %v3224
        %v3231 = vsel %vm1178, %v3218, 0
        %3233 = vmatpush.msra.mxu0 0.0
        %3234 = vmatpush.msra.mxu0 0.0
        %3235 = vmatpush.msra.mxu0 0.0
        %3236 = vmatpush.msra.mxu0 0.0
        %3237 = vmatpush.msra.mxu0 0.0
        %3238 = vmatpush.msra.mxu0 0.0
        %3239 = vmatpush.msra.mxu0 0.0
        %3240 = vmatpush.msra.mxu0 0.0
        %3241 = vmatpush.msra.mxu0 0.0
        %3242 = vmatpush.msra.mxu0 0.0
        %3243 = vmatpush.msra.mxu0 0.0
        %3244 = vmatpush.msra.mxu0 0.0
        %3245 = vmatpush.msra.mxu0 0.0
        %3246 = vmatpush.msra.mxu0 0.0
        %3247 = vmatpush.msra.mxu0 0.0
        %3248 = vmatpush.msra.mxu0 %v3225
        %3249 = vmatmul.f32.gmra.mxu0 %v3231
        %v3250 = vpop.f32.mrf.mxu0
        %v3251 = vadd.f32 0.0, %v3250
        %3252 = vdwg.mxu0
        %3253 = vmatpush.msra.mxu0 0.0
        %3254 = vmatpush.msra.mxu0 0.0
        %3255 = vmatpush.msra.mxu0 0.0
        %3256 = vmatpush.msra.mxu0 0.0
        %3257 = vmatpush.msra.mxu0 0.0
        %3258 = vmatpush.msra.mxu0 0.0
        %3259 = vmatpush.msra.mxu0 0.0
        %3260 = vmatpush.msra.mxu0 0.0
        %3261 = vmatpush.msra.mxu0 0.0
        %3262 = vmatpush.msra.mxu0 0.0
        %3263 = vmatpush.msra.mxu0 0.0
        %3264 = vmatpush.msra.mxu0 0.0
        %3265 = vmatpush.msra.mxu0 0.0
        %3266 = vmatpush.msra.mxu0 0.0
        %3267 = vmatpush.msra.mxu0 0.0
        %3268 = vmatpush.msra.mxu0 %v3226
        %3269 = vmatmul.f32.gmra.mxu0 %v3231
        %v3270 = vpop.f32.mrf.mxu0
        %v3271 = vadd.f32 0.0, %v3270
        %3272 = vdwg.mxu0
        %3273 = vmatpush.msra.mxu0 0.0
        %3274 = vmatpush.msra.mxu0 0.0
        %3275 = vmatpush.msra.mxu0 0.0
        %3276 = vmatpush.msra.mxu0 0.0
        %3277 = vmatpush.msra.mxu0 0.0
        %3278 = vmatpush.msra.mxu0 0.0
        %3279 = vmatpush.msra.mxu0 0.0
        %3280 = vmatpush.msra.mxu0 0.0
        %3281 = vmatpush.msra.mxu0 0.0
        %3282 = vmatpush.msra.mxu0 0.0
        %3283 = vmatpush.msra.mxu0 0.0
        %3284 = vmatpush.msra.mxu0 0.0
        %3285 = vmatpush.msra.mxu0 0.0
        %3286 = vmatpush.msra.mxu0 0.0
        %3287 = vmatpush.msra.mxu0 0.0
        %3288 = vmatpush.msra.mxu0 %v3224
        %3289 = vmatmul.f32.gmra.mxu0 %v3231
        %v3290 = vpop.f32.mrf.mxu0
        %v3291 = vadd.f32 0.0, %v3290
        %3292 = vdwg.mxu0
        %v3293 = vadd.f32 %v3214, %v3251
        %v3294 = vadd.f32 %v3215, %v3271
        %v3295 = vadd.f32 %v3216, %v3291
        %v3296 = vsel %vm1132, %v3293, 0.0
        %v3297 = vsel %vm1133, %v3294, 0.0
        %v3298 = vsel %vm1134, %v3295, 0.0
        %3302 = vrot.lane.b32.xlu0 %v3296, 19
        %v3303 = vpop.permute.xlu0 %3302
        %3304 = vrot.lane.b32.xlu0 %v3297, 19
        %v3305 = vpop.permute.xlu0 %3304
        %3306 = vrot.lane.b32.xlu0 %v3298, 19
        %v3307 = vpop.permute.xlu0 %3306
        %v3308 = vsel %vm1147, %v3303, %v3305
        %v3309 = vsel %vm1147, %v3305, %v3307
        %3313 = vst.msk [vmem:[#allocation2] sm:$0xff] %vm1153, %v3303
        %3314 = vst [vmem:[#allocation2 + $0x8] sm:$0xff] %v3308
        %3315 = vst.msk [vmem:[#allocation2 + $0x10] sm:$0xff] %vm1156, %v3309
        %v3316 = vld [vmem:[%s6] sm:$0xff]
        %v3317 = vld [vmem:[#allocation2] sm:$0xff]
        %v3318 = vld [vmem:[#allocation2 + $0x8] sm:$0xff]
        %v3319 = vld [vmem:[#allocation2 + $0x10] sm:$0xff]
        %s3320 = scalar_lea.vmem %s6, 8
        %v3321 = vld [vmem:[%s3320] sm:$0xff]
        %3325 = vrot.lane.b32.xlu0 %v3317, 127
        %v3326 = vpop.permute.xlu0 %3325
        %3327 = vrot.lane.b32.xlu0 %v3318, 127
        %v3328 = vpop.permute.xlu0 %3327
        %3329 = vrot.lane.b32.xlu0 %v3319, 127
        %v3330 = vpop.permute.xlu0 %3329
        %v3331 = vsel %vm328, %v3326, %v3328
        %v3332 = vsel %vm328, %v3328, %v3330
        %v3337 = vsel %vm1178, %v3321, 0
        %3339 = vmatpush.msra.mxu0 0.0
        %3340 = vmatpush.msra.mxu0 0.0
        %3341 = vmatpush.msra.mxu0 0.0
        %3342 = vmatpush.msra.mxu0 0.0
        %3343 = vmatpush.msra.mxu0 0.0
        %3344 = vmatpush.msra.mxu0 0.0
        %3345 = vmatpush.msra.mxu0 0.0
        %3346 = vmatpush.msra.mxu0 0.0
        %3347 = vmatpush.msra.mxu0 0.0
        %3348 = vmatpush.msra.mxu0 0.0
        %3349 = vmatpush.msra.mxu0 0.0
        %3350 = vmatpush.msra.mxu0 0.0
        %3351 = vmatpush.msra.mxu0 0.0
        %3352 = vmatpush.msra.mxu0 0.0
        %3353 = vmatpush.msra.mxu0 0.0
        %3354 = vmatpush.msra.mxu0 %v3331
        %3355 = vmatmul.f32.gmra.mxu0 %v3337
        %v3356 = vpop.f32.mrf.mxu0
        %v3357 = vadd.f32 0.0, %v3356
        %3358 = vdwg.mxu0
        %3359 = vmatpush.msra.mxu0 0.0
        %3360 = vmatpush.msra.mxu0 0.0
        %3361 = vmatpush.msra.mxu0 0.0
        %3362 = vmatpush.msra.mxu0 0.0
        %3363 = vmatpush.msra.mxu0 0.0
        %3364 = vmatpush.msra.mxu0 0.0
        %3365 = vmatpush.msra.mxu0 0.0
        %3366 = vmatpush.msra.mxu0 0.0
        %3367 = vmatpush.msra.mxu0 0.0
        %3368 = vmatpush.msra.mxu0 0.0
        %3369 = vmatpush.msra.mxu0 0.0
        %3370 = vmatpush.msra.mxu0 0.0
        %3371 = vmatpush.msra.mxu0 0.0
        %3372 = vmatpush.msra.mxu0 0.0
        %3373 = vmatpush.msra.mxu0 0.0
        %3374 = vmatpush.msra.mxu0 %v3332
        %3375 = vmatmul.f32.gmra.mxu0 %v3337
        %v3376 = vpop.f32.mrf.mxu0
        %v3377 = vadd.f32 0.0, %v3376
        %3378 = vdwg.mxu0
        %3379 = vmatpush.msra.mxu0 0.0
        %3380 = vmatpush.msra.mxu0 0.0
        %3381 = vmatpush.msra.mxu0 0.0
        %3382 = vmatpush.msra.mxu0 0.0
        %3383 = vmatpush.msra.mxu0 0.0
        %3384 = vmatpush.msra.mxu0 0.0
        %3385 = vmatpush.msra.mxu0 0.0
        %3386 = vmatpush.msra.mxu0 0.0
        %3387 = vmatpush.msra.mxu0 0.0
        %3388 = vmatpush.msra.mxu0 0.0
        %3389 = vmatpush.msra.mxu0 0.0
        %3390 = vmatpush.msra.mxu0 0.0
        %3391 = vmatpush.msra.mxu0 0.0
        %3392 = vmatpush.msra.mxu0 0.0
        %3393 = vmatpush.msra.mxu0 0.0
        %3394 = vmatpush.msra.mxu0 %v3330
        %3395 = vmatmul.f32.gmra.mxu0 %v3337
        %v3396 = vpop.f32.mrf.mxu0
        %v3397 = vadd.f32 0.0, %v3396
        %3398 = vdwg.mxu0
        %v3400 = vsel %vm1178, %v3316, 0
        %3402 = vmatpush.msra.mxu0 0.0
        %3403 = vmatpush.msra.mxu0 0.0
        %3404 = vmatpush.msra.mxu0 0.0
        %3405 = vmatpush.msra.mxu0 0.0
        %3406 = vmatpush.msra.mxu0 0.0
        %3407 = vmatpush.msra.mxu0 0.0
        %3408 = vmatpush.msra.mxu0 0.0
        %3409 = vmatpush.msra.mxu0 0.0
        %3410 = vmatpush.msra.mxu0 0.0
        %3411 = vmatpush.msra.mxu0 0.0
        %3412 = vmatpush.msra.mxu0 0.0
        %3413 = vmatpush.msra.mxu0 0.0
        %3414 = vmatpush.msra.mxu0 0.0
        %3415 = vmatpush.msra.mxu0 0.0
        %3416 = vmatpush.msra.mxu0 0.0
        %3417 = vmatpush.msra.mxu0 %v3317
        %3418 = vmatmul.f32.gmra.mxu0 %v3400
        %v3419 = vpop.f32.mrf.mxu0
        %v3420 = vadd.f32 %v3357, %v3419
        %3421 = vdwg.mxu0
        %3422 = vmatpush.msra.mxu0 0.0
        %3423 = vmatpush.msra.mxu0 0.0
        %3424 = vmatpush.msra.mxu0 0.0
        %3425 = vmatpush.msra.mxu0 0.0
        %3426 = vmatpush.msra.mxu0 0.0
        %3427 = vmatpush.msra.mxu0 0.0
        %3428 = vmatpush.msra.mxu0 0.0
        %3429 = vmatpush.msra.mxu0 0.0
        %3430 = vmatpush.msra.mxu0 0.0
        %3431 = vmatpush.msra.mxu0 0.0
        %3432 = vmatpush.msra.mxu0 0.0
        %3433 = vmatpush.msra.mxu0 0.0
        %3434 = vmatpush.msra.mxu0 0.0
        %3435 = vmatpush.msra.mxu0 0.0
        %3436 = vmatpush.msra.mxu0 0.0
        %3437 = vmatpush.msra.mxu0 %v3318
        %3438 = vmatmul.f32.gmra.mxu0 %v3400
        %v3439 = vpop.f32.mrf.mxu0
        %v3440 = vadd.f32 %v3377, %v3439
        %3441 = vdwg.mxu0
        %3442 = vmatpush.msra.mxu0 0.0
        %3443 = vmatpush.msra.mxu0 0.0
        %3444 = vmatpush.msra.mxu0 0.0
        %3445 = vmatpush.msra.mxu0 0.0
        %3446 = vmatpush.msra.mxu0 0.0
        %3447 = vmatpush.msra.mxu0 0.0
        %3448 = vmatpush.msra.mxu0 0.0
        %3449 = vmatpush.msra.mxu0 0.0
        %3450 = vmatpush.msra.mxu0 0.0
        %3451 = vmatpush.msra.mxu0 0.0
        %3452 = vmatpush.msra.mxu0 0.0
        %3453 = vmatpush.msra.mxu0 0.0
        %3454 = vmatpush.msra.mxu0 0.0
        %3455 = vmatpush.msra.mxu0 0.0
        %3456 = vmatpush.msra.mxu0 0.0
        %3457 = vmatpush.msra.mxu0 %v3319
        %3458 = vmatmul.f32.gmra.mxu0 %v3400
        %v3459 = vpop.f32.mrf.mxu0
        %v3460 = vadd.f32 %v3397, %v3459
        %3461 = vdwg.mxu0
        %s3462 = scalar_lea.vmem %s6, 16
        %v3463 = vld [vmem:[%s3462] sm:$0xff]
        %3464 = vrot.lane.b32.xlu0 %v3317, 126
        %v3465 = vpop.permute.xlu0 %3464
        %3466 = vrot.lane.b32.xlu0 %v3318, 126
        %v3467 = vpop.permute.xlu0 %3466
        %3468 = vrot.lane.b32.xlu0 %v3319, 126
        %v3469 = vpop.permute.xlu0 %3468
        %v3470 = vsel %vm495, %v3465, %v3467
        %v3471 = vsel %vm495, %v3467, %v3469
        %v3476 = vsel %vm1178, %v3463, 0
        %3478 = vmatpush.msra.mxu0 0.0
        %3479 = vmatpush.msra.mxu0 0.0
        %3480 = vmatpush.msra.mxu0 0.0
        %3481 = vmatpush.msra.mxu0 0.0
        %3482 = vmatpush.msra.mxu0 0.0
        %3483 = vmatpush.msra.mxu0 0.0
        %3484 = vmatpush.msra.mxu0 0.0
        %3485 = vmatpush.msra.mxu0 0.0
        %3486 = vmatpush.msra.mxu0 0.0
        %3487 = vmatpush.msra.mxu0 0.0
        %3488 = vmatpush.msra.mxu0 0.0
        %3489 = vmatpush.msra.mxu0 0.0
        %3490 = vmatpush.msra.mxu0 0.0
        %3491 = vmatpush.msra.mxu0 0.0
        %3492 = vmatpush.msra.mxu0 0.0
        %3493 = vmatpush.msra.mxu0 %v3470
        %3494 = vmatmul.f32.gmra.mxu0 %v3476
        %v3495 = vpop.f32.mrf.mxu0
        %v3496 = vadd.f32 0.0, %v3495
        %3497 = vdwg.mxu0
        %3498 = vmatpush.msra.mxu0 0.0
        %3499 = vmatpush.msra.mxu0 0.0
        %3500 = vmatpush.msra.mxu0 0.0
        %3501 = vmatpush.msra.mxu0 0.0
        %3502 = vmatpush.msra.mxu0 0.0
        %3503 = vmatpush.msra.mxu0 0.0
        %3504 = vmatpush.msra.mxu0 0.0
        %3505 = vmatpush.msra.mxu0 0.0
        %3506 = vmatpush.msra.mxu0 0.0
        %3507 = vmatpush.msra.mxu0 0.0
        %3508 = vmatpush.msra.mxu0 0.0
        %3509 = vmatpush.msra.mxu0 0.0
        %3510 = vmatpush.msra.mxu0 0.0
        %3511 = vmatpush.msra.mxu0 0.0
        %3512 = vmatpush.msra.mxu0 0.0
        %3513 = vmatpush.msra.mxu0 %v3471
        %3514 = vmatmul.f32.gmra.mxu0 %v3476
        %v3515 = vpop.f32.mrf.mxu0
        %v3516 = vadd.f32 0.0, %v3515
        %3517 = vdwg.mxu0
        %3518 = vmatpush.msra.mxu0 0.0
        %3519 = vmatpush.msra.mxu0 0.0
        %3520 = vmatpush.msra.mxu0 0.0
        %3521 = vmatpush.msra.mxu0 0.0
        %3522 = vmatpush.msra.mxu0 0.0
        %3523 = vmatpush.msra.mxu0 0.0
        %3524 = vmatpush.msra.mxu0 0.0
        %3525 = vmatpush.msra.mxu0 0.0
        %3526 = vmatpush.msra.mxu0 0.0
        %3527 = vmatpush.msra.mxu0 0.0
        %3528 = vmatpush.msra.mxu0 0.0
        %3529 = vmatpush.msra.mxu0 0.0
        %3530 = vmatpush.msra.mxu0 0.0
        %3531 = vmatpush.msra.mxu0 0.0
        %3532 = vmatpush.msra.mxu0 0.0
        %3533 = vmatpush.msra.mxu0 %v3469
        %3534 = vmatmul.f32.gmra.mxu0 %v3476
        %v3535 = vpop.f32.mrf.mxu0
        %v3536 = vadd.f32 0.0, %v3535
        %3537 = vdwg.mxu0
        %v3538 = vadd.f32 %v3420, %v3496
        %v3539 = vadd.f32 %v3440, %v3516
        %v3540 = vadd.f32 %v3460, %v3536
        %s3541 = scalar_lea.vmem %s6, 24
        %v3542 = vld [vmem:[%s3541] sm:$0xff]
        %3543 = vrot.lane.b32.xlu0 %v3317, 110
        %v3544 = vpop.permute.xlu0 %3543
        %3545 = vrot.lane.b32.xlu0 %v3318, 110
        %v3546 = vpop.permute.xlu0 %3545
        %3547 = vrot.lane.b32.xlu0 %v3319, 110
        %v3548 = vpop.permute.xlu0 %3547
        %v3549 = vsel %vm588, %v3544, %v3546
        %v3550 = vsel %vm588, %v3546, %v3548
        %v3555 = vsel %vm1178, %v3542, 0
        %3557 = vmatpush.msra.mxu0 0.0
        %3558 = vmatpush.msra.mxu0 0.0
        %3559 = vmatpush.msra.mxu0 0.0
        %3560 = vmatpush.msra.mxu0 0.0
        %3561 = vmatpush.msra.mxu0 0.0
        %3562 = vmatpush.msra.mxu0 0.0
        %3563 = vmatpush.msra.mxu0 0.0
        %3564 = vmatpush.msra.mxu0 0.0
        %3565 = vmatpush.msra.mxu0 0.0
        %3566 = vmatpush.msra.mxu0 0.0
        %3567 = vmatpush.msra.mxu0 0.0
        %3568 = vmatpush.msra.mxu0 0.0
        %3569 = vmatpush.msra.mxu0 0.0
        %3570 = vmatpush.msra.mxu0 0.0
        %3571 = vmatpush.msra.mxu0 0.0
        %3572 = vmatpush.msra.mxu0 %v3549
        %3573 = vmatmul.f32.gmra.mxu0 %v3555
        %v3574 = vpop.f32.mrf.mxu0
        %v3575 = vadd.f32 0.0, %v3574
        %3576 = vdwg.mxu0
        %3577 = vmatpush.msra.mxu0 0.0
        %3578 = vmatpush.msra.mxu0 0.0
        %3579 = vmatpush.msra.mxu0 0.0
        %3580 = vmatpush.msra.mxu0 0.0
        %3581 = vmatpush.msra.mxu0 0.0
        %3582 = vmatpush.msra.mxu0 0.0
        %3583 = vmatpush.msra.mxu0 0.0
        %3584 = vmatpush.msra.mxu0 0.0
        %3585 = vmatpush.msra.mxu0 0.0
        %3586 = vmatpush.msra.mxu0 0.0
        %3587 = vmatpush.msra.mxu0 0.0
        %3588 = vmatpush.msra.mxu0 0.0
        %3589 = vmatpush.msra.mxu0 0.0
        %3590 = vmatpush.msra.mxu0 0.0
        %3591 = vmatpush.msra.mxu0 0.0
        %3592 = vmatpush.msra.mxu0 %v3550
        %3593 = vmatmul.f32.gmra.mxu0 %v3555
        %v3594 = vpop.f32.mrf.mxu0
        %v3595 = vadd.f32 0.0, %v3594
        %3596 = vdwg.mxu0
        %3597 = vmatpush.msra.mxu0 0.0
        %3598 = vmatpush.msra.mxu0 0.0
        %3599 = vmatpush.msra.mxu0 0.0
        %3600 = vmatpush.msra.mxu0 0.0
        %3601 = vmatpush.msra.mxu0 0.0
        %3602 = vmatpush.msra.mxu0 0.0
        %3603 = vmatpush.msra.mxu0 0.0
        %3604 = vmatpush.msra.mxu0 0.0
        %3605 = vmatpush.msra.mxu0 0.0
        %3606 = vmatpush.msra.mxu0 0.0
        %3607 = vmatpush.msra.mxu0 0.0
        %3608 = vmatpush.msra.mxu0 0.0
        %3609 = vmatpush.msra.mxu0 0.0
        %3610 = vmatpush.msra.mxu0 0.0
        %3611 = vmatpush.msra.mxu0 0.0
        %3612 = vmatpush.msra.mxu0 %v3548
        %3613 = vmatmul.f32.gmra.mxu0 %v3555
        %v3614 = vpop.f32.mrf.mxu0
        %v3615 = vadd.f32 0.0, %v3614
        %3616 = vdwg.mxu0
        %v3617 = vadd.f32 %v3538, %v3575
        %v3618 = vadd.f32 %v3539, %v3595
        %v3619 = vadd.f32 %v3540, %v3615
        %s3620 = scalar_lea.vmem %s6, 32
        %v3621 = vld [vmem:[%s3620] sm:$0xff]
        %3622 = vrot.lane.b32.xlu0 %v3317, 109
        %v3623 = vpop.permute.xlu0 %3622
        %3624 = vrot.lane.b32.xlu0 %v3318, 109
        %v3625 = vpop.permute.xlu0 %3624
        %3626 = vrot.lane.b32.xlu0 %v3319, 109
        %v3627 = vpop.permute.xlu0 %3626
        %v3628 = vsel %vm681, %v3623, %v3625
        %v3629 = vsel %vm681, %v3625, %v3627
        %v3634 = vsel %vm1178, %v3621, 0
        %3636 = vmatpush.msra.mxu0 0.0
        %3637 = vmatpush.msra.mxu0 0.0
        %3638 = vmatpush.msra.mxu0 0.0
        %3639 = vmatpush.msra.mxu0 0.0
        %3640 = vmatpush.msra.mxu0 0.0
        %3641 = vmatpush.msra.mxu0 0.0
        %3642 = vmatpush.msra.mxu0 0.0
        %3643 = vmatpush.msra.mxu0 0.0
        %3644 = vmatpush.msra.mxu0 0.0
        %3645 = vmatpush.msra.mxu0 0.0
        %3646 = vmatpush.msra.mxu0 0.0
        %3647 = vmatpush.msra.mxu0 0.0
        %3648 = vmatpush.msra.mxu0 0.0
        %3649 = vmatpush.msra.mxu0 0.0
        %3650 = vmatpush.msra.mxu0 0.0
        %3651 = vmatpush.msra.mxu0 %v3628
        %3652 = vmatmul.f32.gmra.mxu0 %v3634
        %v3653 = vpop.f32.mrf.mxu0
        %v3654 = vadd.f32 0.0, %v3653
        %3655 = vdwg.mxu0
        %3656 = vmatpush.msra.mxu0 0.0
        %3657 = vmatpush.msra.mxu0 0.0
        %3658 = vmatpush.msra.mxu0 0.0
        %3659 = vmatpush.msra.mxu0 0.0
        %3660 = vmatpush.msra.mxu0 0.0
        %3661 = vmatpush.msra.mxu0 0.0
        %3662 = vmatpush.msra.mxu0 0.0
        %3663 = vmatpush.msra.mxu0 0.0
        %3664 = vmatpush.msra.mxu0 0.0
        %3665 = vmatpush.msra.mxu0 0.0
        %3666 = vmatpush.msra.mxu0 0.0
        %3667 = vmatpush.msra.mxu0 0.0
        %3668 = vmatpush.msra.mxu0 0.0
        %3669 = vmatpush.msra.mxu0 0.0
        %3670 = vmatpush.msra.mxu0 0.0
        %3671 = vmatpush.msra.mxu0 %v3629
        %3672 = vmatmul.f32.gmra.mxu0 %v3634
        %v3673 = vpop.f32.mrf.mxu0
        %v3674 = vadd.f32 0.0, %v3673
        %3675 = vdwg.mxu0
        %3676 = vmatpush.msra.mxu0 0.0
        %3677 = vmatpush.msra.mxu0 0.0
        %3678 = vmatpush.msra.mxu0 0.0
        %3679 = vmatpush.msra.mxu0 0.0
        %3680 = vmatpush.msra.mxu0 0.0
        %3681 = vmatpush.msra.mxu0 0.0
        %3682 = vmatpush.msra.mxu0 0.0
        %3683 = vmatpush.msra.mxu0 0.0
        %3684 = vmatpush.msra.mxu0 0.0
        %3685 = vmatpush.msra.mxu0 0.0
        %3686 = vmatpush.msra.mxu0 0.0
        %3687 = vmatpush.msra.mxu0 0.0
        %3688 = vmatpush.msra.mxu0 0.0
        %3689 = vmatpush.msra.mxu0 0.0
        %3690 = vmatpush.msra.mxu0 0.0
        %3691 = vmatpush.msra.mxu0 %v3627
        %3692 = vmatmul.f32.gmra.mxu0 %v3634
        %v3693 = vpop.f32.mrf.mxu0
        %v3694 = vadd.f32 0.0, %v3693
        %3695 = vdwg.mxu0
        %v3696 = vadd.f32 %v3617, %v3654
        %v3697 = vadd.f32 %v3618, %v3674
        %v3698 = vadd.f32 %v3619, %v3694
        %s3699 = scalar_lea.vmem %s6, 40
        %v3700 = vld [vmem:[%s3699] sm:$0xff]
        %3701 = vrot.lane.b32.xlu0 %v3317, 108
        %v3702 = vpop.permute.xlu0 %3701
        %3703 = vrot.lane.b32.xlu0 %v3318, 108
        %v3704 = vpop.permute.xlu0 %3703
        %3705 = vrot.lane.b32.xlu0 %v3319, 108
        %v3706 = vpop.permute.xlu0 %3705
        %v3707 = vsel %vm774, %v3702, %v3704
        %v3708 = vsel %vm774, %v3704, %v3706
        %v3713 = vsel %vm1178, %v3700, 0
        %3715 = vmatpush.msra.mxu0 0.0
        %3716 = vmatpush.msra.mxu0 0.0
        %3717 = vmatpush.msra.mxu0 0.0
        %3718 = vmatpush.msra.mxu0 0.0
        %3719 = vmatpush.msra.mxu0 0.0
        %3720 = vmatpush.msra.mxu0 0.0
        %3721 = vmatpush.msra.mxu0 0.0
        %3722 = vmatpush.msra.mxu0 0.0
        %3723 = vmatpush.msra.mxu0 0.0
        %3724 = vmatpush.msra.mxu0 0.0
        %3725 = vmatpush.msra.mxu0 0.0
        %3726 = vmatpush.msra.mxu0 0.0
        %3727 = vmatpush.msra.mxu0 0.0
        %3728 = vmatpush.msra.mxu0 0.0
        %3729 = vmatpush.msra.mxu0 0.0
        %3730 = vmatpush.msra.mxu0 %v3707
        %3731 = vmatmul.f32.gmra.mxu0 %v3713
        %v3732 = vpop.f32.mrf.mxu0
        %v3733 = vadd.f32 0.0, %v3732
        %3734 = vdwg.mxu0
        %3735 = vmatpush.msra.mxu0 0.0
        %3736 = vmatpush.msra.mxu0 0.0
        %3737 = vmatpush.msra.mxu0 0.0
        %3738 = vmatpush.msra.mxu0 0.0
        %3739 = vmatpush.msra.mxu0 0.0
        %3740 = vmatpush.msra.mxu0 0.0
        %3741 = vmatpush.msra.mxu0 0.0
        %3742 = vmatpush.msra.mxu0 0.0
        %3743 = vmatpush.msra.mxu0 0.0
        %3744 = vmatpush.msra.mxu0 0.0
        %3745 = vmatpush.msra.mxu0 0.0
        %3746 = vmatpush.msra.mxu0 0.0
        %3747 = vmatpush.msra.mxu0 0.0
        %3748 = vmatpush.msra.mxu0 0.0
        %3749 = vmatpush.msra.mxu0 0.0
        %3750 = vmatpush.msra.mxu0 %v3708
        %3751 = vmatmul.f32.gmra.mxu0 %v3713
        %v3752 = vpop.f32.mrf.mxu0
        %v3753 = vadd.f32 0.0, %v3752
        %3754 = vdwg.mxu0
        %3755 = vmatpush.msra.mxu0 0.0
        %3756 = vmatpush.msra.mxu0 0.0
        %3757 = vmatpush.msra.mxu0 0.0
        %3758 = vmatpush.msra.mxu0 0.0
        %3759 = vmatpush.msra.mxu0 0.0
        %3760 = vmatpush.msra.mxu0 0.0
        %3761 = vmatpush.msra.mxu0 0.0
        %3762 = vmatpush.msra.mxu0 0.0
        %3763 = vmatpush.msra.mxu0 0.0
        %3764 = vmatpush.msra.mxu0 0.0
        %3765 = vmatpush.msra.mxu0 0.0
        %3766 = vmatpush.msra.mxu0 0.0
        %3767 = vmatpush.msra.mxu0 0.0
        %3768 = vmatpush.msra.mxu0 0.0
        %3769 = vmatpush.msra.mxu0 0.0
        %3770 = vmatpush.msra.mxu0 %v3706
        %3771 = vmatmul.f32.gmra.mxu0 %v3713
        %v3772 = vpop.f32.mrf.mxu0
        %v3773 = vadd.f32 0.0, %v3772
        %3774 = vdwg.mxu0
        %v3775 = vadd.f32 %v3696, %v3733
        %v3776 = vadd.f32 %v3697, %v3753
        %v3777 = vadd.f32 %v3698, %v3773
        %s3778 = scalar_lea.vmem %s6, 48
        %v3779 = vld [vmem:[%s3778] sm:$0xff]
        %3780 = vrot.lane.b32.xlu0 %v3317, 92
        %v3781 = vpop.permute.xlu0 %3780
        %3782 = vrot.lane.b32.xlu0 %v3318, 92
        %v3783 = vpop.permute.xlu0 %3782
        %3784 = vrot.lane.b32.xlu0 %v3319, 92
        %v3785 = vpop.permute.xlu0 %3784
        %v3786 = vsel %vm867, %v3781, %v3783
        %v3787 = vsel %vm867, %v3783, %v3785
        %v3792 = vsel %vm1178, %v3779, 0
        %3794 = vmatpush.msra.mxu0 0.0
        %3795 = vmatpush.msra.mxu0 0.0
        %3796 = vmatpush.msra.mxu0 0.0
        %3797 = vmatpush.msra.mxu0 0.0
        %3798 = vmatpush.msra.mxu0 0.0
        %3799 = vmatpush.msra.mxu0 0.0
        %3800 = vmatpush.msra.mxu0 0.0
        %3801 = vmatpush.msra.mxu0 0.0
        %3802 = vmatpush.msra.mxu0 0.0
        %3803 = vmatpush.msra.mxu0 0.0
        %3804 = vmatpush.msra.mxu0 0.0
        %3805 = vmatpush.msra.mxu0 0.0
        %3806 = vmatpush.msra.mxu0 0.0
        %3807 = vmatpush.msra.mxu0 0.0
        %3808 = vmatpush.msra.mxu0 0.0
        %3809 = vmatpush.msra.mxu0 %v3786
        %3810 = vmatmul.f32.gmra.mxu0 %v3792
        %v3811 = vpop.f32.mrf.mxu0
        %v3812 = vadd.f32 0.0, %v3811
        %3813 = vdwg.mxu0
        %3814 = vmatpush.msra.mxu0 0.0
        %3815 = vmatpush.msra.mxu0 0.0
        %3816 = vmatpush.msra.mxu0 0.0
        %3817 = vmatpush.msra.mxu0 0.0
        %3818 = vmatpush.msra.mxu0 0.0
        %3819 = vmatpush.msra.mxu0 0.0
        %3820 = vmatpush.msra.mxu0 0.0
        %3821 = vmatpush.msra.mxu0 0.0
        %3822 = vmatpush.msra.mxu0 0.0
        %3823 = vmatpush.msra.mxu0 0.0
        %3824 = vmatpush.msra.mxu0 0.0
        %3825 = vmatpush.msra.mxu0 0.0
        %3826 = vmatpush.msra.mxu0 0.0
        %3827 = vmatpush.msra.mxu0 0.0
        %3828 = vmatpush.msra.mxu0 0.0
        %3829 = vmatpush.msra.mxu0 %v3787
        %3830 = vmatmul.f32.gmra.mxu0 %v3792
        %v3831 = vpop.f32.mrf.mxu0
        %v3832 = vadd.f32 0.0, %v3831
        %3833 = vdwg.mxu0
        %3834 = vmatpush.msra.mxu0 0.0
        %3835 = vmatpush.msra.mxu0 0.0
        %3836 = vmatpush.msra.mxu0 0.0
        %3837 = vmatpush.msra.mxu0 0.0
        %3838 = vmatpush.msra.mxu0 0.0
        %3839 = vmatpush.msra.mxu0 0.0
        %3840 = vmatpush.msra.mxu0 0.0
        %3841 = vmatpush.msra.mxu0 0.0
        %3842 = vmatpush.msra.mxu0 0.0
        %3843 = vmatpush.msra.mxu0 0.0
        %3844 = vmatpush.msra.mxu0 0.0
        %3845 = vmatpush.msra.mxu0 0.0
        %3846 = vmatpush.msra.mxu0 0.0
        %3847 = vmatpush.msra.mxu0 0.0
        %3848 = vmatpush.msra.mxu0 0.0
        %3849 = vmatpush.msra.mxu0 %v3785
        %3850 = vmatmul.f32.gmra.mxu0 %v3792
        %v3851 = vpop.f32.mrf.mxu0
        %v3852 = vadd.f32 0.0, %v3851
        %3853 = vdwg.mxu0
        %v3854 = vadd.f32 %v3775, %v3812
        %v3855 = vadd.f32 %v3776, %v3832
        %v3856 = vadd.f32 %v3777, %v3852
        %s3857 = scalar_lea.vmem %s6, 56
        %v3858 = vld [vmem:[%s3857] sm:$0xff]
        %3859 = vrot.lane.b32.xlu0 %v3317, 91
        %v3860 = vpop.permute.xlu0 %3859
        %3861 = vrot.lane.b32.xlu0 %v3318, 91
        %v3862 = vpop.permute.xlu0 %3861
        %3863 = vrot.lane.b32.xlu0 %v3319, 91
        %v3864 = vpop.permute.xlu0 %3863
        %v3865 = vsel %vm960, %v3860, %v3862
        %v3866 = vsel %vm960, %v3862, %v3864
        %v3871 = vsel %vm1178, %v3858, 0
        %3873 = vmatpush.msra.mxu0 0.0
        %3874 = vmatpush.msra.mxu0 0.0
        %3875 = vmatpush.msra.mxu0 0.0
        %3876 = vmatpush.msra.mxu0 0.0
        %3877 = vmatpush.msra.mxu0 0.0
        %3878 = vmatpush.msra.mxu0 0.0
        %3879 = vmatpush.msra.mxu0 0.0
        %3880 = vmatpush.msra.mxu0 0.0
        %3881 = vmatpush.msra.mxu0 0.0
        %3882 = vmatpush.msra.mxu0 0.0
        %3883 = vmatpush.msra.mxu0 0.0
        %3884 = vmatpush.msra.mxu0 0.0
        %3885 = vmatpush.msra.mxu0 0.0
        %3886 = vmatpush.msra.mxu0 0.0
        %3887 = vmatpush.msra.mxu0 0.0
        %3888 = vmatpush.msra.mxu0 %v3865
        %3889 = vmatmul.f32.gmra.mxu0 %v3871
        %v3890 = vpop.f32.mrf.mxu0
        %v3891 = vadd.f32 0.0, %v3890
        %3892 = vdwg.mxu0
        %3893 = vmatpush.msra.mxu0 0.0
        %3894 = vmatpush.msra.mxu0 0.0
        %3895 = vmatpush.msra.mxu0 0.0
        %3896 = vmatpush.msra.mxu0 0.0
        %3897 = vmatpush.msra.mxu0 0.0
        %3898 = vmatpush.msra.mxu0 0.0
        %3899 = vmatpush.msra.mxu0 0.0
        %3900 = vmatpush.msra.mxu0 0.0
        %3901 = vmatpush.msra.mxu0 0.0
        %3902 = vmatpush.msra.mxu0 0.0
        %3903 = vmatpush.msra.mxu0 0.0
        %3904 = vmatpush.msra.mxu0 0.0
        %3905 = vmatpush.msra.mxu0 0.0
        %3906 = vmatpush.msra.mxu0 0.0
        %3907 = vmatpush.msra.mxu0 0.0
        %3908 = vmatpush.msra.mxu0 %v3866
        %3909 = vmatmul.f32.gmra.mxu0 %v3871
        %v3910 = vpop.f32.mrf.mxu0
        %v3911 = vadd.f32 0.0, %v3910
        %3912 = vdwg.mxu0
        %3913 = vmatpush.msra.mxu0 0.0
        %3914 = vmatpush.msra.mxu0 0.0
        %3915 = vmatpush.msra.mxu0 0.0
        %3916 = vmatpush.msra.mxu0 0.0
        %3917 = vmatpush.msra.mxu0 0.0
        %3918 = vmatpush.msra.mxu0 0.0
        %3919 = vmatpush.msra.mxu0 0.0
        %3920 = vmatpush.msra.mxu0 0.0
        %3921 = vmatpush.msra.mxu0 0.0
        %3922 = vmatpush.msra.mxu0 0.0
        %3923 = vmatpush.msra.mxu0 0.0
        %3924 = vmatpush.msra.mxu0 0.0
        %3925 = vmatpush.msra.mxu0 0.0
        %3926 = vmatpush.msra.mxu0 0.0
        %3927 = vmatpush.msra.mxu0 0.0
        %3928 = vmatpush.msra.mxu0 %v3864
        %3929 = vmatmul.f32.gmra.mxu0 %v3871
        %v3930 = vpop.f32.mrf.mxu0
        %v3931 = vadd.f32 0.0, %v3930
        %3932 = vdwg.mxu0
        %v3933 = vadd.f32 %v3854, %v3891
        %v3934 = vadd.f32 %v3855, %v3911
        %v3935 = vadd.f32 %v3856, %v3931
        %s3936 = scalar_lea.vmem %s6, 64
        %v3937 = vld [vmem:[%s3936] sm:$0xff]
        %3938 = vrot.lane.b32.xlu0 %v3317, 90
        %v3939 = vpop.permute.xlu0 %3938
        %3940 = vrot.lane.b32.xlu0 %v3318, 90
        %v3941 = vpop.permute.xlu0 %3940
        %3942 = vrot.lane.b32.xlu0 %v3319, 90
        %v3943 = vpop.permute.xlu0 %3942
        %v3944 = vsel %vm1053, %v3939, %v3941
        %v3945 = vsel %vm1053, %v3941, %v3943
        %v3950 = vsel %vm1178, %v3937, 0
        %3952 = vmatpush.msra.mxu0 0.0
        %3953 = vmatpush.msra.mxu0 0.0
        %3954 = vmatpush.msra.mxu0 0.0
        %3955 = vmatpush.msra.mxu0 0.0
        %3956 = vmatpush.msra.mxu0 0.0
        %3957 = vmatpush.msra.mxu0 0.0
        %3958 = vmatpush.msra.mxu0 0.0
        %3959 = vmatpush.msra.mxu0 0.0
        %3960 = vmatpush.msra.mxu0 0.0
        %3961 = vmatpush.msra.mxu0 0.0
        %3962 = vmatpush.msra.mxu0 0.0
        %3963 = vmatpush.msra.mxu0 0.0
        %3964 = vmatpush.msra.mxu0 0.0
        %3965 = vmatpush.msra.mxu0 0.0
        %3966 = vmatpush.msra.mxu0 0.0
        %3967 = vmatpush.msra.mxu0 %v3944
        %3968 = vmatmul.f32.gmra.mxu0 %v3950
        %v3969 = vpop.f32.mrf.mxu0
        %v3970 = vadd.f32 0.0, %v3969
        %3971 = vdwg.mxu0
        %3972 = vmatpush.msra.mxu0 0.0
        %3973 = vmatpush.msra.mxu0 0.0
        %3974 = vmatpush.msra.mxu0 0.0
        %3975 = vmatpush.msra.mxu0 0.0
        %3976 = vmatpush.msra.mxu0 0.0
        %3977 = vmatpush.msra.mxu0 0.0
        %3978 = vmatpush.msra.mxu0 0.0
        %3979 = vmatpush.msra.mxu0 0.0
        %3980 = vmatpush.msra.mxu0 0.0
        %3981 = vmatpush.msra.mxu0 0.0
        %3982 = vmatpush.msra.mxu0 0.0
        %3983 = vmatpush.msra.mxu0 0.0
        %3984 = vmatpush.msra.mxu0 0.0
        %3985 = vmatpush.msra.mxu0 0.0
        %3986 = vmatpush.msra.mxu0 0.0
        %3987 = vmatpush.msra.mxu0 %v3945
        %3988 = vmatmul.f32.gmra.mxu0 %v3950
        %v3989 = vpop.f32.mrf.mxu0
        %v3990 = vadd.f32 0.0, %v3989
        %3991 = vdwg.mxu0
        %3992 = vmatpush.msra.mxu0 0.0
        %3993 = vmatpush.msra.mxu0 0.0
        %3994 = vmatpush.msra.mxu0 0.0
        %3995 = vmatpush.msra.mxu0 0.0
        %3996 = vmatpush.msra.mxu0 0.0
        %3997 = vmatpush.msra.mxu0 0.0
        %3998 = vmatpush.msra.mxu0 0.0
        %3999 = vmatpush.msra.mxu0 0.0
        %4000 = vmatpush.msra.mxu0 0.0
        %4001 = vmatpush.msra.mxu0 0.0
        %4002 = vmatpush.msra.mxu0 0.0
        %4003 = vmatpush.msra.mxu0 0.0
        %4004 = vmatpush.msra.mxu0 0.0
        %4005 = vmatpush.msra.mxu0 0.0
        %4006 = vmatpush.msra.mxu0 0.0
        %4007 = vmatpush.msra.mxu0 %v3943
        %4008 = vmatmul.f32.gmra.mxu0 %v3950
        %v4009 = vpop.f32.mrf.mxu0
        %v4010 = vadd.f32 0.0, %v4009
        %4011 = vdwg.mxu0
        %v4012 = vadd.f32 %v3933, %v3970
        %v4013 = vadd.f32 %v3934, %v3990
        %v4014 = vadd.f32 %v3935, %v4010
        %v4015 = vld [vmem:[%s7] sm:$0xff]
        %4017 = vset.pattern.permute.xlu0 0
        %4018 = vperm.xlu0 %4017, %v4015
        %v4019 = vpop.permute.xlu0 %4018
        %v4021 = vmul.f32 %v4012, %v4019
        %v4022 = vmul.f32 %v4013, %v4019
        %v4023 = vmul.f32 %v4014, %v4019
        %4024 = vset.pattern.permute.xlu0 1
        %4025 = vperm.xlu0 %4024, %v4015
        %v4026 = vpop.permute.xlu0 %4025
        %v4028 = vadd.f32 %v4021, %v4026
        %v4029 = vadd.f32 %v4022, %v4026
        %v4030 = vadd.f32 %v4023, %v4026
        %vm4031 = vcmp.ge.f32.partialorder %v4028, 0.0
        %vm4032 = vcmp.ge.f32.partialorder %v4029, 0.0
        %vm4033 = vcmp.ge.f32.partialorder %v4030, 0.0
        %4034 = vset.pattern.permute.xlu0 2
        %4035 = vperm.xlu0 %4034, %v4015
        %v4036 = vpop.permute.xlu0 %4035
        %v4038 = vmul.f32 %v4036, %v4028
        %v4039 = vmul.f32 %v4036, %v4029
        %v4040 = vmul.f32 %v4036, %v4030
        %v4041 = vsel %vm4031, %v4028, %v4038
        %v4042 = vsel %vm4032, %v4029, %v4039
        %v4043 = vsel %vm4033, %v4030, %v4040
        %4044 = vst [vmem:[%s298] sm:$0xff] %v4041
        %4045 = vst [vmem:[%s298 + $0x8] sm:$0xff] %v4042
        %vm4046 = vcmask 703488
        %4047 = vst.msk [vmem:[%s298 + $0x10] sm:$0xff] %vm4046, %v4043
        %s4048 = sand.u32 %s203, 1
        %s4049 = scalar_lea.sflag [#allocation4], %s4048
        %s4050 = sand.u32 %s203, 1
        %s4051 = smul.addr %s4050, 24
        %s4052 = scalar_lea.vmem [#allocation3], %s4051
        // Predicated region
        $region53: #{tpu_custom_call.1} parent=51 // pred_check
          %p4053 = pneg %p213
        $region54: #{tpu_custom_call.1} parent=51 // pred_check_branch
          %4055 = sbr.rel (%p4053) target = $region56
        $region55: #{tpu_custom_call.1} parent=51 // pred_region
          %4057 = vsyncadd %s4049, 0
          %s4058 = smul.addr %s22, 3
          %s4059 = smul.addr %s4058, 8
          %s4060 = scalar_lea.hbm %s8, %s4059
          %s4062 = sshll.u32 %s4052, 4
          %s4063 = int_to_ptr.vmem [resolvable:$true] %s4062
          %s4064 = sshll.u32 %s4060, 4
          %s4065 = int_to_ptr.hbm [resolvable:$true] %s4064
          %4067 = dma.vmem_to_hbm [thread:$0]  %s4063, 384, %s4065, %s4049
        $region56: #{tpu_custom_call.1} parent=51 // pred_fallthru
          _
      $region52: #{tpu_custom_call.1} parent=5 // pred_fallthru
        _
      %p4068 = scmp.le.s32.totalorder 2, %s17
      // Predicated region
      $region57: #{tpu_custom_call.1} parent=5 // pred_check
        %p4069 = pneg %p4068
      $region58: #{tpu_custom_call.1} parent=5 // pred_check_branch
        %4071 = sbr.rel (%p4069) target = $region60
      $region59: #{tpu_custom_call.1} parent=5 // pred_region
        %s4072 = ssub.s32 %s17, 2
        // Predicated region
        $region61: #{tpu_custom_call.1} parent=59 // pred_check
          %p4073 = pneg %p219
        $region62: #{tpu_custom_call.1} parent=59 // pred_check_branch
          %4075 = sbr.rel (%p4073) target = $region64
        $region63: #{tpu_custom_call.1} parent=59 // pred_region
          %s4076 = sand.u32 %s204, 1
          %s4077 = scalar_lea.sflag [#allocation4], %s4076
          %s4078 = sand.u32 %s204, 1
          %s4079 = smul.addr %s4078, 24
          %s4080 = scalar_lea.vmem [#allocation3], %s4079
          %4082 = dma.done %s4077, 384
        $region64: #{tpu_custom_call.1} parent=59 // pred_fallthru
          _
      $region60: #{tpu_custom_call.1} parent=5 // pred_fallthru
        _
    $region6: #{tpu_custom_call.1} parent=1 // loop_footer
      %s21 = sadd.s32 1, %s17
    $region7: #{tpu_custom_call.1} parent=1 // loop_footer_branch
      %16 = sbr.rel target = $region3
    $region8: #{tpu_custom_call.1} parent=1 // loop_exit
      _
    %4083 = vsyncpa [#allocation4], 1
    %s4084 = scalar_lea.sflag [#allocation4], 1
    %4085 = vsyncpa %s4084, 1

</llo_original>
